<compile_context>
chip_gen: v7x
topology: tpu7x:2x2x1
jax: 0.10.0
libtpu: 0.0.40
codegen_flags: <defaults>
</compile_context>

<pallas_src>
import jax
import jax.numpy as jnp
from jax.experimental import pallas as pl
from jax.experimental.pallas import tpu as pltpu


_VMEM = pl.BlockSpec(memory_space=pltpu.MemorySpace.VMEM)
_LANE = 128


def _round_up(x, m):
    return ((x + m - 1) // m) * m


# --------------------------------------------------------------------------
# Fused Pallas kernel: n_layers GRU stack + Linear head (time-major layout)
# --------------------------------------------------------------------------
def _make_fused_gru_fc_kernel(n_layers, B, T, Hp, O_pad, use_all_h):
    """Kernel signature:

    kernel(x_ref,                                   # (T, B, I0)
           [wih_t, whh_t, bih, bhh] * n_layers,     # (I_l, 3Hp), (Hp, 3Hp), (1, 3Hp), (1, 3Hp)
           fcw_ref, fcb_ref,                        # (T_fc, Hp, O_pad), (1, O_pad)
           out_ref,                                 # (B, O_pad)
           hseq_ref)                                # VMEM scratch (T, B, Hp)

    Torch gate order [r | z | n]; each gate occupies a 128-aligned Hp block.
    """

    def kernel(*refs):
        x_ref = refs[0]
        layer_refs = refs[1:1 + 4 * n_layers]
        fcw_ref = refs[1 + 4 * n_layers]
        fcb_ref = refs[2 + 4 * n_layers]
        out_ref = refs[3 + 4 * n_layers]
        hseq_ref = refs[4 + 4 * n_layers]

        for layer in range(n_layers):
            wih_ref, whh_ref, bih_ref, bhh_ref = (
                layer_refs[4 * layer:4 * layer + 4])
            is_last = (layer == n_layers - 1)

            # Layer input sequence: original x for layer 0, previous layer's
            # hidden states (resident in VMEM scratch) afterwards.
            seq = x_ref[...] if layer == 0 else hseq_ref[...]   # (T, B, I_l)
            in_dim = seq.shape[-1]

            # --- Hoisted input projection: one MXU matmul for all steps. ---
            gx = jnp.dot(seq.reshape(T * B, in_dim), wih_ref[...],
                         preferred_element_type=jnp.float32) + bih_ref[...]
            gx = gx.reshape(T, B, 3 * Hp)                       # (T, B, 3Hp)

            whh_t = whh_ref[...]                                # (Hp, 3Hp)
            # Hoist the bias broadcast out of the loop (no CSE for bcast).
            bhh_b = jnp.broadcast_to(bhh_ref[...], (B, 3 * Hp))

            # --- Recurrence: (B,Hp)@(Hp,3Hp) matmul + gate math per step. ---
            h = jnp.zeros((B, Hp), jnp.float32)
            acc = jnp.zeros((B, O_pad), jnp.float32) if is_last else None
            for t in range(T):  # static full unroll (T small, known at trace)
                gx_t = gx[t]                                    # (B, 3Hp)
                gh = jnp.dot(h, whh_t,
                             preferred_element_type=jnp.float32) + bhh_b
                # Lane-aligned gate slices (multiples of 128).
                r = jax.nn.sigmoid(gx_t[:, 0:Hp] + gh[:, 0:Hp])
                z = jax.nn.sigmoid(gx_t[:, Hp:2 * Hp] + gh[:, Hp:2 * Hp])
                n = jnp.tanh(gx_t[:, 2 * Hp:3 * Hp]
                             + r * gh[:, 2 * Hp:3 * Hp])
                h = n + z * (h - n)          # == (1-z)*n + z*h
                if is_last:
                    if use_all_h:
                        # Fused FC: running accumulation replaces the
                        # (B, T*H) flatten + big matmul at the end.
                        acc = acc + jnp.dot(
                            h, fcw_ref[t],
                            preferred_element_type=jnp.float32)
                else:
                    # Whole (B, Hp) slab store at a static leading index.
                    hseq_ref[t, :, :] = h

            if is_last:
                if not use_all_h:
                    acc = jnp.dot(h, fcw_ref[0],
                                  preferred_element_type=jnp.float32)
                out_ref[...] = acc + fcb_ref[...]   # lane-dense (B, O_pad)

    return kernel


# --------------------------------------------------------------------------
# Wrapper (glue): transpose/pad weights at trace time, one fused pallas_call
# --------------------------------------------------------------------------
def gru_forward(params, x, use_all_h=True):
    """Equivalent of GRU.forward(x): h0 = zeros, stacked GRU, then fc."""
    B, T, _ = x.shape
    layers = params["gru_layers"]
    n_layers = len(layers)
    H = layers[0][1].shape[1]                 # w_hh: (3H, H)
    Hp = _round_up(H, _LANE)                  # per-gate lane-aligned width
    O = params["fc_w"].shape[0]
    O_pad = _round_up(O, _LANE)

    # Time-major input for the kernel: (T, B, I0).
    x_tm = jnp.transpose(x.astype(jnp.float32), (1, 0, 2))

    inputs = [x_tm]
    for li, (w_ih, w_hh, b_ih, b_hh) in enumerate(layers):
        I_l = w_ih.shape[1]
        Ip = I_l if li == 0 else Hp           # layers>0 read padded hidden
        wih_t = w_ih.T.astype(jnp.float32)    # (I_l, 3H)
        whh_t = w_hh.T.astype(jnp.float32)    # (H, 3H)
        wih_p = jnp.zeros((Ip, 3 * Hp), jnp.float32)
        whh_p = jnp.zeros((Hp, 3 * Hp), jnp.float32)
        bih_p = jnp.zeros((1, 3 * Hp), jnp.float32)
        bhh_p = jnp.zeros((1, 3 * Hp), jnp.float32)
        for g in range(3):                    # [r | z | n] -> 128-aligned blocks
            wih_p = wih_p.at[:I_l, g * Hp:g * Hp + H].set(
                wih_t[:, g * H:(g + 1) * H])
            whh_p = whh_p.at[:H, g * Hp:g * Hp + H].set(
                whh_t[:, g * H:(g + 1) * H])
            bih_p = bih_p.at[:, g * Hp:g * Hp + H].set(
                b_ih[None, g * H:(g + 1) * H])
            bhh_p = bhh_p.at[:, g * Hp:g * Hp + H].set(
                b_hh[None, g * H:(g + 1) * H])
        inputs += [wih_p, whh_p, bih_p, bhh_p]
        # TODO(synk): inter-layer dropout (p=0.1) is a training-time stochastic
        # op; eval-mode (identity) semantics are used here.

    # FC weights as per-timestep (Hp, O_pad) blocks so the head can be folded
    # into the last layer's time loop (matches output.reshape(B, -1) @ fc_w.T).
    fc_w = params["fc_w"].astype(jnp.float32)          # (O, F)
    if use_all_h:
        w3 = fc_w.T.reshape(T, H, O)
        T_fc = T
    else:
        w3 = fc_w.T.reshape(1, H, O)
        T_fc = 1
    fcw_p = jnp.zeros((T_fc, Hp, O_pad), jnp.float32).at[:, :H, :O].set(w3)
    fcb_p = jnp.zeros((1, O_pad), jnp.float32).at[:, :O].set(
        params["fc_b"][None, :])
    inputs += [fcw_p, fcb_p]

    kernel = _make_fused_gru_fc_kernel(n_layers, B, T, Hp, O_pad, use_all_h)
    # TODO(synk): for large B, add a batch grid (BlockSpec over B, weights with
    # index_map->0, batch axis "parallel" for megacore) and bf16 MXU operands;
    # at these shapes everything comfortably fits VMEM in one invocation.
    out_pad = pl.pallas_call(
        kernel,
        out_shape=jax.ShapeDtypeStruct((B, O_pad), jnp.float32),
        in_specs=[_VMEM] * len(inputs),
        out_specs=_VMEM,
        scratch_shapes=[pltpu.VMEM((T, B, Hp), jnp.float32)],
        compiler_params=pltpu.CompilerParams(vmem_limit_bytes=32 * 1024 * 1024),
    )(*inputs)
    return out_pad[:, :O]


# --------------------------------------------------------------------------
# Deterministic parameter init (PyTorch default: U(-1/sqrt(H), 1/sqrt(H)))
# --------------------------------------------------------------------------
def init_params(key, input_size, hidden_size, n_layers, output_size, seq_len,
                use_all_h=True):
    k = 1.0 / jnp.sqrt(hidden_size)
    layers = []
    for layer in range(n_layers):
        in_dim = input_size if layer == 0 else hidden_size
        key, k1, k2, k3, k4 = jax.random.split(key, 5)
        w_ih = jax.random.uniform(k1, (3 * hidden_size, in_dim),
                                  jnp.float32, -k, k)
        w_hh = jax.random.uniform(k2, (3 * hidden_size, hidden_size),
                                  jnp.float32, -k, k)
        b_ih = jax.random.uniform(k3, (3 * hidden_size,), jnp.float32, -k, k)
        b_hh = jax.random.uniform(k4, (3 * hidden_size,), jnp.float32, -k, k)
        layers.append((w_ih, w_hh, b_ih, b_hh))
    fc_in = hidden_size * seq_len if use_all_h else hidden_size
    kf = 1.0 / jnp.sqrt(fc_in)
    key, k5, k6 = jax.random.split(key, 3)
    fc_w = jax.random.uniform(k5, (output_size, fc_in), jnp.float32, -kf, kf)
    fc_b = jax.random.uniform(k6, (output_size,), jnp.float32, -kf, kf)
    return {"gru_layers": layers, "fc_w": fc_w, "fc_b": fc_b}


# --------------------------------------------------------------------------
# Pure-JAX reference (for correctness check only)
# --------------------------------------------------------------------------
def gru_forward_ref(params, x, use_all_h=True):
    h_seq = x
    for (w_ih, w_hh, b_ih, b_hh) in params["gru_layers"]:
        B, T, _ = h_seq.shape
        H = w_hh.shape[1]
        h = jnp.zeros((B, H), jnp.float32)
        outs = []
        for t in range(T):
            x_t = h_seq[:, t, :]
            gx = x_t @ w_ih.T + b_ih
            gh = h @ w_hh.T + b_hh
            r = jax.nn.sigmoid(gx[:, :H] + gh[:, :H])
            z = jax.nn.sigmoid(gx[:, H:2 * H] + gh[:, H:2 * H])
            n = jnp.tanh(gx[:, 2 * H:] + r * gh[:, 2 * H:])
            h = (1.0 - z) * n + z * h
            outs.append(h)
        h_seq = jnp.stack(outs, axis=1)
    B, T, H = h_seq.shape
    feat = h_seq.reshape(B, T * H) if use_all_h else h_seq[:, -1, :]
    return feat @ params["fc_w"].T + params["fc_b"]


# --------------------------------------------------------------------------
if __name__ == "__main__":
    # Small shapes consistent with the module's forward:
    # univariate-ish time series, batch_first input (B, seq_len, input_size).
    B, seq_len, input_size = 2, 8, 4
    hidden_size, n_layers, output_size = 32, 2, 1
    use_all_h = True

    key = jax.random.PRNGKey(0)
    key, pkey, xkey = jax.random.split(key, 3)
    params = init_params(pkey, input_size, hidden_size, n_layers,
                         output_size, seq_len, use_all_h)
    x = jax.random.normal(xkey, (B, seq_len, input_size), jnp.float32)

    out = gru_forward(params, x, use_all_h)
    out = jax.block_until_ready(out)

    ref = gru_forward_ref(params, x, use_all_h)
    assert out.shape == (B, output_size), out.shape
    assert jnp.allclose(out, ref, atol=1e-4, rtol=1e-4), (out, ref)

    print("KERNEL_OK")
</pallas_src>

<mosaic_0001>
module attributes {stable_mosaic.version = 11 : i64} {
  func.func @kernel(%arg0: memref<8x2x4xf32, #tpu.memory_space<vmem>>, %arg1: memref<4x384xf32, #tpu.memory_space<vmem>>, %arg2: memref<128x384xf32, #tpu.memory_space<vmem>>, %arg3: memref<1x384xf32, #tpu.memory_space<vmem>>, %arg4: memref<1x384xf32, #tpu.memory_space<vmem>>, %arg5: memref<128x384xf32, #tpu.memory_space<vmem>>, %arg6: memref<128x384xf32, #tpu.memory_space<vmem>>, %arg7: memref<1x384xf32, #tpu.memory_space<vmem>>, %arg8: memref<1x384xf32, #tpu.memory_space<vmem>>, %arg9: memref<8x128x128xf32, #tpu.memory_space<vmem>>, %arg10: memref<1x128xf32, #tpu.memory_space<vmem>>, %arg11: memref<2x128xf32, #tpu.memory_space<vmem>>, %arg12: memref<8x2x128xf32, #tpu.memory_space<vmem>>) attributes {dimension_semantics = [], scalar_prefetch = 0 : i64, scratch_operands = 1 : i64, tpu.core_type = #tpu.core_type<tc>} {
    %c0 = arith.constant 0 : index
    %c0_0 = arith.constant 0 : index
    %c0_1 = arith.constant 0 : index
    %0 = vector.load %arg0[%c0, %c0_0, %c0_1] : memref<8x2x4xf32, #tpu.memory_space<vmem>>, vector<8x2x4xf32>
    %1 = vector.shape_cast %0 : vector<8x2x4xf32> to vector<16x4xf32>
    %c0_2 = arith.constant 0 : index
    %c0_3 = arith.constant 0 : index
    %2 = vector.load %arg1[%c0_2, %c0_3] : memref<4x384xf32, #tpu.memory_space<vmem>>, vector<4x384xf32>
    %cst = arith.constant dense<0.000000e+00> : vector<16x384xf32>
    %3 = tpu.matmul %1, %2, %cst {dimension_numbers = #tpu.dot_dimension_numbers<[1], [0], [0], [1], [0, 0, 1, 1], [], []>} : vector<16x4xf32>, vector<4x384xf32>, vector<16x384xf32> -> vector<16x384xf32>
    %c0_4 = arith.constant 0 : index
    %c0_5 = arith.constant 0 : index
    %4 = vector.load %arg3[%c0_4, %c0_5] : memref<1x384xf32, #tpu.memory_space<vmem>>, vector<1x384xf32>
    %5 = vector.broadcast %4 : vector<1x384xf32> to vector<16x384xf32>
    %6 = arith.addf %3, %5 : vector<16x384xf32>
    %7 = vector.shape_cast %6 : vector<16x384xf32> to vector<8x2x384xf32>
    %c0_6 = arith.constant 0 : index
    %c0_7 = arith.constant 0 : index
    %8 = vector.load %arg2[%c0_6, %c0_7] : memref<128x384xf32, #tpu.memory_space<vmem>>, vector<128x384xf32>
    %c0_8 = arith.constant 0 : index
    %c0_9 = arith.constant 0 : index
    %9 = vector.load %arg4[%c0_8, %c0_9] : memref<1x384xf32, #tpu.memory_space<vmem>>, vector<1x384xf32>
    %10 = vector.shape_cast %9 : vector<1x384xf32> to vector<1x384xf32>
    %11 = vector.broadcast %10 : vector<1x384xf32> to vector<2x384xf32>
    %cst_10 = arith.constant 0.000000e+00 : f32
    %12 = vector.broadcast %cst_10 : f32 to vector<2x128xf32>
    %13 = vector.extract_strided_slice %7 {offsets = [0, 0, 0], sizes = [1, 2, 384], strides = [1, 1, 1]} : vector<8x2x384xf32> to vector<1x2x384xf32>
    %14 = vector.shape_cast %13 : vector<1x2x384xf32> to vector<2x384xf32>
    %cst_11 = arith.constant dense<0.000000e+00> : vector<2x384xf32>
    %15 = tpu.matmul %12, %8, %cst_11 {dimension_numbers = #tpu.dot_dimension_numbers<[1], [0], [0], [1], [0, 0, 1, 1], [], []>} : vector<2x128xf32>, vector<128x384xf32>, vector<2x384xf32> -> vector<2x384xf32>
    %16 = arith.addf %15, %11 : vector<2x384xf32>
    %17 = vector.extract_strided_slice %14 {offsets = [0, 0], sizes = [2, 128], strides = [1, 1]} : vector<2x384xf32> to vector<2x128xf32>
    %18 = vector.extract_strided_slice %16 {offsets = [0, 0], sizes = [2, 128], strides = [1, 1]} : vector<2x384xf32> to vector<2x128xf32>
    %19 = arith.addf %17, %18 : vector<2x128xf32>
    %20 = arith.negf %19 : vector<2x128xf32>
    %21 = math.exp %20 : vector<2x128xf32>
    %cst_12 = arith.constant 1.000000e+00 : f32
    %22 = vector.broadcast %cst_12 : f32 to vector<2x128xf32>
    %23 = arith.addf %22, %21 : vector<2x128xf32>
    %24 = arith.divf %22, %23 : vector<2x128xf32>
    %25 = vector.extract_strided_slice %14 {offsets = [0, 128], sizes = [2, 128], strides = [1, 1]} : vector<2x384xf32> to vector<2x128xf32>
    %26 = vector.extract_strided_slice %16 {offsets = [0, 128], sizes = [2, 128], strides = [1, 1]} : vector<2x384xf32> to vector<2x128xf32>
    %27 = arith.addf %25, %26 : vector<2x128xf32>
    %28 = arith.negf %27 : vector<2x128xf32>
    %29 = math.exp %28 : vector<2x128xf32>
    %cst_13 = arith.constant 1.000000e+00 : f32
    %30 = vector.broadcast %cst_13 : f32 to vector<2x128xf32>
    %31 = arith.addf %30, %29 : vector<2x128xf32>
    %32 = arith.divf %30, %31 : vector<2x128xf32>
    %33 = vector.extract_strided_slice %14 {offsets = [0, 256], sizes = [2, 128], strides = [1, 1]} : vector<2x384xf32> to vector<2x128xf32>
    %34 = vector.extract_strided_slice %16 {offsets = [0, 256], sizes = [2, 128], strides = [1, 1]} : vector<2x384xf32> to vector<2x128xf32>
    %35 = arith.mulf %24, %34 : vector<2x128xf32>
    %36 = arith.addf %33, %35 : vector<2x128xf32>
    %37 = math.tanh %36 : vector<2x128xf32>
    %38 = arith.subf %12, %37 : vector<2x128xf32>
    %39 = arith.mulf %32, %38 : vector<2x128xf32>
    %40 = arith.addf %37, %39 : vector<2x128xf32>
    %c0_14 = arith.constant 0 : index
    %c0_15 = arith.constant 0 : index
    %c0_16 = arith.constant 0 : index
    %41 = vector.load %arg12[%c0_14, %c0_15, %c0_16] : memref<8x2x128xf32, #tpu.memory_space<vmem>>, vector<1x2x128xf32>
    %42 = vector.shape_cast %41 : vector<1x2x128xf32> to vector<2x128xf32>
    %43 = vector.shape_cast %40 : vector<2x128xf32> to vector<1x2x128xf32>
    tpu.vector_store %arg12[%c0_14, %c0_15, %c0_16], %43 {strides = array<i32>} : memref<8x2x128xf32, #tpu.memory_space<vmem>>, vector<1x2x128xf32>,
    %44 = vector.extract_strided_slice %7 {offsets = [1, 0, 0], sizes = [1, 2, 384], strides = [1, 1, 1]} : vector<8x2x384xf32> to vector<1x2x384xf32>
    %45 = vector.shape_cast %44 : vector<1x2x384xf32> to vector<2x384xf32>
    %cst_17 = arith.constant dense<0.000000e+00> : vector<2x384xf32>
    %46 = tpu.matmul %40, %8, %cst_17 {dimension_numbers = #tpu.dot_dimension_numbers<[1], [0], [0], [1], [0, 0, 1, 1], [], []>} : vector<2x128xf32>, vector<128x384xf32>, vector<2x384xf32> -> vector<2x384xf32>
    %47 = arith.addf %46, %11 : vector<2x384xf32>
    %48 = vector.extract_strided_slice %45 {offsets = [0, 0], sizes = [2, 128], strides = [1, 1]} : vector<2x384xf32> to vector<2x128xf32>
    %49 = vector.extract_strided_slice %47 {offsets = [0, 0], sizes = [2, 128], strides = [1, 1]} : vector<2x384xf32> to vector<2x128xf32>
    %50 = arith.addf %48, %49 : vector<2x128xf32>
    %51 = arith.negf %50 : vector<2x128xf32>
    %52 = math.exp %51 : vector<2x128xf32>
    %cst_18 = arith.constant 1.000000e+00 : f32
    %53 = vector.broadcast %cst_18 : f32 to vector<2x128xf32>
    %54 = arith.addf %53, %52 : vector<2x128xf32>
    %55 = arith.divf %53, %54 : vector<2x128xf32>
    %56 = vector.extract_strided_slice %45 {offsets = [0, 128], sizes = [2, 128], strides = [1, 1]} : vector<2x384xf32> to vector<2x128xf32>
    %57 = vector.extract_strided_slice %47 {offsets = [0, 128], sizes = [2, 128], strides = [1, 1]} : vector<2x384xf32> to vector<2x128xf32>
    %58 = arith.addf %56, %57 : vector<2x128xf32>
    %59 = arith.negf %58 : vector<2x128xf32>
    %60 = math.exp %59 : vector<2x128xf32>
    %cst_19 = arith.constant 1.000000e+00 : f32
    %61 = vector.broadcast %cst_19 : f32 to vector<2x128xf32>
    %62 = arith.addf %61, %60 : vector<2x128xf32>
    %63 = arith.divf %61, %62 : vector<2x128xf32>
    %64 = vector.extract_strided_slice %45 {offsets = [0, 256], sizes = [2, 128], strides = [1, 1]} : vector<2x384xf32> to vector<2x128xf32>
    %65 = vector.extract_strided_slice %47 {offsets = [0, 256], sizes = [2, 128], strides = [1, 1]} : vector<2x384xf32> to vector<2x128xf32>
    %66 = arith.mulf %55, %65 : vector<2x128xf32>
    %67 = arith.addf %64, %66 : vector<2x128xf32>
    %68 = math.tanh %67 : vector<2x128xf32>
    %69 = arith.subf %40, %68 : vector<2x128xf32>
    %70 = arith.mulf %63, %69 : vector<2x128xf32>
    %71 = arith.addf %68, %70 : vector<2x128xf32>
    %c1 = arith.constant 1 : index
    %c0_20 = arith.constant 0 : index
    %c0_21 = arith.constant 0 : index
    %72 = vector.load %arg12[%c1, %c0_20, %c0_21] : memref<8x2x128xf32, #tpu.memory_space<vmem>>, vector<1x2x128xf32>
    %73 = vector.shape_cast %72 : vector<1x2x128xf32> to vector<2x128xf32>
    %74 = vector.shape_cast %71 : vector<2x128xf32> to vector<1x2x128xf32>
    tpu.vector_store %arg12[%c1, %c0_20, %c0_21], %74 {strides = array<i32>} : memref<8x2x128xf32, #tpu.memory_space<vmem>>, vector<1x2x128xf32>,
    %75 = vector.extract_strided_slice %7 {offsets = [2, 0, 0], sizes = [1, 2, 384], strides = [1, 1, 1]} : vector<8x2x384xf32> to vector<1x2x384xf32>
    %76 = vector.shape_cast %75 : vector<1x2x384xf32> to vector<2x384xf32>
    %cst_22 = arith.constant dense<0.000000e+00> : vector<2x384xf32>
    %77 = tpu.matmul %71, %8, %cst_22 {dimension_numbers = #tpu.dot_dimension_numbers<[1], [0], [0], [1], [0, 0, 1, 1], [], []>} : vector<2x128xf32>, vector<128x384xf32>, vector<2x384xf32> -> vector<2x384xf32>
    %78 = arith.addf %77, %11 : vector<2x384xf32>
    %79 = vector.extract_strided_slice %76 {offsets = [0, 0], sizes = [2, 128], strides = [1, 1]} : vector<2x384xf32> to vector<2x128xf32>
    %80 = vector.extract_strided_slice %78 {offsets = [0, 0], sizes = [2, 128], strides = [1, 1]} : vector<2x384xf32> to vector<2x128xf32>
    %81 = arith.addf %79, %80 : vector<2x128xf32>
    %82 = arith.negf %81 : vector<2x128xf32>
    %83 = math.exp %82 : vector<2x128xf32>
    %cst_23 = arith.constant 1.000000e+00 : f32
    %84 = vector.broadcast %cst_23 : f32 to vector<2x128xf32>
    %85 = arith.addf %84, %83 : vector<2x128xf32>
    %86 = arith.divf %84, %85 : vector<2x128xf32>
    %87 = vector.extract_strided_slice %76 {offsets = [0, 128], sizes = [2, 128], strides = [1, 1]} : vector<2x384xf32> to vector<2x128xf32>
    %88 = vector.extract_strided_slice %78 {offsets = [0, 128], sizes = [2, 128], strides = [1, 1]} : vector<2x384xf32> to vector<2x128xf32>
    %89 = arith.addf %87, %88 : vector<2x128xf32>
    %90 = arith.negf %89 : vector<2x128xf32>
    %91 = math.exp %90 : vector<2x128xf32>
    %cst_24 = arith.constant 1.000000e+00 : f32
    %92 = vector.broadcast %cst_24 : f32 to vector<2x128xf32>
    %93 = arith.addf %92, %91 : vector<2x128xf32>
    %94 = arith.divf %92, %93 : vector<2x128xf32>
    %95 = vector.extract_strided_slice %76 {offsets = [0, 256], sizes = [2, 128], strides = [1, 1]} : vector<2x384xf32> to vector<2x128xf32>
    %96 = vector.extract_strided_slice %78 {offsets = [0, 256], sizes = [2, 128], strides = [1, 1]} : vector<2x384xf32> to vector<2x128xf32>
    %97 = arith.mulf %86, %96 : vector<2x128xf32>
    %98 = arith.addf %95, %97 : vector<2x128xf32>
    %99 = math.tanh %98 : vector<2x128xf32>
    %100 = arith.subf %71, %99 : vector<2x128xf32>
    %101 = arith.mulf %94, %100 : vector<2x128xf32>
    %102 = arith.addf %99, %101 : vector<2x128xf32>
    %c2 = arith.constant 2 : index
    %c0_25 = arith.constant 0 : index
    %c0_26 = arith.constant 0 : index
    %103 = vector.load %arg12[%c2, %c0_25, %c0_26] : memref<8x2x128xf32, #tpu.memory_space<vmem>>, vector<1x2x128xf32>
    %104 = vector.shape_cast %103 : vector<1x2x128xf32> to vector<2x128xf32>
    %105 = vector.shape_cast %102 : vector<2x128xf32> to vector<1x2x128xf32>
    tpu.vector_store %arg12[%c2, %c0_25, %c0_26], %105 {strides = array<i32>} : memref<8x2x128xf32, #tpu.memory_space<vmem>>, vector<1x2x128xf32>,
    %106 = vector.extract_strided_slice %7 {offsets = [3, 0, 0], sizes = [1, 2, 384], strides = [1, 1, 1]} : vector<8x2x384xf32> to vector<1x2x384xf32>
    %107 = vector.shape_cast %106 : vector<1x2x384xf32> to vector<2x384xf32>
    %cst_27 = arith.constant dense<0.000000e+00> : vector<2x384xf32>
    %108 = tpu.matmul %102, %8, %cst_27 {dimension_numbers = #tpu.dot_dimension_numbers<[1], [0], [0], [1], [0, 0, 1, 1], [], []>} : vector<2x128xf32>, vector<128x384xf32>, vector<2x384xf32> -> vector<2x384xf32>
    %109 = arith.addf %108, %11 : vector<2x384xf32>
    %110 = vector.extract_strided_slice %107 {offsets = [0, 0], sizes = [2, 128], strides = [1, 1]} : vector<2x384xf32> to vector<2x128xf32>
    %111 = vector.extract_strided_slice %109 {offsets = [0, 0], sizes = [2, 128], strides = [1, 1]} : vector<2x384xf32> to vector<2x128xf32>
    %112 = arith.addf %110, %111 : vector<2x128xf32>
    %113 = arith.negf %112 : vector<2x128xf32>
    %114 = math.exp %113 : vector<2x128xf32>
    %cst_28 = arith.constant 1.000000e+00 : f32
    %115 = vector.broadcast %cst_28 : f32 to vector<2x128xf32>
    %116 = arith.addf %115, %114 : vector<2x128xf32>
    %117 = arith.divf %115, %116 : vector<2x128xf32>
    %118 = vector.extract_strided_slice %107 {offsets = [0, 128], sizes = [2, 128], strides = [1, 1]} : vector<2x384xf32> to vector<2x128xf32>
    %119 = vector.extract_strided_slice %109 {offsets = [0, 128], sizes = [2, 128], strides = [1, 1]} : vector<2x384xf32> to vector<2x128xf32>
    %120 = arith.addf %118, %119 : vector<2x128xf32>
    %121 = arith.negf %120 : vector<2x128xf32>
    %122 = math.exp %121 : vector<2x128xf32>
    %cst_29 = arith.constant 1.000000e+00 : f32
    %123 = vector.broadcast %cst_29 : f32 to vector<2x128xf32>
    %124 = arith.addf %123, %122 : vector<2x128xf32>
    %125 = arith.divf %123, %124 : vector<2x128xf32>
    %126 = vector.extract_strided_slice %107 {offsets = [0, 256], sizes = [2, 128], strides = [1, 1]} : vector<2x384xf32> to vector<2x128xf32>
    %127 = vector.extract_strided_slice %109 {offsets = [0, 256], sizes = [2, 128], strides = [1, 1]} : vector<2x384xf32> to vector<2x128xf32>
    %128 = arith.mulf %117, %127 : vector<2x128xf32>
    %129 = arith.addf %126, %128 : vector<2x128xf32>
    %130 = math.tanh %129 : vector<2x128xf32>
    %131 = arith.subf %102, %130 : vector<2x128xf32>
    %132 = arith.mulf %125, %131 : vector<2x128xf32>
    %133 = arith.addf %130, %132 : vector<2x128xf32>
    %c3 = arith.constant 3 : index
    %c0_30 = arith.constant 0 : index
    %c0_31 = arith.constant 0 : index
    %134 = vector.load %arg12[%c3, %c0_30, %c0_31] : memref<8x2x128xf32, #tpu.memory_space<vmem>>, vector<1x2x128xf32>
    %135 = vector.shape_cast %134 : vector<1x2x128xf32> to vector<2x128xf32>
    %136 = vector.shape_cast %133 : vector<2x128xf32> to vector<1x2x128xf32>
    tpu.vector_store %arg12[%c3, %c0_30, %c0_31], %136 {strides = array<i32>} : memref<8x2x128xf32, #tpu.memory_space<vmem>>, vector<1x2x128xf32>,
    %137 = vector.extract_strided_slice %7 {offsets = [4, 0, 0], sizes = [1, 2, 384], strides = [1, 1, 1]} : vector<8x2x384xf32> to vector<1x2x384xf32>
    %138 = vector.shape_cast %137 : vector<1x2x384xf32> to vector<2x384xf32>
    %cst_32 = arith.constant dense<0.000000e+00> : vector<2x384xf32>
    %139 = tpu.matmul %133, %8, %cst_32 {dimension_numbers = #tpu.dot_dimension_numbers<[1], [0], [0], [1], [0, 0, 1, 1], [], []>} : vector<2x128xf32>, vector<128x384xf32>, vector<2x384xf32> -> vector<2x384xf32>
    %140 = arith.addf %139, %11 : vector<2x384xf32>
    %141 = vector.extract_strided_slice %138 {offsets = [0, 0], sizes = [2, 128], strides = [1, 1]} : vector<2x384xf32> to vector<2x128xf32>
    %142 = vector.extract_strided_slice %140 {offsets = [0, 0], sizes = [2, 128], strides = [1, 1]} : vector<2x384xf32> to vector<2x128xf32>
    %143 = arith.addf %141, %142 : vector<2x128xf32>
    %144 = arith.negf %143 : vector<2x128xf32>
    %145 = math.exp %144 : vector<2x128xf32>
    %cst_33 = arith.constant 1.000000e+00 : f32
    %146 = vector.broadcast %cst_33 : f32 to vector<2x128xf32>
    %147 = arith.addf %146, %145 : vector<2x128xf32>
    %148 = arith.divf %146, %147 : vector<2x128xf32>
    %149 = vector.extract_strided_slice %138 {offsets = [0, 128], sizes = [2, 128], strides = [1, 1]} : vector<2x384xf32> to vector<2x128xf32>
    %150 = vector.extract_strided_slice %140 {offsets = [0, 128], sizes = [2, 128], strides = [1, 1]} : vector<2x384xf32> to vector<2x128xf32>
    %151 = arith.addf %149, %150 : vector<2x128xf32>
    %152 = arith.negf %151 : vector<2x128xf32>
    %153 = math.exp %152 : vector<2x128xf32>
    %cst_34 = arith.constant 1.000000e+00 : f32
    %154 = vector.broadcast %cst_34 : f32 to vector<2x128xf32>
    %155 = arith.addf %154, %153 : vector<2x128xf32>
    %156 = arith.divf %154, %155 : vector<2x128xf32>
    %157 = vector.extract_strided_slice %138 {offsets = [0, 256], sizes = [2, 128], strides = [1, 1]} : vector<2x384xf32> to vector<2x128xf32>
    %158 = vector.extract_strided_slice %140 {offsets = [0, 256], sizes = [2, 128], strides = [1, 1]} : vector<2x384xf32> to vector<2x128xf32>
    %159 = arith.mulf %148, %158 : vector<2x128xf32>
    %160 = arith.addf %157, %159 : vector<2x128xf32>
    %161 = math.tanh %160 : vector<2x128xf32>
    %162 = arith.subf %133, %161 : vector<2x128xf32>
    %163 = arith.mulf %156, %162 : vector<2x128xf32>
    %164 = arith.addf %161, %163 : vector<2x128xf32>
    %c4 = arith.constant 4 : index
    %c0_35 = arith.constant 0 : index
    %c0_36 = arith.constant 0 : index
    %165 = vector.load %arg12[%c4, %c0_35, %c0_36] : memref<8x2x128xf32, #tpu.memory_space<vmem>>, vector<1x2x128xf32>
    %166 = vector.shape_cast %165 : vector<1x2x128xf32> to vector<2x128xf32>
    %167 = vector.shape_cast %164 : vector<2x128xf32> to vector<1x2x128xf32>
    tpu.vector_store %arg12[%c4, %c0_35, %c0_36], %167 {strides = array<i32>} : memref<8x2x128xf32, #tpu.memory_space<vmem>>, vector<1x2x128xf32>,
    %168 = vector.extract_strided_slice %7 {offsets = [5, 0, 0], sizes = [1, 2, 384], strides = [1, 1, 1]} : vector<8x2x384xf32> to vector<1x2x384xf32>
    %169 = vector.shape_cast %168 : vector<1x2x384xf32> to vector<2x384xf32>
    %cst_37 = arith.constant dense<0.000000e+00> : vector<2x384xf32>
    %170 = tpu.matmul %164, %8, %cst_37 {dimension_numbers = #tpu.dot_dimension_numbers<[1], [0], [0], [1], [0, 0, 1, 1], [], []>} : vector<2x128xf32>, vector<128x384xf32>, vector<2x384xf32> -> vector<2x384xf32>
    %171 = arith.addf %170, %11 : vector<2x384xf32>
    %172 = vector.extract_strided_slice %169 {offsets = [0, 0], sizes = [2, 128], strides = [1, 1]} : vector<2x384xf32> to vector<2x128xf32>
    %173 = vector.extract_strided_slice %171 {offsets = [0, 0], sizes = [2, 128], strides = [1, 1]} : vector<2x384xf32> to vector<2x128xf32>
    %174 = arith.addf %172, %173 : vector<2x128xf32>
    %175 = arith.negf %174 : vector<2x128xf32>
    %176 = math.exp %175 : vector<2x128xf32>
    %cst_38 = arith.constant 1.000000e+00 : f32
    %177 = vector.broadcast %cst_38 : f32 to vector<2x128xf32>
    %178 = arith.addf %177, %176 : vector<2x128xf32>
    %179 = arith.divf %177, %178 : vector<2x128xf32>
    %180 = vector.extract_strided_slice %169 {offsets = [0, 128], sizes = [2, 128], strides = [1, 1]} : vector<2x384xf32> to vector<2x128xf32>
    %181 = vector.extract_strided_slice %171 {offsets = [0, 128], sizes = [2, 128], strides = [1, 1]} : vector<2x384xf32> to vector<2x128xf32>
    %182 = arith.addf %180, %181 : vector<2x128xf32>
    %183 = arith.negf %182 : vector<2x128xf32>
    %184 = math.exp %183 : vector<2x128xf32>
    %cst_39 = arith.constant 1.000000e+00 : f32
    %185 = vector.broadcast %cst_39 : f32 to vector<2x128xf32>
    %186 = arith.addf %185, %184 : vector<2x128xf32>
    %187 = arith.divf %185, %186 : vector<2x128xf32>
    %188 = vector.extract_strided_slice %169 {offsets = [0, 256], sizes = [2, 128], strides = [1, 1]} : vector<2x384xf32> to vector<2x128xf32>
    %189 = vector.extract_strided_slice %171 {offsets = [0, 256], sizes = [2, 128], strides = [1, 1]} : vector<2x384xf32> to vector<2x128xf32>
    %190 = arith.mulf %179, %189 : vector<2x128xf32>
    %191 = arith.addf %188, %190 : vector<2x128xf32>
    %192 = math.tanh %191 : vector<2x128xf32>
    %193 = arith.subf %164, %192 : vector<2x128xf32>
    %194 = arith.mulf %187, %193 : vector<2x128xf32>
    %195 = arith.addf %192, %194 : vector<2x128xf32>
    %c5 = arith.constant 5 : index
    %c0_40 = arith.constant 0 : index
    %c0_41 = arith.constant 0 : index
    %196 = vector.load %arg12[%c5, %c0_40, %c0_41] : memref<8x2x128xf32, #tpu.memory_space<vmem>>, vector<1x2x128xf32>
    %197 = vector.shape_cast %196 : vector<1x2x128xf32> to vector<2x128xf32>
    %198 = vector.shape_cast %195 : vector<2x128xf32> to vector<1x2x128xf32>
    tpu.vector_store %arg12[%c5, %c0_40, %c0_41], %198 {strides = array<i32>} : memref<8x2x128xf32, #tpu.memory_space<vmem>>, vector<1x2x128xf32>,
    %199 = vector.extract_strided_slice %7 {offsets = [6, 0, 0], sizes = [1, 2, 384], strides = [1, 1, 1]} : vector<8x2x384xf32> to vector<1x2x384xf32>
    %200 = vector.shape_cast %199 : vector<1x2x384xf32> to vector<2x384xf32>
    %cst_42 = arith.constant dense<0.000000e+00> : vector<2x384xf32>
    %201 = tpu.matmul %195, %8, %cst_42 {dimension_numbers = #tpu.dot_dimension_numbers<[1], [0], [0], [1], [0, 0, 1, 1], [], []>} : vector<2x128xf32>, vector<128x384xf32>, vector<2x384xf32> -> vector<2x384xf32>
    %202 = arith.addf %201, %11 : vector<2x384xf32>
    %203 = vector.extract_strided_slice %200 {offsets = [0, 0], sizes = [2, 128], strides = [1, 1]} : vector<2x384xf32> to vector<2x128xf32>
    %204 = vector.extract_strided_slice %202 {offsets = [0, 0], sizes = [2, 128], strides = [1, 1]} : vector<2x384xf32> to vector<2x128xf32>
    %205 = arith.addf %203, %204 : vector<2x128xf32>
    %206 = arith.negf %205 : vector<2x128xf32>
    %207 = math.exp %206 : vector<2x128xf32>
    %cst_43 = arith.constant 1.000000e+00 : f32
    %208 = vector.broadcast %cst_43 : f32 to vector<2x128xf32>
    %209 = arith.addf %208, %207 : vector<2x128xf32>
    %210 = arith.divf %208, %209 : vector<2x128xf32>
    %211 = vector.extract_strided_slice %200 {offsets = [0, 128], sizes = [2, 128], strides = [1, 1]} : vector<2x384xf32> to vector<2x128xf32>
    %212 = vector.extract_strided_slice %202 {offsets = [0, 128], sizes = [2, 128], strides = [1, 1]} : vector<2x384xf32> to vector<2x128xf32>
    %213 = arith.addf %211, %212 : vector<2x128xf32>
    %214 = arith.negf %213 : vector<2x128xf32>
    %215 = math.exp %214 : vector<2x128xf32>
    %cst_44 = arith.constant 1.000000e+00 : f32
    %216 = vector.broadcast %cst_44 : f32 to vector<2x128xf32>
    %217 = arith.addf %216, %215 : vector<2x128xf32>
    %218 = arith.divf %216, %217 : vector<2x128xf32>
    %219 = vector.extract_strided_slice %200 {offsets = [0, 256], sizes = [2, 128], strides = [1, 1]} : vector<2x384xf32> to vector<2x128xf32>
    %220 = vector.extract_strided_slice %202 {offsets = [0, 256], sizes = [2, 128], strides = [1, 1]} : vector<2x384xf32> to vector<2x128xf32>
    %221 = arith.mulf %210, %220 : vector<2x128xf32>
    %222 = arith.addf %219, %221 : vector<2x128xf32>
    %223 = math.tanh %222 : vector<2x128xf32>
    %224 = arith.subf %195, %223 : vector<2x128xf32>
    %225 = arith.mulf %218, %224 : vector<2x128xf32>
    %226 = arith.addf %223, %225 : vector<2x128xf32>
    %c6 = arith.constant 6 : index
    %c0_45 = arith.constant 0 : index
    %c0_46 = arith.constant 0 : index
    %227 = vector.load %arg12[%c6, %c0_45, %c0_46] : memref<8x2x128xf32, #tpu.memory_space<vmem>>, vector<1x2x128xf32>
    %228 = vector.shape_cast %227 : vector<1x2x128xf32> to vector<2x128xf32>
    %229 = vector.shape_cast %226 : vector<2x128xf32> to vector<1x2x128xf32>
    tpu.vector_store %arg12[%c6, %c0_45, %c0_46], %229 {strides = array<i32>} : memref<8x2x128xf32, #tpu.memory_space<vmem>>, vector<1x2x128xf32>,
    %230 = vector.extract_strided_slice %7 {offsets = [7, 0, 0], sizes = [1, 2, 384], strides = [1, 1, 1]} : vector<8x2x384xf32> to vector<1x2x384xf32>
    %231 = vector.shape_cast %230 : vector<1x2x384xf32> to vector<2x384xf32>
    %cst_47 = arith.constant dense<0.000000e+00> : vector<2x384xf32>
    %232 = tpu.matmul %226, %8, %cst_47 {dimension_numbers = #tpu.dot_dimension_numbers<[1], [0], [0], [1], [0, 0, 1, 1], [], []>} : vector<2x128xf32>, vector<128x384xf32>, vector<2x384xf32> -> vector<2x384xf32>
    %233 = arith.addf %232, %11 : vector<2x384xf32>
    %234 = vector.extract_strided_slice %231 {offsets = [0, 0], sizes = [2, 128], strides = [1, 1]} : vector<2x384xf32> to vector<2x128xf32>
    %235 = vector.extract_strided_slice %233 {offsets = [0, 0], sizes = [2, 128], strides = [1, 1]} : vector<2x384xf32> to vector<2x128xf32>
    %236 = arith.addf %234, %235 : vector<2x128xf32>
    %237 = arith.negf %236 : vector<2x128xf32>
    %238 = math.exp %237 : vector<2x128xf32>
    %cst_48 = arith.constant 1.000000e+00 : f32
    %239 = vector.broadcast %cst_48 : f32 to vector<2x128xf32>
    %240 = arith.addf %239, %238 : vector<2x128xf32>
    %241 = arith.divf %239, %240 : vector<2x128xf32>
    %242 = vector.extract_strided_slice %231 {offsets = [0, 128], sizes = [2, 128], strides = [1, 1]} : vector<2x384xf32> to vector<2x128xf32>
    %243 = vector.extract_strided_slice %233 {offsets = [0, 128], sizes = [2, 128], strides = [1, 1]} : vector<2x384xf32> to vector<2x128xf32>
    %244 = arith.addf %242, %243 : vector<2x128xf32>
    %245 = arith.negf %244 : vector<2x128xf32>
    %246 = math.exp %245 : vector<2x128xf32>
    %cst_49 = arith.constant 1.000000e+00 : f32
    %247 = vector.broadcast %cst_49 : f32 to vector<2x128xf32>
    %248 = arith.addf %247, %246 : vector<2x128xf32>
    %249 = arith.divf %247, %248 : vector<2x128xf32>
    %250 = vector.extract_strided_slice %231 {offsets = [0, 256], sizes = [2, 128], strides = [1, 1]} : vector<2x384xf32> to vector<2x128xf32>
    %251 = vector.extract_strided_slice %233 {offsets = [0, 256], sizes = [2, 128], strides = [1, 1]} : vector<2x384xf32> to vector<2x128xf32>
    %252 = arith.mulf %241, %251 : vector<2x128xf32>
    %253 = arith.addf %250, %252 : vector<2x128xf32>
    %254 = math.tanh %253 : vector<2x128xf32>
    %255 = arith.subf %226, %254 : vector<2x128xf32>
    %256 = arith.mulf %249, %255 : vector<2x128xf32>
    %257 = arith.addf %254, %256 : vector<2x128xf32>
    %c7 = arith.constant 7 : index
    %c0_50 = arith.constant 0 : index
    %c0_51 = arith.constant 0 : index
    %258 = vector.load %arg12[%c7, %c0_50, %c0_51] : memref<8x2x128xf32, #tpu.memory_space<vmem>>, vector<1x2x128xf32>
    %259 = vector.shape_cast %258 : vector<1x2x128xf32> to vector<2x128xf32>
    %260 = vector.shape_cast %257 : vector<2x128xf32> to vector<1x2x128xf32>
    tpu.vector_store %arg12[%c7, %c0_50, %c0_51], %260 {strides = array<i32>} : memref<8x2x128xf32, #tpu.memory_space<vmem>>, vector<1x2x128xf32>,
    %c0_52 = arith.constant 0 : index
    %c0_53 = arith.constant 0 : index
    %c0_54 = arith.constant 0 : index
    %261 = vector.load %arg12[%c0_52, %c0_53, %c0_54] : memref<8x2x128xf32, #tpu.memory_space<vmem>>, vector<8x2x128xf32>
    %262 = vector.shape_cast %261 : vector<8x2x128xf32> to vector<16x128xf32>
    %c0_55 = arith.constant 0 : index
    %c0_56 = arith.constant 0 : index
    %263 = vector.load %arg5[%c0_55, %c0_56] : memref<128x384xf32, #tpu.memory_space<vmem>>, vector<128x384xf32>
    %cst_57 = arith.constant dense<0.000000e+00> : vector<16x384xf32>
    %264 = tpu.matmul %262, %263, %cst_57 {dimension_numbers = #tpu.dot_dimension_numbers<[1], [0], [0], [1], [0, 0, 1, 1], [], []>} : vector<16x128xf32>, vector<128x384xf32>, vector<16x384xf32> -> vector<16x384xf32>
    %c0_58 = arith.constant 0 : index
    %c0_59 = arith.constant 0 : index
    %265 = vector.load %arg7[%c0_58, %c0_59] : memref<1x384xf32, #tpu.memory_space<vmem>>, vector<1x384xf32>
    %266 = vector.broadcast %265 : vector<1x384xf32> to vector<16x384xf32>
    %267 = arith.addf %264, %266 : vector<16x384xf32>
    %268 = vector.shape_cast %267 : vector<16x384xf32> to vector<8x2x384xf32>
    %c0_60 = arith.constant 0 : index
    %c0_61 = arith.constant 0 : index
    %269 = vector.load %arg6[%c0_60, %c0_61] : memref<128x384xf32, #tpu.memory_space<vmem>>, vector<128x384xf32>
    %c0_62 = arith.constant 0 : index
    %c0_63 = arith.constant 0 : index
    %270 = vector.load %arg8[%c0_62, %c0_63] : memref<1x384xf32, #tpu.memory_space<vmem>>, vector<1x384xf32>
    %271 = vector.shape_cast %270 : vector<1x384xf32> to vector<1x384xf32>
    %272 = vector.broadcast %271 : vector<1x384xf32> to vector<2x384xf32>
    %cst_64 = arith.constant 0.000000e+00 : f32
    %273 = vector.broadcast %cst_64 : f32 to vector<2x128xf32>
    %cst_65 = arith.constant 0.000000e+00 : f32
    %274 = vector.broadcast %cst_65 : f32 to vector<2x128xf32>
    %275 = vector.extract_strided_slice %268 {offsets = [0, 0, 0], sizes = [1, 2, 384], strides = [1, 1, 1]} : vector<8x2x384xf32> to vector<1x2x384xf32>
    %276 = vector.shape_cast %275 : vector<1x2x384xf32> to vector<2x384xf32>
    %cst_66 = arith.constant dense<0.000000e+00> : vector<2x384xf32>
    %277 = tpu.matmul %273, %269, %cst_66 {dimension_numbers = #tpu.dot_dimension_numbers<[1], [0], [0], [1], [0, 0, 1, 1], [], []>} : vector<2x128xf32>, vector<128x384xf32>, vector<2x384xf32> -> vector<2x384xf32>
    %278 = arith.addf %277, %272 : vector<2x384xf32>
    %279 = vector.extract_strided_slice %276 {offsets = [0, 0], sizes = [2, 128], strides = [1, 1]} : vector<2x384xf32> to vector<2x128xf32>
    %280 = vector.extract_strided_slice %278 {offsets = [0, 0], sizes = [2, 128], strides = [1, 1]} : vector<2x384xf32> to vector<2x128xf32>
    %281 = arith.addf %279, %280 : vector<2x128xf32>
    %282 = arith.negf %281 : vector<2x128xf32>
    %283 = math.exp %282 : vector<2x128xf32>
    %cst_67 = arith.constant 1.000000e+00 : f32
    %284 = vector.broadcast %cst_67 : f32 to vector<2x128xf32>
    %285 = arith.addf %284, %283 : vector<2x128xf32>
    %286 = arith.divf %284, %285 : vector<2x128xf32>
    %287 = vector.extract_strided_slice %276 {offsets = [0, 128], sizes = [2, 128], strides = [1, 1]} : vector<2x384xf32> to vector<2x128xf32>
    %288 = vector.extract_strided_slice %278 {offsets = [0, 128], sizes = [2, 128], strides = [1, 1]} : vector<2x384xf32> to vector<2x128xf32>
    %289 = arith.addf %287, %288 : vector<2x128xf32>
    %290 = arith.negf %289 : vector<2x128xf32>
    %291 = math.exp %290 : vector<2x128xf32>
    %cst_68 = arith.constant 1.000000e+00 : f32
    %292 = vector.broadcast %cst_68 : f32 to vector<2x128xf32>
    %293 = arith.addf %292, %291 : vector<2x128xf32>
    %294 = arith.divf %292, %293 : vector<2x128xf32>
    %295 = vector.extract_strided_slice %276 {offsets = [0, 256], sizes = [2, 128], strides = [1, 1]} : vector<2x384xf32> to vector<2x128xf32>
    %296 = vector.extract_strided_slice %278 {offsets = [0, 256], sizes = [2, 128], strides = [1, 1]} : vector<2x384xf32> to vector<2x128xf32>
    %297 = arith.mulf %286, %296 : vector<2x128xf32>
    %298 = arith.addf %295, %297 : vector<2x128xf32>
    %299 = math.tanh %298 : vector<2x128xf32>
    %300 = arith.subf %273, %299 : vector<2x128xf32>
    %301 = arith.mulf %294, %300 : vector<2x128xf32>
    %302 = arith.addf %299, %301 : vector<2x128xf32>
    %c0_69 = arith.constant 0 : index
    %c0_70 = arith.constant 0 : index
    %c0_71 = arith.constant 0 : index
    %303 = vector.load %arg9[%c0_69, %c0_70, %c0_71] : memref<8x128x128xf32, #tpu.memory_space<vmem>>, vector<1x128x128xf32>
    %304 = vector.shape_cast %303 : vector<1x128x128xf32> to vector<128x128xf32>
    %cst_72 = arith.constant dense<0.000000e+00> : vector<2x128xf32>
    %305 = tpu.matmul %302, %304, %cst_72 {dimension_numbers = #tpu.dot_dimension_numbers<[1], [0], [0], [1], [0, 0, 1, 1], [], []>} : vector<2x128xf32>, vector<128x128xf32>, vector<2x128xf32> -> vector<2x128xf32>
    %306 = arith.addf %274, %305 : vector<2x128xf32>
    %307 = vector.extract_strided_slice %268 {offsets = [1, 0, 0], sizes = [1, 2, 384], strides = [1, 1, 1]} : vector<8x2x384xf32> to vector<1x2x384xf32>
    %308 = vector.shape_cast %307 : vector<1x2x384xf32> to vector<2x384xf32>
    %cst_73 = arith.constant dense<0.000000e+00> : vector<2x384xf32>
    %309 = tpu.matmul %302, %269, %cst_73 {dimension_numbers = #tpu.dot_dimension_numbers<[1], [0], [0], [1], [0, 0, 1, 1], [], []>} : vector<2x128xf32>, vector<128x384xf32>, vector<2x384xf32> -> vector<2x384xf32>
    %310 = arith.addf %309, %272 : vector<2x384xf32>
    %311 = vector.extract_strided_slice %308 {offsets = [0, 0], sizes = [2, 128], strides = [1, 1]} : vector<2x384xf32> to vector<2x128xf32>
    %312 = vector.extract_strided_slice %310 {offsets = [0, 0], sizes = [2, 128], strides = [1, 1]} : vector<2x384xf32> to vector<2x128xf32>
    %313 = arith.addf %311, %312 : vector<2x128xf32>
    %314 = arith.negf %313 : vector<2x128xf32>
    %315 = math.exp %314 : vector<2x128xf32>
    %cst_74 = arith.constant 1.000000e+00 : f32
    %316 = vector.broadcast %cst_74 : f32 to vector<2x128xf32>
    %317 = arith.addf %316, %315 : vector<2x128xf32>
    %318 = arith.divf %316, %317 : vector<2x128xf32>
    %319 = vector.extract_strided_slice %308 {offsets = [0, 128], sizes = [2, 128], strides = [1, 1]} : vector<2x384xf32> to vector<2x128xf32>
    %320 = vector.extract_strided_slice %310 {offsets = [0, 128], sizes = [2, 128], strides = [1, 1]} : vector<2x384xf32> to vector<2x128xf32>
    %321 = arith.addf %319, %320 : vector<2x128xf32>
    %322 = arith.negf %321 : vector<2x128xf32>
    %323 = math.exp %322 : vector<2x128xf32>
    %cst_75 = arith.constant 1.000000e+00 : f32
    %324 = vector.broadcast %cst_75 : f32 to vector<2x128xf32>
    %325 = arith.addf %324, %323 : vector<2x128xf32>
    %326 = arith.divf %324, %325 : vector<2x128xf32>
    %327 = vector.extract_strided_slice %308 {offsets = [0, 256], sizes = [2, 128], strides = [1, 1]} : vector<2x384xf32> to vector<2x128xf32>
    %328 = vector.extract_strided_slice %310 {offsets = [0, 256], sizes = [2, 128], strides = [1, 1]} : vector<2x384xf32> to vector<2x128xf32>
    %329 = arith.mulf %318, %328 : vector<2x128xf32>
    %330 = arith.addf %327, %329 : vector<2x128xf32>
    %331 = math.tanh %330 : vector<2x128xf32>
    %332 = arith.subf %302, %331 : vector<2x128xf32>
    %333 = arith.mulf %326, %332 : vector<2x128xf32>
    %334 = arith.addf %331, %333 : vector<2x128xf32>
    %c1_76 = arith.constant 1 : index
    %c0_77 = arith.constant 0 : index
    %c0_78 = arith.constant 0 : index
    %335 = vector.load %arg9[%c1_76, %c0_77, %c0_78] : memref<8x128x128xf32, #tpu.memory_space<vmem>>, vector<1x128x128xf32>
    %336 = vector.shape_cast %335 : vector<1x128x128xf32> to vector<128x128xf32>
    %cst_79 = arith.constant dense<0.000000e+00> : vector<2x128xf32>
    %337 = tpu.matmul %334, %336, %cst_79 {dimension_numbers = #tpu.dot_dimension_numbers<[1], [0], [0], [1], [0, 0, 1, 1], [], []>} : vector<2x128xf32>, vector<128x128xf32>, vector<2x128xf32> -> vector<2x128xf32>
    %338 = arith.addf %306, %337 : vector<2x128xf32>
    %339 = vector.extract_strided_slice %268 {offsets = [2, 0, 0], sizes = [1, 2, 384], strides = [1, 1, 1]} : vector<8x2x384xf32> to vector<1x2x384xf32>
    %340 = vector.shape_cast %339 : vector<1x2x384xf32> to vector<2x384xf32>
    %cst_80 = arith.constant dense<0.000000e+00> : vector<2x384xf32>
    %341 = tpu.matmul %334, %269, %cst_80 {dimension_numbers = #tpu.dot_dimension_numbers<[1], [0], [0], [1], [0, 0, 1, 1], [], []>} : vector<2x128xf32>, vector<128x384xf32>, vector<2x384xf32> -> vector<2x384xf32>
    %342 = arith.addf %341, %272 : vector<2x384xf32>
    %343 = vector.extract_strided_slice %340 {offsets = [0, 0], sizes = [2, 128], strides = [1, 1]} : vector<2x384xf32> to vector<2x128xf32>
    %344 = vector.extract_strided_slice %342 {offsets = [0, 0], sizes = [2, 128], strides = [1, 1]} : vector<2x384xf32> to vector<2x128xf32>
    %345 = arith.addf %343, %344 : vector<2x128xf32>
    %346 = arith.negf %345 : vector<2x128xf32>
    %347 = math.exp %346 : vector<2x128xf32>
    %cst_81 = arith.constant 1.000000e+00 : f32
    %348 = vector.broadcast %cst_81 : f32 to vector<2x128xf32>
    %349 = arith.addf %348, %347 : vector<2x128xf32>
    %350 = arith.divf %348, %349 : vector<2x128xf32>
    %351 = vector.extract_strided_slice %340 {offsets = [0, 128], sizes = [2, 128], strides = [1, 1]} : vector<2x384xf32> to vector<2x128xf32>
    %352 = vector.extract_strided_slice %342 {offsets = [0, 128], sizes = [2, 128], strides = [1, 1]} : vector<2x384xf32> to vector<2x128xf32>
    %353 = arith.addf %351, %352 : vector<2x128xf32>
    %354 = arith.negf %353 : vector<2x128xf32>
    %355 = math.exp %354 : vector<2x128xf32>
    %cst_82 = arith.constant 1.000000e+00 : f32
    %356 = vector.broadcast %cst_82 : f32 to vector<2x128xf32>
    %357 = arith.addf %356, %355 : vector<2x128xf32>
    %358 = arith.divf %356, %357 : vector<2x128xf32>
    %359 = vector.extract_strided_slice %340 {offsets = [0, 256], sizes = [2, 128], strides = [1, 1]} : vector<2x384xf32> to vector<2x128xf32>
    %360 = vector.extract_strided_slice %342 {offsets = [0, 256], sizes = [2, 128], strides = [1, 1]} : vector<2x384xf32> to vector<2x128xf32>
    %361 = arith.mulf %350, %360 : vector<2x128xf32>
    %362 = arith.addf %359, %361 : vector<2x128xf32>
    %363 = math.tanh %362 : vector<2x128xf32>
    %364 = arith.subf %334, %363 : vector<2x128xf32>
    %365 = arith.mulf %358, %364 : vector<2x128xf32>
    %366 = arith.addf %363, %365 : vector<2x128xf32>
    %c2_83 = arith.constant 2 : index
    %c0_84 = arith.constant 0 : index
    %c0_85 = arith.constant 0 : index
    %367 = vector.load %arg9[%c2_83, %c0_84, %c0_85] : memref<8x128x128xf32, #tpu.memory_space<vmem>>, vector<1x128x128xf32>
    %368 = vector.shape_cast %367 : vector<1x128x128xf32> to vector<128x128xf32>
    %cst_86 = arith.constant dense<0.000000e+00> : vector<2x128xf32>
    %369 = tpu.matmul %366, %368, %cst_86 {dimension_numbers = #tpu.dot_dimension_numbers<[1], [0], [0], [1], [0, 0, 1, 1], [], []>} : vector<2x128xf32>, vector<128x128xf32>, vector<2x128xf32> -> vector<2x128xf32>
    %370 = arith.addf %338, %369 : vector<2x128xf32>
    %371 = vector.extract_strided_slice %268 {offsets = [3, 0, 0], sizes = [1, 2, 384], strides = [1, 1, 1]} : vector<8x2x384xf32> to vector<1x2x384xf32>
    %372 = vector.shape_cast %371 : vector<1x2x384xf32> to vector<2x384xf32>
    %cst_87 = arith.constant dense<0.000000e+00> : vector<2x384xf32>
    %373 = tpu.matmul %366, %269, %cst_87 {dimension_numbers = #tpu.dot_dimension_numbers<[1], [0], [0], [1], [0, 0, 1, 1], [], []>} : vector<2x128xf32>, vector<128x384xf32>, vector<2x384xf32> -> vector<2x384xf32>
    %374 = arith.addf %373, %272 : vector<2x384xf32>
    %375 = vector.extract_strided_slice %372 {offsets = [0, 0], sizes = [2, 128], strides = [1, 1]} : vector<2x384xf32> to vector<2x128xf32>
    %376 = vector.extract_strided_slice %374 {offsets = [0, 0], sizes = [2, 128], strides = [1, 1]} : vector<2x384xf32> to vector<2x128xf32>
    %377 = arith.addf %375, %376 : vector<2x128xf32>
    %378 = arith.negf %377 : vector<2x128xf32>
    %379 = math.exp %378 : vector<2x128xf32>
    %cst_88 = arith.constant 1.000000e+00 : f32
    %380 = vector.broadcast %cst_88 : f32 to vector<2x128xf32>
    %381 = arith.addf %380, %379 : vector<2x128xf32>
    %382 = arith.divf %380, %381 : vector<2x128xf32>
    %383 = vector.extract_strided_slice %372 {offsets = [0, 128], sizes = [2, 128], strides = [1, 1]} : vector<2x384xf32> to vector<2x128xf32>
    %384 = vector.extract_strided_slice %374 {offsets = [0, 128], sizes = [2, 128], strides = [1, 1]} : vector<2x384xf32> to vector<2x128xf32>
    %385 = arith.addf %383, %384 : vector<2x128xf32>
    %386 = arith.negf %385 : vector<2x128xf32>
    %387 = math.exp %386 : vector<2x128xf32>
    %cst_89 = arith.constant 1.000000e+00 : f32
    %388 = vector.broadcast %cst_89 : f32 to vector<2x128xf32>
    %389 = arith.addf %388, %387 : vector<2x128xf32>
    %390 = arith.divf %388, %389 : vector<2x128xf32>
    %391 = vector.extract_strided_slice %372 {offsets = [0, 256], sizes = [2, 128], strides = [1, 1]} : vector<2x384xf32> to vector<2x128xf32>
    %392 = vector.extract_strided_slice %374 {offsets = [0, 256], sizes = [2, 128], strides = [1, 1]} : vector<2x384xf32> to vector<2x128xf32>
    %393 = arith.mulf %382, %392 : vector<2x128xf32>
    %394 = arith.addf %391, %393 : vector<2x128xf32>
    %395 = math.tanh %394 : vector<2x128xf32>
    %396 = arith.subf %366, %395 : vector<2x128xf32>
    %397 = arith.mulf %390, %396 : vector<2x128xf32>
    %398 = arith.addf %395, %397 : vector<2x128xf32>
    %c3_90 = arith.constant 3 : index
    %c0_91 = arith.constant 0 : index
    %c0_92 = arith.constant 0 : index
    %399 = vector.load %arg9[%c3_90, %c0_91, %c0_92] : memref<8x128x128xf32, #tpu.memory_space<vmem>>, vector<1x128x128xf32>
    %400 = vector.shape_cast %399 : vector<1x128x128xf32> to vector<128x128xf32>
    %cst_93 = arith.constant dense<0.000000e+00> : vector<2x128xf32>
    %401 = tpu.matmul %398, %400, %cst_93 {dimension_numbers = #tpu.dot_dimension_numbers<[1], [0], [0], [1], [0, 0, 1, 1], [], []>} : vector<2x128xf32>, vector<128x128xf32>, vector<2x128xf32> -> vector<2x128xf32>
    %402 = arith.addf %370, %401 : vector<2x128xf32>
    %403 = vector.extract_strided_slice %268 {offsets = [4, 0, 0], sizes = [1, 2, 384], strides = [1, 1, 1]} : vector<8x2x384xf32> to vector<1x2x384xf32>
    %404 = vector.shape_cast %403 : vector<1x2x384xf32> to vector<2x384xf32>
    %cst_94 = arith.constant dense<0.000000e+00> : vector<2x384xf32>
    %405 = tpu.matmul %398, %269, %cst_94 {dimension_numbers = #tpu.dot_dimension_numbers<[1], [0], [0], [1], [0, 0, 1, 1], [], []>} : vector<2x128xf32>, vector<128x384xf32>, vector<2x384xf32> -> vector<2x384xf32>
    %406 = arith.addf %405, %272 : vector<2x384xf32>
    %407 = vector.extract_strided_slice %404 {offsets = [0, 0], sizes = [2, 128], strides = [1, 1]} : vector<2x384xf32> to vector<2x128xf32>
    %408 = vector.extract_strided_slice %406 {offsets = [0, 0], sizes = [2, 128], strides = [1, 1]} : vector<2x384xf32> to vector<2x128xf32>
    %409 = arith.addf %407, %408 : vector<2x128xf32>
    %410 = arith.negf %409 : vector<2x128xf32>
    %411 = math.exp %410 : vector<2x128xf32>
    %cst_95 = arith.constant 1.000000e+00 : f32
    %412 = vector.broadcast %cst_95 : f32 to vector<2x128xf32>
    %413 = arith.addf %412, %411 : vector<2x128xf32>
    %414 = arith.divf %412, %413 : vector<2x128xf32>
    %415 = vector.extract_strided_slice %404 {offsets = [0, 128], sizes = [2, 128], strides = [1, 1]} : vector<2x384xf32> to vector<2x128xf32>
    %416 = vector.extract_strided_slice %406 {offsets = [0, 128], sizes = [2, 128], strides = [1, 1]} : vector<2x384xf32> to vector<2x128xf32>
    %417 = arith.addf %415, %416 : vector<2x128xf32>
    %418 = arith.negf %417 : vector<2x128xf32>
    %419 = math.exp %418 : vector<2x128xf32>
    %cst_96 = arith.constant 1.000000e+00 : f32
    %420 = vector.broadcast %cst_96 : f32 to vector<2x128xf32>
    %421 = arith.addf %420, %419 : vector<2x128xf32>
    %422 = arith.divf %420, %421 : vector<2x128xf32>
    %423 = vector.extract_strided_slice %404 {offsets = [0, 256], sizes = [2, 128], strides = [1, 1]} : vector<2x384xf32> to vector<2x128xf32>
    %424 = vector.extract_strided_slice %406 {offsets = [0, 256], sizes = [2, 128], strides = [1, 1]} : vector<2x384xf32> to vector<2x128xf32>
    %425 = arith.mulf %414, %424 : vector<2x128xf32>
    %426 = arith.addf %423, %425 : vector<2x128xf32>
    %427 = math.tanh %426 : vector<2x128xf32>
    %428 = arith.subf %398, %427 : vector<2x128xf32>
    %429 = arith.mulf %422, %428 : vector<2x128xf32>
    %430 = arith.addf %427, %429 : vector<2x128xf32>
    %c4_97 = arith.constant 4 : index
    %c0_98 = arith.constant 0 : index
    %c0_99 = arith.constant 0 : index
    %431 = vector.load %arg9[%c4_97, %c0_98, %c0_99] : memref<8x128x128xf32, #tpu.memory_space<vmem>>, vector<1x128x128xf32>
    %432 = vector.shape_cast %431 : vector<1x128x128xf32> to vector<128x128xf32>
    %cst_100 = arith.constant dense<0.000000e+00> : vector<2x128xf32>
    %433 = tpu.matmul %430, %432, %cst_100 {dimension_numbers = #tpu.dot_dimension_numbers<[1], [0], [0], [1], [0, 0, 1, 1], [], []>} : vector<2x128xf32>, vector<128x128xf32>, vector<2x128xf32> -> vector<2x128xf32>
    %434 = arith.addf %402, %433 : vector<2x128xf32>
    %435 = vector.extract_strided_slice %268 {offsets = [5, 0, 0], sizes = [1, 2, 384], strides = [1, 1, 1]} : vector<8x2x384xf32> to vector<1x2x384xf32>
    %436 = vector.shape_cast %435 : vector<1x2x384xf32> to vector<2x384xf32>
    %cst_101 = arith.constant dense<0.000000e+00> : vector<2x384xf32>
    %437 = tpu.matmul %430, %269, %cst_101 {dimension_numbers = #tpu.dot_dimension_numbers<[1], [0], [0], [1], [0, 0, 1, 1], [], []>} : vector<2x128xf32>, vector<128x384xf32>, vector<2x384xf32> -> vector<2x384xf32>
    %438 = arith.addf %437, %272 : vector<2x384xf32>
    %439 = vector.extract_strided_slice %436 {offsets = [0, 0], sizes = [2, 128], strides = [1, 1]} : vector<2x384xf32> to vector<2x128xf32>
    %440 = vector.extract_strided_slice %438 {offsets = [0, 0], sizes = [2, 128], strides = [1, 1]} : vector<2x384xf32> to vector<2x128xf32>
    %441 = arith.addf %439, %440 : vector<2x128xf32>
    %442 = arith.negf %441 : vector<2x128xf32>
    %443 = math.exp %442 : vector<2x128xf32>
    %cst_102 = arith.constant 1.000000e+00 : f32
    %444 = vector.broadcast %cst_102 : f32 to vector<2x128xf32>
    %445 = arith.addf %444, %443 : vector<2x128xf32>
    %446 = arith.divf %444, %445 : vector<2x128xf32>
    %447 = vector.extract_strided_slice %436 {offsets = [0, 128], sizes = [2, 128], strides = [1, 1]} : vector<2x384xf32> to vector<2x128xf32>
    %448 = vector.extract_strided_slice %438 {offsets = [0, 128], sizes = [2, 128], strides = [1, 1]} : vector<2x384xf32> to vector<2x128xf32>
    %449 = arith.addf %447, %448 : vector<2x128xf32>
    %450 = arith.negf %449 : vector<2x128xf32>
    %451 = math.exp %450 : vector<2x128xf32>
    %cst_103 = arith.constant 1.000000e+00 : f32
    %452 = vector.broadcast %cst_103 : f32 to vector<2x128xf32>
    %453 = arith.addf %452, %451 : vector<2x128xf32>
    %454 = arith.divf %452, %453 : vector<2x128xf32>
    %455 = vector.extract_strided_slice %436 {offsets = [0, 256], sizes = [2, 128], strides = [1, 1]} : vector<2x384xf32> to vector<2x128xf32>
    %456 = vector.extract_strided_slice %438 {offsets = [0, 256], sizes = [2, 128], strides = [1, 1]} : vector<2x384xf32> to vector<2x128xf32>
    %457 = arith.mulf %446, %456 : vector<2x128xf32>
    %458 = arith.addf %455, %457 : vector<2x128xf32>
    %459 = math.tanh %458 : vector<2x128xf32>
    %460 = arith.subf %430, %459 : vector<2x128xf32>
    %461 = arith.mulf %454, %460 : vector<2x128xf32>
    %462 = arith.addf %459, %461 : vector<2x128xf32>
    %c5_104 = arith.constant 5 : index
    %c0_105 = arith.constant 0 : index
    %c0_106 = arith.constant 0 : index
    %463 = vector.load %arg9[%c5_104, %c0_105, %c0_106] : memref<8x128x128xf32, #tpu.memory_space<vmem>>, vector<1x128x128xf32>
    %464 = vector.shape_cast %463 : vector<1x128x128xf32> to vector<128x128xf32>
    %cst_107 = arith.constant dense<0.000000e+00> : vector<2x128xf32>
    %465 = tpu.matmul %462, %464, %cst_107 {dimension_numbers = #tpu.dot_dimension_numbers<[1], [0], [0], [1], [0, 0, 1, 1], [], []>} : vector<2x128xf32>, vector<128x128xf32>, vector<2x128xf32> -> vector<2x128xf32>
    %466 = arith.addf %434, %465 : vector<2x128xf32>
    %467 = vector.extract_strided_slice %268 {offsets = [6, 0, 0], sizes = [1, 2, 384], strides = [1, 1, 1]} : vector<8x2x384xf32> to vector<1x2x384xf32>
    %468 = vector.shape_cast %467 : vector<1x2x384xf32> to vector<2x384xf32>
    %cst_108 = arith.constant dense<0.000000e+00> : vector<2x384xf32>
    %469 = tpu.matmul %462, %269, %cst_108 {dimension_numbers = #tpu.dot_dimension_numbers<[1], [0], [0], [1], [0, 0, 1, 1], [], []>} : vector<2x128xf32>, vector<128x384xf32>, vector<2x384xf32> -> vector<2x384xf32>
    %470 = arith.addf %469, %272 : vector<2x384xf32>
    %471 = vector.extract_strided_slice %468 {offsets = [0, 0], sizes = [2, 128], strides = [1, 1]} : vector<2x384xf32> to vector<2x128xf32>
    %472 = vector.extract_strided_slice %470 {offsets = [0, 0], sizes = [2, 128], strides = [1, 1]} : vector<2x384xf32> to vector<2x128xf32>
    %473 = arith.addf %471, %472 : vector<2x128xf32>
    %474 = arith.negf %473 : vector<2x128xf32>
    %475 = math.exp %474 : vector<2x128xf32>
    %cst_109 = arith.constant 1.000000e+00 : f32
    %476 = vector.broadcast %cst_109 : f32 to vector<2x128xf32>
    %477 = arith.addf %476, %475 : vector<2x128xf32>
    %478 = arith.divf %476, %477 : vector<2x128xf32>
    %479 = vector.extract_strided_slice %468 {offsets = [0, 128], sizes = [2, 128], strides = [1, 1]} : vector<2x384xf32> to vector<2x128xf32>
    %480 = vector.extract_strided_slice %470 {offsets = [0, 128], sizes = [2, 128], strides = [1, 1]} : vector<2x384xf32> to vector<2x128xf32>
    %481 = arith.addf %479, %480 : vector<2x128xf32>
    %482 = arith.negf %481 : vector<2x128xf32>
    %483 = math.exp %482 : vector<2x128xf32>
    %cst_110 = arith.constant 1.000000e+00 : f32
    %484 = vector.broadcast %cst_110 : f32 to vector<2x128xf32>
    %485 = arith.addf %484, %483 : vector<2x128xf32>
    %486 = arith.divf %484, %485 : vector<2x128xf32>
    %487 = vector.extract_strided_slice %468 {offsets = [0, 256], sizes = [2, 128], strides = [1, 1]} : vector<2x384xf32> to vector<2x128xf32>
    %488 = vector.extract_strided_slice %470 {offsets = [0, 256], sizes = [2, 128], strides = [1, 1]} : vector<2x384xf32> to vector<2x128xf32>
    %489 = arith.mulf %478, %488 : vector<2x128xf32>
    %490 = arith.addf %487, %489 : vector<2x128xf32>
    %491 = math.tanh %490 : vector<2x128xf32>
    %492 = arith.subf %462, %491 : vector<2x128xf32>
    %493 = arith.mulf %486, %492 : vector<2x128xf32>
    %494 = arith.addf %491, %493 : vector<2x128xf32>
    %c6_111 = arith.constant 6 : index
    %c0_112 = arith.constant 0 : index
    %c0_113 = arith.constant 0 : index
    %495 = vector.load %arg9[%c6_111, %c0_112, %c0_113] : memref<8x128x128xf32, #tpu.memory_space<vmem>>, vector<1x128x128xf32>
    %496 = vector.shape_cast %495 : vector<1x128x128xf32> to vector<128x128xf32>
    %cst_114 = arith.constant dense<0.000000e+00> : vector<2x128xf32>
    %497 = tpu.matmul %494, %496, %cst_114 {dimension_numbers = #tpu.dot_dimension_numbers<[1], [0], [0], [1], [0, 0, 1, 1], [], []>} : vector<2x128xf32>, vector<128x128xf32>, vector<2x128xf32> -> vector<2x128xf32>
    %498 = arith.addf %466, %497 : vector<2x128xf32>
    %499 = vector.extract_strided_slice %268 {offsets = [7, 0, 0], sizes = [1, 2, 384], strides = [1, 1, 1]} : vector<8x2x384xf32> to vector<1x2x384xf32>
    %500 = vector.shape_cast %499 : vector<1x2x384xf32> to vector<2x384xf32>
    %cst_115 = arith.constant dense<0.000000e+00> : vector<2x384xf32>
    %501 = tpu.matmul %494, %269, %cst_115 {dimension_numbers = #tpu.dot_dimension_numbers<[1], [0], [0], [1], [0, 0, 1, 1], [], []>} : vector<2x128xf32>, vector<128x384xf32>, vector<2x384xf32> -> vector<2x384xf32>
    %502 = arith.addf %501, %272 : vector<2x384xf32>
    %503 = vector.extract_strided_slice %500 {offsets = [0, 0], sizes = [2, 128], strides = [1, 1]} : vector<2x384xf32> to vector<2x128xf32>
    %504 = vector.extract_strided_slice %502 {offsets = [0, 0], sizes = [2, 128], strides = [1, 1]} : vector<2x384xf32> to vector<2x128xf32>
    %505 = arith.addf %503, %504 : vector<2x128xf32>
    %506 = arith.negf %505 : vector<2x128xf32>
    %507 = math.exp %506 : vector<2x128xf32>
    %cst_116 = arith.constant 1.000000e+00 : f32
    %508 = vector.broadcast %cst_116 : f32 to vector<2x128xf32>
    %509 = arith.addf %508, %507 : vector<2x128xf32>
    %510 = arith.divf %508, %509 : vector<2x128xf32>
    %511 = vector.extract_strided_slice %500 {offsets = [0, 128], sizes = [2, 128], strides = [1, 1]} : vector<2x384xf32> to vector<2x128xf32>
    %512 = vector.extract_strided_slice %502 {offsets = [0, 128], sizes = [2, 128], strides = [1, 1]} : vector<2x384xf32> to vector<2x128xf32>
    %513 = arith.addf %511, %512 : vector<2x128xf32>
    %514 = arith.negf %513 : vector<2x128xf32>
    %515 = math.exp %514 : vector<2x128xf32>
    %cst_117 = arith.constant 1.000000e+00 : f32
    %516 = vector.broadcast %cst_117 : f32 to vector<2x128xf32>
    %517 = arith.addf %516, %515 : vector<2x128xf32>
    %518 = arith.divf %516, %517 : vector<2x128xf32>
    %519 = vector.extract_strided_slice %500 {offsets = [0, 256], sizes = [2, 128], strides = [1, 1]} : vector<2x384xf32> to vector<2x128xf32>
    %520 = vector.extract_strided_slice %502 {offsets = [0, 256], sizes = [2, 128], strides = [1, 1]} : vector<2x384xf32> to vector<2x128xf32>
    %521 = arith.mulf %510, %520 : vector<2x128xf32>
    %522 = arith.addf %519, %521 : vector<2x128xf32>
    %523 = math.tanh %522 : vector<2x128xf32>
    %524 = arith.subf %494, %523 : vector<2x128xf32>
    %525 = arith.mulf %518, %524 : vector<2x128xf32>
    %526 = arith.addf %523, %525 : vector<2x128xf32>
    %c7_118 = arith.constant 7 : index
    %c0_119 = arith.constant 0 : index
    %c0_120 = arith.constant 0 : index
    %527 = vector.load %arg9[%c7_118, %c0_119, %c0_120] : memref<8x128x128xf32, #tpu.memory_space<vmem>>, vector<1x128x128xf32>
    %528 = vector.shape_cast %527 : vector<1x128x128xf32> to vector<128x128xf32>
    %cst_121 = arith.constant dense<0.000000e+00> : vector<2x128xf32>
    %529 = tpu.matmul %526, %528, %cst_121 {dimension_numbers = #tpu.dot_dimension_numbers<[1], [0], [0], [1], [0, 0, 1, 1], [], []>} : vector<2x128xf32>, vector<128x128xf32>, vector<2x128xf32> -> vector<2x128xf32>
    %530 = arith.addf %498, %529 : vector<2x128xf32>
    %c0_122 = arith.constant 0 : index
    %c0_123 = arith.constant 0 : index
    %531 = vector.load %arg10[%c0_122, %c0_123] : memref<1x128xf32, #tpu.memory_space<vmem>>, vector<1x128xf32>
    %532 = vector.broadcast %531 : vector<1x128xf32> to vector<2x128xf32>
    %533 = arith.addf %530, %532 : vector<2x128xf32>
    %c0_124 = arith.constant 0 : index
    %c0_125 = arith.constant 0 : index
    %534 = vector.load %arg11[%c0_124, %c0_125] : memref<2x128xf32, #tpu.memory_space<vmem>>, vector<2x128xf32>
    tpu.vector_store %arg11[%c0_124, %c0_125], %533 {strides = array<i32>} : memref<2x128xf32, #tpu.memory_space<vmem>>, vector<2x128xf32>,
    return
  }
}

</mosaic_0001>

<llo_original>
// kernel: tpu_custom_call.1
$region0: #{tpu_custom_call.1}
  #allocation0 [shape = 'u32[]', space=smem, size = 0x4, offset = 0x4, fixed_abs, tag = 'smem constant byte address 0x4 - core index']
  #allocation1 [shape = 'u32[144,128]{1,0:T(1,128)}', space=vmem, size = 0x12000, scoped, tag = 'internal scratch']
  #allocation2 [shape = 'f32[8,2,128]{2,1,0:T(2,128)}', space=vmem, size = 0x2000, scoped, tag = 'scratch operand']
  %s0 = inlined_call_operand.vmem [shape: f32[8,2,4], index: 0, kind: input, shape index: {}]
  %s1 = inlined_call_operand.vmem [shape: f32[4,384], index: 1, kind: input, shape index: {}]
  %s2 = inlined_call_operand.hbm [shape: f32[128,384], index: 2, kind: input, shape index: {}]
  %s3 = inlined_call_operand.vmem [shape: f32[1,384], index: 3, kind: input, shape index: {}]
  %s4 = inlined_call_operand.vmem [shape: f32[1,384], index: 4, kind: input, shape index: {}]
  %s5 = inlined_call_operand.hbm [shape: f32[128,384], index: 5, kind: input, shape index: {}]
  %s6 = inlined_call_operand.hbm [shape: f32[128,384], index: 6, kind: input, shape index: {}]
  %s7 = inlined_call_operand.vmem [shape: f32[1,384], index: 7, kind: input, shape index: {}]
  %s8 = inlined_call_operand.vmem [shape: f32[1,384], index: 8, kind: input, shape index: {}]
  %s9 = inlined_call_operand.hbm [shape: f32[8,128,128], index: 9, kind: input, shape index: {}]
  %s10 = inlined_call_operand.vmem [shape: f32[1,128], index: 10, kind: input, shape index: {}]
  %s11 = inlined_call_operand.hbm [shape: f32[2,128], index: 11, kind: output, shape index: {}]
  %s12 = sld [smem:[#allocation0]]
  $region70: #{tpu_custom_call.1} parent=0
    _
  %s14 = ssub.s32 1, %s12
  %s15 = scalar_select 0, %s14, %s12
  $region1: #{tpu_custom_call.1} parent=0
    #allocation3 [shape = 'u8[196608]{0}', space=vmem, size = 0x30000, scoped, tag = 'input window, operand 2, single buffered']
    #allocation4 [shape = 's32[1]{0}', space=sflag, size = 0x4, scoped, tag = 'scoped memory for tpu_custom_call.1']
    #allocation5 [shape = 's32[1]{0}', space=sflag, size = 0x4, scoped, tag = 'scoped memory for tpu_custom_call.1']
    #allocation6 [shape = 'u8[196608]{0}', space=vmem, size = 0x30000, scoped, tag = 'input window, operand 5, single buffered']
    #allocation7 [shape = 's32[1]{0}', space=sflag, size = 0x4, scoped, tag = 'scoped memory for tpu_custom_call.1']
    #allocation8 [shape = 'u8[196608]{0}', space=vmem, size = 0x30000, scoped, tag = 'input window, operand 6, single buffered']
    #allocation9 [shape = 'u8[524288]{0}', space=vmem, size = 0x80000, scoped, tag = 'input window, operand 9, single buffered']
    #allocation10 [shape = 's32[1]{0}', space=sflag, size = 0x4, scoped, tag = 'scoped memory for tpu_custom_call.1']
    #allocation11 [shape = 'u8[1024]{0}', space=vmem, size = 0x400, scoped, tag = 'output window, operand 0, single buffered']
    %16 = vsyncpa [#allocation4], 0
    %17 = vsyncpa [#allocation7], 0
    %18 = vsyncpa [#allocation10], 0
    %19 = vsyncpa [#allocation5], 0
    // Predicated region
    $region2: #{tpu_custom_call.1} parent=1 // pred_check
      _
    $region3: #{tpu_custom_call.1} parent=1 // pred_check_branch
      %21 = sbr.rel (0) target = $region5
    $region4: #{tpu_custom_call.1} parent=1 // pred_region
      _
    $region5: #{tpu_custom_call.1} parent=1 // pred_fallthru
      _
    // Predicated region
    $region6: #{tpu_custom_call.1} parent=1 // pred_check
      _
    $region7: #{tpu_custom_call.1} parent=1 // pred_check_branch
      %23 = sbr.rel (0) target = $region9
    $region8: #{tpu_custom_call.1} parent=1 // pred_region
      _
    $region9: #{tpu_custom_call.1} parent=1 // pred_fallthru
      _
    // Predicated region
    $region10: #{tpu_custom_call.1} parent=1 // pred_check
      _
    $region11: #{tpu_custom_call.1} parent=1 // pred_check_branch
      %25 = sbr.rel (0) target = $region13
    $region12: #{tpu_custom_call.1} parent=1 // pred_region
      %s27 = ssub.s32 6144, 6144
      %28 = vsyncadd [#allocation4], %s27
      %s29 = sshll.u32 [#allocation3], 4
      %s30 = int_to_ptr.vmem [resolvable:$true] %s29
      %35 = dma.hbm_to_vmem [thread:$0]  %s2, 6144, %s30, [#allocation4], 384, 384, 24
    $region13: #{tpu_custom_call.1} parent=1 // pred_fallthru
      _
    // Predicated region
    $region14: #{tpu_custom_call.1} parent=1 // pred_check
      _
    $region15: #{tpu_custom_call.1} parent=1 // pred_check_branch
      %37 = sbr.rel (0) target = $region17
    $region16: #{tpu_custom_call.1} parent=1 // pred_region
      _
    $region17: #{tpu_custom_call.1} parent=1 // pred_fallthru
      _
    // Predicated region
    $region18: #{tpu_custom_call.1} parent=1 // pred_check
      _
    $region19: #{tpu_custom_call.1} parent=1 // pred_check_branch
      %39 = sbr.rel (0) target = $region21
    $region20: #{tpu_custom_call.1} parent=1 // pred_region
      _
    $region21: #{tpu_custom_call.1} parent=1 // pred_fallthru
      _
    // Predicated region
    $region22: #{tpu_custom_call.1} parent=1 // pred_check
      _
    $region23: #{tpu_custom_call.1} parent=1 // pred_check_branch
      %41 = sbr.rel (0) target = $region25
    $region24: #{tpu_custom_call.1} parent=1 // pred_region
      %s43 = ssub.s32 6144, 6144
      %44 = vsyncadd [#allocation7], %s43
      %s45 = sshll.u32 [#allocation6], 4
      %s46 = int_to_ptr.vmem [resolvable:$true] %s45
      %51 = dma.hbm_to_vmem [thread:$0]  %s5, 6144, %s46, [#allocation7], 384, 384, 24
    $region25: #{tpu_custom_call.1} parent=1 // pred_fallthru
      _
    // Predicated region
    $region26: #{tpu_custom_call.1} parent=1 // pred_check
      _
    $region27: #{tpu_custom_call.1} parent=1 // pred_check_branch
      %53 = sbr.rel (0) target = $region29
    $region28: #{tpu_custom_call.1} parent=1 // pred_region
      %s55 = ssub.s32 6144, 6144
      %56 = vsyncadd [#allocation7], %s55
      %s57 = sshll.u32 [#allocation8], 4
      %s58 = int_to_ptr.vmem [resolvable:$true] %s57
      %63 = dma.hbm_to_vmem [thread:$0]  %s6, 6144, %s58, [#allocation7], 384, 384, 24
    $region29: #{tpu_custom_call.1} parent=1 // pred_fallthru
      _
    // Predicated region
    $region30: #{tpu_custom_call.1} parent=1 // pred_check
      _
    $region31: #{tpu_custom_call.1} parent=1 // pred_check_branch
      %65 = sbr.rel (0) target = $region33
    $region32: #{tpu_custom_call.1} parent=1 // pred_region
      _
    $region33: #{tpu_custom_call.1} parent=1 // pred_fallthru
      _
    // Predicated region
    $region34: #{tpu_custom_call.1} parent=1 // pred_check
      _
    $region35: #{tpu_custom_call.1} parent=1 // pred_check_branch
      %67 = sbr.rel (0) target = $region37
    $region36: #{tpu_custom_call.1} parent=1 // pred_region
      _
    $region37: #{tpu_custom_call.1} parent=1 // pred_fallthru
      _
    // Predicated region
    $region38: #{tpu_custom_call.1} parent=1 // pred_check
      _
    $region39: #{tpu_custom_call.1} parent=1 // pred_check_branch
      %69 = sbr.rel (0) target = $region41
    $region40: #{tpu_custom_call.1} parent=1 // pred_region
      %s71 = ssub.s32 16384, 16384
      %72 = vsyncadd [#allocation10], %s71
      %s73 = sshll.u32 [#allocation9], 4
      %s74 = int_to_ptr.vmem [resolvable:$true] %s73
      %79 = dma.hbm_to_vmem [thread:$0]  %s9, 16384, %s74, [#allocation10], 128, 128, 8
    $region41: #{tpu_custom_call.1} parent=1 // pred_fallthru
      _
    // Predicated region
    $region42: #{tpu_custom_call.1} parent=1 // pred_check
      _
    $region43: #{tpu_custom_call.1} parent=1 // pred_check_branch
      %81 = sbr.rel (0) target = $region45
    $region44: #{tpu_custom_call.1} parent=1 // pred_region
      _
    $region45: #{tpu_custom_call.1} parent=1 // pred_fallthru
      _
    // Predicated region
    $region46: #{tpu_custom_call.1} parent=1 // pred_check
      _
    $region47: #{tpu_custom_call.1} parent=1 // pred_check_branch
      %83 = sbr.rel (0) target = $region49
    $region48: #{tpu_custom_call.1} parent=1 // pred_region
      %84 = dma.done [#allocation4], 6144
    $region49: #{tpu_custom_call.1} parent=1 // pred_fallthru
      _
    // Predicated region
    $region50: #{tpu_custom_call.1} parent=1 // pred_check
      _
    $region51: #{tpu_custom_call.1} parent=1 // pred_check_branch
      %86 = sbr.rel (0) target = $region53
    $region52: #{tpu_custom_call.1} parent=1 // pred_region
      %87 = dma.done [#allocation7], 6144
    $region53: #{tpu_custom_call.1} parent=1 // pred_fallthru
      _
    // Predicated region
    $region54: #{tpu_custom_call.1} parent=1 // pred_check
      _
    $region55: #{tpu_custom_call.1} parent=1 // pred_check_branch
      %89 = sbr.rel (0) target = $region57
    $region56: #{tpu_custom_call.1} parent=1 // pred_region
      %90 = dma.done [#allocation7], 6144
    $region57: #{tpu_custom_call.1} parent=1 // pred_fallthru
      _
    // Predicated region
    $region58: #{tpu_custom_call.1} parent=1 // pred_check
      _
    $region59: #{tpu_custom_call.1} parent=1 // pred_check_branch
      %92 = sbr.rel (0) target = $region61
    $region60: #{tpu_custom_call.1} parent=1 // pred_region
      %93 = dma.done [#allocation10], 16384
    $region61: #{tpu_custom_call.1} parent=1 // pred_fallthru
      _
    %v94 = vld [vmem:[%s0] sm:$0x3]
    %v95 = vld [vmem:[%s0 + $0x2] sm:$0x3]
    %v96 = vld [vmem:[%s0 + $0x4] sm:$0x3]
    %v97 = vld [vmem:[%s0 + $0x6] sm:$0x3]
    %v98 = vld [vmem:[%s0 + $0x8] sm:$0x3]
    %v99 = vld [vmem:[%s0 + $0xa] sm:$0x3]
    %v100 = vld [vmem:[%s0 + $0xc] sm:$0x3]
    %v101 = vld [vmem:[%s0 + $0xe] sm:$0x3]
    %v102 = vld [vmem:[%s1] sm:$0xff]
    %v103 = vld [vmem:[%s1 + $0x8] sm:$0xf]
    %v104 = vld [vmem:[%s3] sm:$0x7]
    %v106 = vlaneseq
    %v107 = vshrl.u32 %v106, 7
    %v108 = vsub.s32 0, %v107
    %v109 = vrot.slane %v104, %v108
    %v110 = vlaneseq
    %v111 = vshrl.u32 %v110, 7
    %v112 = vsub.s32 1, %v111
    %v113 = vrot.slane %v104, %v112
    %v114 = vlaneseq
    %v115 = vshrl.u32 %v114, 7
    %v116 = vsub.s32 2, %v115
    %v117 = vrot.slane %v104, %v116
    %v129 = vcombine.low %v94, %v95
    %v130 = vcombine.low %v96, %v97
    %v132 = vunpack.c.l.s4 1983009808
    %v133 = vunpack.c.0.s8 %v132
    %v134 = vlaneseq
    %v135 = vshrl.u32 %v134, 7
    %v136 = vsub.s32 %v133, %v135
    %v137 = vrot.slane %v129, %v136
    %v139 = vunpack.c.l.s4 1983009808
    %v140 = vunpack.c.0.s8 %v139
    %v141 = vlaneseq
    %v142 = vshrl.u32 %v141, 7
    %v143 = vsub.s32 %v140, %v142
    %v144 = vrot.slane %v130, %v143
    %v145 = vcombine.low %v137, %v144
    %v146 = vcombine.low %v98, %v99
    %v147 = vcombine.low %v100, %v101
    %v149 = vunpack.c.l.s4 1983009808
    %v150 = vunpack.c.0.s8 %v149
    %v151 = vlaneseq
    %v152 = vshrl.u32 %v151, 7
    %v153 = vsub.s32 %v150, %v152
    %v154 = vrot.slane %v146, %v153
    %v156 = vunpack.c.l.s4 1983009808
    %v157 = vunpack.c.0.s8 %v156
    %v158 = vlaneseq
    %v159 = vshrl.u32 %v158, 7
    %v160 = vsub.s32 %v157, %v159
    %v161 = vrot.slane %v147, %v160
    %v162 = vcombine.low %v154, %v161
    %v165 = vcombine.high %v102, %v102
    %vm166 = vcmask 31744
    %v167 = vsel %vm166, %v145, 0
    %v169 = vsel %vm166, %v162, 0
    %vm171 = vcmask 1043456
    %v172 = vsel %vm171, %v102, 0
    %v174 = vsel %vm171, %v165, 0
    %v176 = vsel %vm171, %v103, 0
    %178 = vmatprep.subr.mxu0 %v174
    %179 = vmatpush1.msra.mxu0 %v172
    %180 = vmatprep.subr.mxu0 0.0
    %181 = vmatpush1.msra.mxu0 0.0
    %182 = vmatprep.subr.mxu0 0.0
    %183 = vmatpush1.msra.mxu0 0.0
    %184 = vmatprep.subr.mxu0 0.0
    %185 = vmatpush1.msra.mxu0 0.0
    %186 = vmatprep.subr.mxu0 0.0
    %187 = vmatpush1.msra.mxu0 0.0
    %188 = vmatprep.subr.mxu0 0.0
    %189 = vmatpush1.msra.mxu0 0.0
    %190 = vmatprep.subr.mxu0 0.0
    %191 = vmatpush1.msra.mxu0 0.0
    %192 = vmatprep.subr.mxu0 0.0
    %193 = vmatpush1.msra.mxu0 0.0
    %194 = vmatprep.subr.mxu0 0.0
    %195 = vmatpush1.msra.mxu0 0.0
    %196 = vmatprep.subr.mxu0 0.0
    %197 = vmatpush1.msra.mxu0 0.0
    %198 = vmatprep.subr.mxu0 0.0
    %199 = vmatpush1.msra.mxu0 0.0
    %200 = vmatprep.subr.mxu0 0.0
    %201 = vmatpush1.msra.mxu0 0.0
    %202 = vmatprep.subr.mxu0 0.0
    %203 = vmatpush1.msra.mxu0 0.0
    %204 = vmatprep.subr.mxu0 0.0
    %205 = vmatpush1.msra.mxu0 0.0
    %206 = vmatprep.subr.mxu0 0.0
    %207 = vmatpush1.msra.mxu0 0.0
    %208 = vmatprep.subr.mxu0 0.0
    %209 = vmatpush1.msra.mxu0 0.0
    %210 = vmatprep.subr.mxu0 0.0
    %211 = vmatpush1.msra.mxu0 0.0
    %212 = vmatprep.subr.mxu0 0.0
    %213 = vmatpush1.msra.mxu0 0.0
    %214 = vmatprep.subr.mxu0 0.0
    %215 = vmatpush1.msra.mxu0 0.0
    %216 = vmatprep.subr.mxu0 0.0
    %217 = vmatpush1.msra.mxu0 0.0
    %218 = vmatprep.subr.mxu0 0.0
    %219 = vmatpush1.msra.mxu0 0.0
    %220 = vmatprep.subr.mxu0 0.0
    %221 = vmatpush1.msra.mxu0 0.0
    %222 = vmatprep.subr.mxu0 0.0
    %223 = vmatpush1.msra.mxu0 0.0
    %224 = vmatprep.subr.mxu0 0.0
    %225 = vmatpush1.msra.mxu0 0.0
    %226 = vmatprep.subr.mxu0 0.0
    %227 = vmatpush1.msra.mxu0 0.0
    %228 = vmatprep.subr.mxu0 0.0
    %229 = vmatpush1.msra.mxu0 0.0
    %230 = vmatprep.subr.mxu0 0.0
    %231 = vmatpush1.msra.mxu0 0.0
    %232 = vmatprep.subr.mxu0 0.0
    %233 = vmatpush1.msra.mxu0 0.0
    %234 = vmatprep.subr.mxu0 0.0
    %235 = vmatpush1.msra.mxu0 0.0
    %236 = vmatprep.subr.mxu0 0.0
    %237 = vmatpush1.msra.mxu0 0.0
    %238 = vmatprep.subr.mxu0 0.0
    %239 = vmatpush1.msra.mxu0 0.0
    %240 = vmatprep.subr.mxu0 0.0
    %241 = vmatpush1.msra.mxu0 0.0
    %242 = vmatprep.mubr.f32.mxu0 0.0
    %243 = vmatmul.mubr.f32.gmra.mrb[0].mxu0 %v167
    %v244 = vpop.f32.mrb[0].mxu0
    %v245 = vadd.f32 %v109, %v244
    %v246 = vpop.f32.mrb[0].mxu0
    %v247 = vadd.f32 %v113, %v246
    %248 = vmatprep.mubr.f32.mxu0 0.0
    %249 = vmatmul.mubr.f32.gmra.mrb[0].mxu0 %v169
    %v250 = vpop.f32.mrb[0].mxu0
    %v251 = vadd.f32 %v109, %v250
    %v252 = vpop.f32.mrb[0].mxu0
    %v253 = vadd.f32 %v113, %v252
    %254 = vdwg.mxu0
    %255 = vmatprep.subr.mxu0 0.0
    %256 = vmatpush1.msra.mxu0 %v176
    %257 = vmatprep.subr.mxu0 0.0
    %258 = vmatpush1.msra.mxu0 0.0
    %259 = vmatprep.subr.mxu0 0.0
    %260 = vmatpush1.msra.mxu0 0.0
    %261 = vmatprep.subr.mxu0 0.0
    %262 = vmatpush1.msra.mxu0 0.0
    %263 = vmatprep.subr.mxu0 0.0
    %264 = vmatpush1.msra.mxu0 0.0
    %265 = vmatprep.subr.mxu0 0.0
    %266 = vmatpush1.msra.mxu0 0.0
    %267 = vmatprep.subr.mxu0 0.0
    %268 = vmatpush1.msra.mxu0 0.0
    %269 = vmatprep.subr.mxu0 0.0
    %270 = vmatpush1.msra.mxu0 0.0
    %271 = vmatprep.subr.mxu0 0.0
    %272 = vmatpush1.msra.mxu0 0.0
    %273 = vmatprep.subr.mxu0 0.0
    %274 = vmatpush1.msra.mxu0 0.0
    %275 = vmatprep.subr.mxu0 0.0
    %276 = vmatpush1.msra.mxu0 0.0
    %277 = vmatprep.subr.mxu0 0.0
    %278 = vmatpush1.msra.mxu0 0.0
    %279 = vmatprep.subr.mxu0 0.0
    %280 = vmatpush1.msra.mxu0 0.0
    %281 = vmatprep.subr.mxu0 0.0
    %282 = vmatpush1.msra.mxu0 0.0
    %283 = vmatprep.subr.mxu0 0.0
    %284 = vmatpush1.msra.mxu0 0.0
    %285 = vmatprep.subr.mxu0 0.0
    %286 = vmatpush1.msra.mxu0 0.0
    %287 = vmatprep.subr.mxu0 0.0
    %288 = vmatpush1.msra.mxu0 0.0
    %289 = vmatprep.subr.mxu0 0.0
    %290 = vmatpush1.msra.mxu0 0.0
    %291 = vmatprep.subr.mxu0 0.0
    %292 = vmatpush1.msra.mxu0 0.0
    %293 = vmatprep.subr.mxu0 0.0
    %294 = vmatpush1.msra.mxu0 0.0
    %295 = vmatprep.subr.mxu0 0.0
    %296 = vmatpush1.msra.mxu0 0.0
    %297 = vmatprep.subr.mxu0 0.0
    %298 = vmatpush1.msra.mxu0 0.0
    %299 = vmatprep.subr.mxu0 0.0
    %300 = vmatpush1.msra.mxu0 0.0
    %301 = vmatprep.subr.mxu0 0.0
    %302 = vmatpush1.msra.mxu0 0.0
    %303 = vmatprep.subr.mxu0 0.0
    %304 = vmatpush1.msra.mxu0 0.0
    %305 = vmatprep.subr.mxu0 0.0
    %306 = vmatpush1.msra.mxu0 0.0
    %307 = vmatprep.subr.mxu0 0.0
    %308 = vmatpush1.msra.mxu0 0.0
    %309 = vmatprep.subr.mxu0 0.0
    %310 = vmatpush1.msra.mxu0 0.0
    %311 = vmatprep.subr.mxu0 0.0
    %312 = vmatpush1.msra.mxu0 0.0
    %313 = vmatprep.subr.mxu0 0.0
    %314 = vmatpush1.msra.mxu0 0.0
    %315 = vmatprep.subr.mxu0 0.0
    %316 = vmatpush1.msra.mxu0 0.0
    %317 = vmatprep.subr.mxu0 0.0
    %318 = vmatpush1.msra.mxu0 0.0
    %319 = vmatprep.mubr.f32.mxu0 0.0
    %320 = vmatmul.mubr.f32.gmra.mrb[0].mxu0 %v167
    %v321 = vpop.f32.mrb[0].mxu0
    %v322 = vadd.f32 %v117, %v321
    %v323 = vpop.f32.mrb[0].mxu0
    %324 = vmatprep.mubr.f32.mxu0 0.0
    %325 = vmatmul.mubr.f32.gmra.mrb[0].mxu0 %v169
    %v326 = vpop.f32.mrb[0].mxu0
    %v327 = vadd.f32 %v117, %v326
    %v328 = vpop.f32.mrb[0].mxu0
    %329 = vdwg.mxu0
    %v336 = vcombine.low %v245, %v247
    %v337 = vcombine.high %v245, %v247
    %v338 = vcombine.high %v322, %v322
    %v340 = vunpack.c.l.s4 1983009808
    %v341 = vunpack.c.0.s8 %v340
    %v342 = vlaneseq
    %v343 = vshrl.u32 %v342, 7
    %v344 = vsub.s32 %v341, %v343
    %v345 = vrot.slane %v336, %v344
    %v347 = vunpack.c.l.s4 1983009808
    %v348 = vunpack.c.0.s8 %v347
    %v349 = vlaneseq
    %v350 = vshrl.u32 %v349, 7
    %v351 = vsub.s32 %v348, %v350
    %v352 = vrot.slane %v337, %v351
    %v354 = vunpack.c.l.s4 1983009808
    %v355 = vunpack.c.0.s8 %v354
    %v356 = vlaneseq
    %v357 = vshrl.u32 %v356, 7
    %v358 = vsub.s32 %v355, %v357
    %v359 = vrot.slane %v322, %v358
    %v361 = vunpack.c.l.s4 1983009808
    %v362 = vunpack.c.0.s8 %v361
    %v363 = vlaneseq
    %v364 = vshrl.u32 %v363, 7
    %v365 = vsub.s32 %v362, %v364
    %v366 = vrot.slane %v338, %v365
    %v367 = vcombine.low %v345, %v359
    %v368 = vcombine.high %v345, %v359
    %v369 = vcombine.low %v352, %v366
    %v370 = vcombine.high %v352, %v366
    %v371 = vcombine.low %v251, %v253
    %v372 = vcombine.high %v251, %v253
    %v373 = vcombine.high %v327, %v327
    %v375 = vunpack.c.l.s4 1983009808
    %v376 = vunpack.c.0.s8 %v375
    %v377 = vlaneseq
    %v378 = vshrl.u32 %v377, 7
    %v379 = vsub.s32 %v376, %v378
    %v380 = vrot.slane %v371, %v379
    %v382 = vunpack.c.l.s4 1983009808
    %v383 = vunpack.c.0.s8 %v382
    %v384 = vlaneseq
    %v385 = vshrl.u32 %v384, 7
    %v386 = vsub.s32 %v383, %v385
    %v387 = vrot.slane %v372, %v386
    %v389 = vunpack.c.l.s4 1983009808
    %v390 = vunpack.c.0.s8 %v389
    %v391 = vlaneseq
    %v392 = vshrl.u32 %v391, 7
    %v393 = vsub.s32 %v390, %v392
    %v394 = vrot.slane %v327, %v393
    %v396 = vunpack.c.l.s4 1983009808
    %v397 = vunpack.c.0.s8 %v396
    %v398 = vlaneseq
    %v399 = vshrl.u32 %v398, 7
    %v400 = vsub.s32 %v397, %v399
    %v401 = vrot.slane %v373, %v400
    %v402 = vcombine.low %v380, %v394
    %v403 = vcombine.high %v380, %v394
    %v404 = vcombine.low %v387, %v401
    %v405 = vcombine.high %v387, %v401
    %v414 = vld [vmem:[#allocation3] sm:$0xff]
    %v415 = vld [vmem:[#allocation3 + $0x8] sm:$0xff]
    %v416 = vld [vmem:[#allocation3 + $0x10] sm:$0xff]
    %v417 = vld [vmem:[#allocation3 + $0x18] sm:$0xff]
    %v418 = vld [vmem:[#allocation3 + $0x20] sm:$0xff]
    %v419 = vld [vmem:[#allocation3 + $0x28] sm:$0xff]
    %v420 = vld [vmem:[#allocation3 + $0x30] sm:$0xff]
    %v421 = vld [vmem:[#allocation3 + $0x38] sm:$0xff]
    %v422 = vld [vmem:[#allocation3 + $0x40] sm:$0xff]
    %v423 = vld [vmem:[#allocation3 + $0x48] sm:$0xff]
    %v424 = vld [vmem:[#allocation3 + $0x50] sm:$0xff]
    %v425 = vld [vmem:[#allocation3 + $0x58] sm:$0xff]
    %v426 = vld [vmem:[#allocation3 + $0x60] sm:$0xff]
    %v427 = vld [vmem:[#allocation3 + $0x68] sm:$0xff]
    %v428 = vld [vmem:[#allocation3 + $0x70] sm:$0xff]
    %v429 = vld [vmem:[#allocation3 + $0x78] sm:$0xff]
    %v430 = vld [vmem:[#allocation3 + $0x80] sm:$0xff]
    %v431 = vld [vmem:[#allocation3 + $0x88] sm:$0xff]
    %v432 = vld [vmem:[#allocation3 + $0x90] sm:$0xff]
    %v433 = vld [vmem:[#allocation3 + $0x98] sm:$0xff]
    %v434 = vld [vmem:[#allocation3 + $0xa0] sm:$0xff]
    %v435 = vld [vmem:[#allocation3 + $0xa8] sm:$0xff]
    %v436 = vld [vmem:[#allocation3 + $0xb0] sm:$0xff]
    %v437 = vld [vmem:[#allocation3 + $0xb8] sm:$0xff]
    %v438 = vld [vmem:[#allocation3 + $0xc0] sm:$0xff]
    %v439 = vld [vmem:[#allocation3 + $0xc8] sm:$0xff]
    %v440 = vld [vmem:[#allocation3 + $0xd0] sm:$0xff]
    %v441 = vld [vmem:[#allocation3 + $0xd8] sm:$0xff]
    %v442 = vld [vmem:[#allocation3 + $0xe0] sm:$0xff]
    %v443 = vld [vmem:[#allocation3 + $0xe8] sm:$0xff]
    %v444 = vld [vmem:[#allocation3 + $0xf0] sm:$0xff]
    %v445 = vld [vmem:[#allocation3 + $0xf8] sm:$0xff]
    %v446 = vld [vmem:[#allocation3 + $0x100] sm:$0xff]
    %v447 = vld [vmem:[#allocation3 + $0x108] sm:$0xff]
    %v448 = vld [vmem:[#allocation3 + $0x110] sm:$0xff]
    %v449 = vld [vmem:[#allocation3 + $0x118] sm:$0xff]
    %v450 = vld [vmem:[#allocation3 + $0x120] sm:$0xff]
    %v451 = vld [vmem:[#allocation3 + $0x128] sm:$0xff]
    %v452 = vld [vmem:[#allocation3 + $0x130] sm:$0xff]
    %v453 = vld [vmem:[#allocation3 + $0x138] sm:$0xff]
    %v454 = vld [vmem:[#allocation3 + $0x140] sm:$0xff]
    %v455 = vld [vmem:[#allocation3 + $0x148] sm:$0xff]
    %v456 = vld [vmem:[#allocation3 + $0x150] sm:$0xff]
    %v457 = vld [vmem:[#allocation3 + $0x158] sm:$0xff]
    %v458 = vld [vmem:[#allocation3 + $0x160] sm:$0xff]
    %v459 = vld [vmem:[#allocation3 + $0x168] sm:$0xff]
    %v460 = vld [vmem:[#allocation3 + $0x170] sm:$0xff]
    %v461 = vld [vmem:[#allocation3 + $0x178] sm:$0xff]
    %v462 = vld [vmem:[%s4] sm:$0x7]
    %v464 = vlaneseq
    %v465 = vshrl.u32 %v464, 7
    %v466 = vsub.s32 0, %v465
    %v467 = vrot.slane %v462, %v466
    %v468 = vlaneseq
    %v469 = vshrl.u32 %v468, 7
    %v470 = vsub.s32 1, %v469
    %v471 = vrot.slane %v462, %v470
    %v472 = vlaneseq
    %v473 = vshrl.u32 %v472, 7
    %v474 = vsub.s32 2, %v473
    %v475 = vrot.slane %v462, %v474
    %479 = vmatprep.subr.mxu0 %v415
    %480 = vmatpush1.msra.mxu0 %v414
    %481 = vmatprep.subr.mxu0 %v418
    %482 = vmatpush1.msra.mxu0 %v417
    %483 = vmatprep.subr.mxu0 %v421
    %484 = vmatpush1.msra.mxu0 %v420
    %485 = vmatprep.subr.mxu0 %v424
    %486 = vmatpush1.msra.mxu0 %v423
    %487 = vmatprep.subr.mxu0 %v427
    %488 = vmatpush1.msra.mxu0 %v426
    %489 = vmatprep.subr.mxu0 %v430
    %490 = vmatpush1.msra.mxu0 %v429
    %491 = vmatprep.subr.mxu0 %v433
    %492 = vmatpush1.msra.mxu0 %v432
    %493 = vmatprep.subr.mxu0 %v436
    %494 = vmatpush1.msra.mxu0 %v435
    %495 = vmatprep.subr.mxu0 %v439
    %496 = vmatpush1.msra.mxu0 %v438
    %497 = vmatprep.subr.mxu0 %v442
    %498 = vmatpush1.msra.mxu0 %v441
    %499 = vmatprep.subr.mxu0 %v445
    %500 = vmatpush1.msra.mxu0 %v444
    %501 = vmatprep.subr.mxu0 %v448
    %502 = vmatpush1.msra.mxu0 %v447
    %503 = vmatprep.subr.mxu0 %v451
    %504 = vmatpush1.msra.mxu0 %v450
    %505 = vmatprep.subr.mxu0 %v454
    %506 = vmatpush1.msra.mxu0 %v453
    %507 = vmatprep.subr.mxu0 %v457
    %508 = vmatpush1.msra.mxu0 %v456
    %509 = vmatprep.subr.mxu0 %v460
    %510 = vmatpush1.msra.mxu0 %v459
    %511 = vmatprep.subr.mxu0 0.0
    %512 = vmatpush1.msra.mxu0 0.0
    %513 = vmatprep.subr.mxu0 0.0
    %514 = vmatpush1.msra.mxu0 0.0
    %515 = vmatprep.subr.mxu0 0.0
    %516 = vmatpush1.msra.mxu0 0.0
    %517 = vmatprep.subr.mxu0 0.0
    %518 = vmatpush1.msra.mxu0 0.0
    %519 = vmatprep.subr.mxu0 0.0
    %520 = vmatpush1.msra.mxu0 0.0
    %521 = vmatprep.subr.mxu0 0.0
    %522 = vmatpush1.msra.mxu0 0.0
    %523 = vmatprep.subr.mxu0 0.0
    %524 = vmatpush1.msra.mxu0 0.0
    %525 = vmatprep.subr.mxu0 0.0
    %526 = vmatpush1.msra.mxu0 0.0
    %527 = vmatprep.subr.mxu0 0.0
    %528 = vmatpush1.msra.mxu0 0.0
    %529 = vmatprep.subr.mxu0 0.0
    %530 = vmatpush1.msra.mxu0 0.0
    %531 = vmatprep.subr.mxu0 0.0
    %532 = vmatpush1.msra.mxu0 0.0
    %533 = vmatprep.subr.mxu0 0.0
    %534 = vmatpush1.msra.mxu0 0.0
    %535 = vmatprep.subr.mxu0 0.0
    %536 = vmatpush1.msra.mxu0 0.0
    %537 = vmatprep.subr.mxu0 0.0
    %538 = vmatpush1.msra.mxu0 0.0
    %539 = vmatprep.subr.mxu0 0.0
    %540 = vmatpush1.msra.mxu0 0.0
    %541 = vmatprep.subr.mxu0 0.0
    %542 = vmatpush1.msra.mxu0 0.0
    %543 = vmatprep.mubr.f32.mxu0 0.0
    %544 = vmatmul.mubr.f32.gmra.mrb[0].mxu0 0.0
    %v545 = vpop.f32.mrb[0].mxu0
    %v546 = vadd.f32 %v467, %v545
    %v547 = vpop.f32.mrb[0].mxu0
    %v548 = vadd.f32 %v471, %v547
    %549 = vdwg.mxu0
    %550 = vmatprep.subr.mxu0 0.0
    %551 = vmatpush1.msra.mxu0 %v416
    %552 = vmatprep.subr.mxu0 0.0
    %553 = vmatpush1.msra.mxu0 %v419
    %554 = vmatprep.subr.mxu0 0.0
    %555 = vmatpush1.msra.mxu0 %v422
    %556 = vmatprep.subr.mxu0 0.0
    %557 = vmatpush1.msra.mxu0 %v425
    %558 = vmatprep.subr.mxu0 0.0
    %559 = vmatpush1.msra.mxu0 %v428
    %560 = vmatprep.subr.mxu0 0.0
    %561 = vmatpush1.msra.mxu0 %v431
    %562 = vmatprep.subr.mxu0 0.0
    %563 = vmatpush1.msra.mxu0 %v434
    %564 = vmatprep.subr.mxu0 0.0
    %565 = vmatpush1.msra.mxu0 %v437
    %566 = vmatprep.subr.mxu0 0.0
    %567 = vmatpush1.msra.mxu0 %v440
    %568 = vmatprep.subr.mxu0 0.0
    %569 = vmatpush1.msra.mxu0 %v443
    %570 = vmatprep.subr.mxu0 0.0
    %571 = vmatpush1.msra.mxu0 %v446
    %572 = vmatprep.subr.mxu0 0.0
    %573 = vmatpush1.msra.mxu0 %v449
    %574 = vmatprep.subr.mxu0 0.0
    %575 = vmatpush1.msra.mxu0 %v452
    %576 = vmatprep.subr.mxu0 0.0
    %577 = vmatpush1.msra.mxu0 %v455
    %578 = vmatprep.subr.mxu0 0.0
    %579 = vmatpush1.msra.mxu0 %v458
    %580 = vmatprep.subr.mxu0 0.0
    %581 = vmatpush1.msra.mxu0 %v461
    %582 = vmatprep.subr.mxu0 0.0
    %583 = vmatpush1.msra.mxu0 0.0
    %584 = vmatprep.subr.mxu0 0.0
    %585 = vmatpush1.msra.mxu0 0.0
    %586 = vmatprep.subr.mxu0 0.0
    %587 = vmatpush1.msra.mxu0 0.0
    %588 = vmatprep.subr.mxu0 0.0
    %589 = vmatpush1.msra.mxu0 0.0
    %590 = vmatprep.subr.mxu0 0.0
    %591 = vmatpush1.msra.mxu0 0.0
    %592 = vmatprep.subr.mxu0 0.0
    %593 = vmatpush1.msra.mxu0 0.0
    %594 = vmatprep.subr.mxu0 0.0
    %595 = vmatpush1.msra.mxu0 0.0
    %596 = vmatprep.subr.mxu0 0.0
    %597 = vmatpush1.msra.mxu0 0.0
    %598 = vmatprep.subr.mxu0 0.0
    %599 = vmatpush1.msra.mxu0 0.0
    %600 = vmatprep.subr.mxu0 0.0
    %601 = vmatpush1.msra.mxu0 0.0
    %602 = vmatprep.subr.mxu0 0.0
    %603 = vmatpush1.msra.mxu0 0.0
    %604 = vmatprep.subr.mxu0 0.0
    %605 = vmatpush1.msra.mxu0 0.0
    %606 = vmatprep.subr.mxu0 0.0
    %607 = vmatpush1.msra.mxu0 0.0
    %608 = vmatprep.subr.mxu0 0.0
    %609 = vmatpush1.msra.mxu0 0.0
    %610 = vmatprep.subr.mxu0 0.0
    %611 = vmatpush1.msra.mxu0 0.0
    %612 = vmatprep.subr.mxu0 0.0
    %613 = vmatpush1.msra.mxu0 0.0
    %614 = vmatprep.mubr.f32.mxu0 0.0
    %615 = vmatmul.mubr.f32.gmra.mrb[0].mxu0 0.0
    %v616 = vpop.f32.mrb[0].mxu0
    %v617 = vadd.f32 %v475, %v616
    %v618 = vpop.f32.mrb[0].mxu0
    %619 = vdwg.mxu0
    %v620 = vadd.f32 %v367, %v546
    %v621 = vxor.u32 %v620, 2147483648
    %v622 = vmul.f32 %v621, 1.442695
    %v623 = vpow.pop %v622
    %v624 = vadd.f32 %v623, 1.0
    %v625 = vrcp.pop %v624
    %v626 = vmul.f32 1.0, %v625
    %v627 = vrot.slane %v367, 2
    %v629 = vadd.f32 %v627, %v548
    %v630 = vxor.u32 %v629, 2147483648
    %v631 = vmul.f32 %v630, 1.442695
    %v632 = vpow.pop %v631
    %v633 = vadd.f32 %v632, 1.0
    %v634 = vrcp.pop %v633
    %v635 = vmul.f32 1.0, %v634
    %v636 = vmul.f32 %v626, %v617
    %v637 = vrot.slane %v367, 4
    %v639 = vadd.f32 %v637, %v636
    %v640 = vtanh.pop %v639
    %v641 = vsub.f32 0.0, %v640
    %v642 = vmul.f32 %v635, %v641
    %v643 = vadd.f32 %v640, %v642
    %644 = vst [vmem:[#allocation2] sm:$0x3] %v643
    %645 = vmatprep.subr.mxu0 %v415
    %646 = vmatpush1.msra.mxu0 %v414
    %647 = vmatprep.subr.mxu0 %v418
    %648 = vmatpush1.msra.mxu0 %v417
    %649 = vmatprep.subr.mxu0 %v421
    %650 = vmatpush1.msra.mxu0 %v420
    %651 = vmatprep.subr.mxu0 %v424
    %652 = vmatpush1.msra.mxu0 %v423
    %653 = vmatprep.subr.mxu0 %v427
    %654 = vmatpush1.msra.mxu0 %v426
    %655 = vmatprep.subr.mxu0 %v430
    %656 = vmatpush1.msra.mxu0 %v429
    %657 = vmatprep.subr.mxu0 %v433
    %658 = vmatpush1.msra.mxu0 %v432
    %659 = vmatprep.subr.mxu0 %v436
    %660 = vmatpush1.msra.mxu0 %v435
    %661 = vmatprep.subr.mxu0 %v439
    %662 = vmatpush1.msra.mxu0 %v438
    %663 = vmatprep.subr.mxu0 %v442
    %664 = vmatpush1.msra.mxu0 %v441
    %665 = vmatprep.subr.mxu0 %v445
    %666 = vmatpush1.msra.mxu0 %v444
    %667 = vmatprep.subr.mxu0 %v448
    %668 = vmatpush1.msra.mxu0 %v447
    %669 = vmatprep.subr.mxu0 %v451
    %670 = vmatpush1.msra.mxu0 %v450
    %671 = vmatprep.subr.mxu0 %v454
    %672 = vmatpush1.msra.mxu0 %v453
    %673 = vmatprep.subr.mxu0 %v457
    %674 = vmatpush1.msra.mxu0 %v456
    %675 = vmatprep.subr.mxu0 %v460
    %676 = vmatpush1.msra.mxu0 %v459
    %677 = vmatprep.subr.mxu0 0.0
    %678 = vmatpush1.msra.mxu0 0.0
    %679 = vmatprep.subr.mxu0 0.0
    %680 = vmatpush1.msra.mxu0 0.0
    %681 = vmatprep.subr.mxu0 0.0
    %682 = vmatpush1.msra.mxu0 0.0
    %683 = vmatprep.subr.mxu0 0.0
    %684 = vmatpush1.msra.mxu0 0.0
    %685 = vmatprep.subr.mxu0 0.0
    %686 = vmatpush1.msra.mxu0 0.0
    %687 = vmatprep.subr.mxu0 0.0
    %688 = vmatpush1.msra.mxu0 0.0
    %689 = vmatprep.subr.mxu0 0.0
    %690 = vmatpush1.msra.mxu0 0.0
    %691 = vmatprep.subr.mxu0 0.0
    %692 = vmatpush1.msra.mxu0 0.0
    %693 = vmatprep.subr.mxu0 0.0
    %694 = vmatpush1.msra.mxu0 0.0
    %695 = vmatprep.subr.mxu0 0.0
    %696 = vmatpush1.msra.mxu0 0.0
    %697 = vmatprep.subr.mxu0 0.0
    %698 = vmatpush1.msra.mxu0 0.0
    %699 = vmatprep.subr.mxu0 0.0
    %700 = vmatpush1.msra.mxu0 0.0
    %701 = vmatprep.subr.mxu0 0.0
    %702 = vmatpush1.msra.mxu0 0.0
    %703 = vmatprep.subr.mxu0 0.0
    %704 = vmatpush1.msra.mxu0 0.0
    %705 = vmatprep.subr.mxu0 0.0
    %706 = vmatpush1.msra.mxu0 0.0
    %707 = vmatprep.subr.mxu0 0.0
    %708 = vmatpush1.msra.mxu0 0.0
    %709 = vmatprep.mubr.f32.mxu0 0.0
    %710 = vmatmul.mubr.f32.gmra.mrb[0].mxu0 %v643
    %v711 = vpop.f32.mrb[0].mxu0
    %v712 = vadd.f32 %v467, %v711
    %v713 = vpop.f32.mrb[0].mxu0
    %v714 = vadd.f32 %v471, %v713
    %715 = vdwg.mxu0
    %716 = vmatprep.subr.mxu0 0.0
    %717 = vmatpush1.msra.mxu0 %v416
    %718 = vmatprep.subr.mxu0 0.0
    %719 = vmatpush1.msra.mxu0 %v419
    %720 = vmatprep.subr.mxu0 0.0
    %721 = vmatpush1.msra.mxu0 %v422
    %722 = vmatprep.subr.mxu0 0.0
    %723 = vmatpush1.msra.mxu0 %v425
    %724 = vmatprep.subr.mxu0 0.0
    %725 = vmatpush1.msra.mxu0 %v428
    %726 = vmatprep.subr.mxu0 0.0
    %727 = vmatpush1.msra.mxu0 %v431
    %728 = vmatprep.subr.mxu0 0.0
    %729 = vmatpush1.msra.mxu0 %v434
    %730 = vmatprep.subr.mxu0 0.0
    %731 = vmatpush1.msra.mxu0 %v437
    %732 = vmatprep.subr.mxu0 0.0
    %733 = vmatpush1.msra.mxu0 %v440
    %734 = vmatprep.subr.mxu0 0.0
    %735 = vmatpush1.msra.mxu0 %v443
    %736 = vmatprep.subr.mxu0 0.0
    %737 = vmatpush1.msra.mxu0 %v446
    %738 = vmatprep.subr.mxu0 0.0
    %739 = vmatpush1.msra.mxu0 %v449
    %740 = vmatprep.subr.mxu0 0.0
    %741 = vmatpush1.msra.mxu0 %v452
    %742 = vmatprep.subr.mxu0 0.0
    %743 = vmatpush1.msra.mxu0 %v455
    %744 = vmatprep.subr.mxu0 0.0
    %745 = vmatpush1.msra.mxu0 %v458
    %746 = vmatprep.subr.mxu0 0.0
    %747 = vmatpush1.msra.mxu0 %v461
    %748 = vmatprep.subr.mxu0 0.0
    %749 = vmatpush1.msra.mxu0 0.0
    %750 = vmatprep.subr.mxu0 0.0
    %751 = vmatpush1.msra.mxu0 0.0
    %752 = vmatprep.subr.mxu0 0.0
    %753 = vmatpush1.msra.mxu0 0.0
    %754 = vmatprep.subr.mxu0 0.0
    %755 = vmatpush1.msra.mxu0 0.0
    %756 = vmatprep.subr.mxu0 0.0
    %757 = vmatpush1.msra.mxu0 0.0
    %758 = vmatprep.subr.mxu0 0.0
    %759 = vmatpush1.msra.mxu0 0.0
    %760 = vmatprep.subr.mxu0 0.0
    %761 = vmatpush1.msra.mxu0 0.0
    %762 = vmatprep.subr.mxu0 0.0
    %763 = vmatpush1.msra.mxu0 0.0
    %764 = vmatprep.subr.mxu0 0.0
    %765 = vmatpush1.msra.mxu0 0.0
    %766 = vmatprep.subr.mxu0 0.0
    %767 = vmatpush1.msra.mxu0 0.0
    %768 = vmatprep.subr.mxu0 0.0
    %769 = vmatpush1.msra.mxu0 0.0
    %770 = vmatprep.subr.mxu0 0.0
    %771 = vmatpush1.msra.mxu0 0.0
    %772 = vmatprep.subr.mxu0 0.0
    %773 = vmatpush1.msra.mxu0 0.0
    %774 = vmatprep.subr.mxu0 0.0
    %775 = vmatpush1.msra.mxu0 0.0
    %776 = vmatprep.subr.mxu0 0.0
    %777 = vmatpush1.msra.mxu0 0.0
    %778 = vmatprep.subr.mxu0 0.0
    %779 = vmatpush1.msra.mxu0 0.0
    %780 = vmatprep.mubr.f32.mxu0 0.0
    %781 = vmatmul.mubr.f32.gmra.mrb[0].mxu0 %v643
    %v782 = vpop.f32.mrb[0].mxu0
    %v783 = vadd.f32 %v475, %v782
    %v784 = vpop.f32.mrb[0].mxu0
    %785 = vdwg.mxu0
    %v786 = vadd.f32 %v368, %v712
    %v787 = vxor.u32 %v786, 2147483648
    %v788 = vmul.f32 %v787, 1.442695
    %v789 = vpow.pop %v788
    %v790 = vadd.f32 %v789, 1.0
    %v791 = vrcp.pop %v790
    %v792 = vmul.f32 1.0, %v791
    %v793 = vrot.slane %v368, 2
    %v795 = vadd.f32 %v793, %v714
    %v796 = vxor.u32 %v795, 2147483648
    %v797 = vmul.f32 %v796, 1.442695
    %v798 = vpow.pop %v797
    %v799 = vadd.f32 %v798, 1.0
    %v800 = vrcp.pop %v799
    %v801 = vmul.f32 1.0, %v800
    %v802 = vmul.f32 %v792, %v783
    %v803 = vrot.slane %v368, 4
    %v805 = vadd.f32 %v803, %v802
    %v806 = vtanh.pop %v805
    %v807 = vsub.f32 %v643, %v806
    %v808 = vmul.f32 %v801, %v807
    %v809 = vadd.f32 %v806, %v808
    %s810 = scalar_lea.vmem [#allocation2], 2
    %811 = vst [vmem:[%s810] sm:$0x3] %v809
    %812 = vmatprep.subr.mxu0 %v415
    %813 = vmatpush1.msra.mxu0 %v414
    %814 = vmatprep.subr.mxu0 %v418
    %815 = vmatpush1.msra.mxu0 %v417
    %816 = vmatprep.subr.mxu0 %v421
    %817 = vmatpush1.msra.mxu0 %v420
    %818 = vmatprep.subr.mxu0 %v424
    %819 = vmatpush1.msra.mxu0 %v423
    %820 = vmatprep.subr.mxu0 %v427
    %821 = vmatpush1.msra.mxu0 %v426
    %822 = vmatprep.subr.mxu0 %v430
    %823 = vmatpush1.msra.mxu0 %v429
    %824 = vmatprep.subr.mxu0 %v433
    %825 = vmatpush1.msra.mxu0 %v432
    %826 = vmatprep.subr.mxu0 %v436
    %827 = vmatpush1.msra.mxu0 %v435
    %828 = vmatprep.subr.mxu0 %v439
    %829 = vmatpush1.msra.mxu0 %v438
    %830 = vmatprep.subr.mxu0 %v442
    %831 = vmatpush1.msra.mxu0 %v441
    %832 = vmatprep.subr.mxu0 %v445
    %833 = vmatpush1.msra.mxu0 %v444
    %834 = vmatprep.subr.mxu0 %v448
    %835 = vmatpush1.msra.mxu0 %v447
    %836 = vmatprep.subr.mxu0 %v451
    %837 = vmatpush1.msra.mxu0 %v450
    %838 = vmatprep.subr.mxu0 %v454
    %839 = vmatpush1.msra.mxu0 %v453
    %840 = vmatprep.subr.mxu0 %v457
    %841 = vmatpush1.msra.mxu0 %v456
    %842 = vmatprep.subr.mxu0 %v460
    %843 = vmatpush1.msra.mxu0 %v459
    %844 = vmatprep.subr.mxu0 0.0
    %845 = vmatpush1.msra.mxu0 0.0
    %846 = vmatprep.subr.mxu0 0.0
    %847 = vmatpush1.msra.mxu0 0.0
    %848 = vmatprep.subr.mxu0 0.0
    %849 = vmatpush1.msra.mxu0 0.0
    %850 = vmatprep.subr.mxu0 0.0
    %851 = vmatpush1.msra.mxu0 0.0
    %852 = vmatprep.subr.mxu0 0.0
    %853 = vmatpush1.msra.mxu0 0.0
    %854 = vmatprep.subr.mxu0 0.0
    %855 = vmatpush1.msra.mxu0 0.0
    %856 = vmatprep.subr.mxu0 0.0
    %857 = vmatpush1.msra.mxu0 0.0
    %858 = vmatprep.subr.mxu0 0.0
    %859 = vmatpush1.msra.mxu0 0.0
    %860 = vmatprep.subr.mxu0 0.0
    %861 = vmatpush1.msra.mxu0 0.0
    %862 = vmatprep.subr.mxu0 0.0
    %863 = vmatpush1.msra.mxu0 0.0
    %864 = vmatprep.subr.mxu0 0.0
    %865 = vmatpush1.msra.mxu0 0.0
    %866 = vmatprep.subr.mxu0 0.0
    %867 = vmatpush1.msra.mxu0 0.0
    %868 = vmatprep.subr.mxu0 0.0
    %869 = vmatpush1.msra.mxu0 0.0
    %870 = vmatprep.subr.mxu0 0.0
    %871 = vmatpush1.msra.mxu0 0.0
    %872 = vmatprep.subr.mxu0 0.0
    %873 = vmatpush1.msra.mxu0 0.0
    %874 = vmatprep.subr.mxu0 0.0
    %875 = vmatpush1.msra.mxu0 0.0
    %876 = vmatprep.mubr.f32.mxu0 0.0
    %877 = vmatmul.mubr.f32.gmra.mrb[0].mxu0 %v809
    %v878 = vpop.f32.mrb[0].mxu0
    %v879 = vadd.f32 %v467, %v878
    %v880 = vpop.f32.mrb[0].mxu0
    %v881 = vadd.f32 %v471, %v880
    %882 = vdwg.mxu0
    %883 = vmatprep.subr.mxu0 0.0
    %884 = vmatpush1.msra.mxu0 %v416
    %885 = vmatprep.subr.mxu0 0.0
    %886 = vmatpush1.msra.mxu0 %v419
    %887 = vmatprep.subr.mxu0 0.0
    %888 = vmatpush1.msra.mxu0 %v422
    %889 = vmatprep.subr.mxu0 0.0
    %890 = vmatpush1.msra.mxu0 %v425
    %891 = vmatprep.subr.mxu0 0.0
    %892 = vmatpush1.msra.mxu0 %v428
    %893 = vmatprep.subr.mxu0 0.0
    %894 = vmatpush1.msra.mxu0 %v431
    %895 = vmatprep.subr.mxu0 0.0
    %896 = vmatpush1.msra.mxu0 %v434
    %897 = vmatprep.subr.mxu0 0.0
    %898 = vmatpush1.msra.mxu0 %v437
    %899 = vmatprep.subr.mxu0 0.0
    %900 = vmatpush1.msra.mxu0 %v440
    %901 = vmatprep.subr.mxu0 0.0
    %902 = vmatpush1.msra.mxu0 %v443
    %903 = vmatprep.subr.mxu0 0.0
    %904 = vmatpush1.msra.mxu0 %v446
    %905 = vmatprep.subr.mxu0 0.0
    %906 = vmatpush1.msra.mxu0 %v449
    %907 = vmatprep.subr.mxu0 0.0
    %908 = vmatpush1.msra.mxu0 %v452
    %909 = vmatprep.subr.mxu0 0.0
    %910 = vmatpush1.msra.mxu0 %v455
    %911 = vmatprep.subr.mxu0 0.0
    %912 = vmatpush1.msra.mxu0 %v458
    %913 = vmatprep.subr.mxu0 0.0
    %914 = vmatpush1.msra.mxu0 %v461
    %915 = vmatprep.subr.mxu0 0.0
    %916 = vmatpush1.msra.mxu0 0.0
    %917 = vmatprep.subr.mxu0 0.0
    %918 = vmatpush1.msra.mxu0 0.0
    %919 = vmatprep.subr.mxu0 0.0
    %920 = vmatpush1.msra.mxu0 0.0
    %921 = vmatprep.subr.mxu0 0.0
    %922 = vmatpush1.msra.mxu0 0.0
    %923 = vmatprep.subr.mxu0 0.0
    %924 = vmatpush1.msra.mxu0 0.0
    %925 = vmatprep.subr.mxu0 0.0
    %926 = vmatpush1.msra.mxu0 0.0
    %927 = vmatprep.subr.mxu0 0.0
    %928 = vmatpush1.msra.mxu0 0.0
    %929 = vmatprep.subr.mxu0 0.0
    %930 = vmatpush1.msra.mxu0 0.0
    %931 = vmatprep.subr.mxu0 0.0
    %932 = vmatpush1.msra.mxu0 0.0
    %933 = vmatprep.subr.mxu0 0.0
    %934 = vmatpush1.msra.mxu0 0.0
    %935 = vmatprep.subr.mxu0 0.0
    %936 = vmatpush1.msra.mxu0 0.0
    %937 = vmatprep.subr.mxu0 0.0
    %938 = vmatpush1.msra.mxu0 0.0
    %939 = vmatprep.subr.mxu0 0.0
    %940 = vmatpush1.msra.mxu0 0.0
    %941 = vmatprep.subr.mxu0 0.0
    %942 = vmatpush1.msra.mxu0 0.0
    %943 = vmatprep.subr.mxu0 0.0
    %944 = vmatpush1.msra.mxu0 0.0
    %945 = vmatprep.subr.mxu0 0.0
    %946 = vmatpush1.msra.mxu0 0.0
    %947 = vmatprep.mubr.f32.mxu0 0.0
    %948 = vmatmul.mubr.f32.gmra.mrb[0].mxu0 %v809
    %v949 = vpop.f32.mrb[0].mxu0
    %v950 = vadd.f32 %v475, %v949
    %v951 = vpop.f32.mrb[0].mxu0
    %952 = vdwg.mxu0
    %v953 = vadd.f32 %v369, %v879
    %v954 = vxor.u32 %v953, 2147483648
    %v955 = vmul.f32 %v954, 1.442695
    %v956 = vpow.pop %v955
    %v957 = vadd.f32 %v956, 1.0
    %v958 = vrcp.pop %v957
    %v959 = vmul.f32 1.0, %v958
    %v960 = vrot.slane %v369, 2
    %v962 = vadd.f32 %v960, %v881
    %v963 = vxor.u32 %v962, 2147483648
    %v964 = vmul.f32 %v963, 1.442695
    %v965 = vpow.pop %v964
    %v966 = vadd.f32 %v965, 1.0
    %v967 = vrcp.pop %v966
    %v968 = vmul.f32 1.0, %v967
    %v969 = vmul.f32 %v959, %v950
    %v970 = vrot.slane %v369, 4
    %v972 = vadd.f32 %v970, %v969
    %v973 = vtanh.pop %v972
    %v974 = vsub.f32 %v809, %v973
    %v975 = vmul.f32 %v968, %v974
    %v976 = vadd.f32 %v973, %v975
    %s977 = scalar_lea.vmem [#allocation2], 4
    %978 = vst [vmem:[%s977] sm:$0x3] %v976
    %979 = vmatprep.subr.mxu0 %v415
    %980 = vmatpush1.msra.mxu0 %v414
    %981 = vmatprep.subr.mxu0 %v418
    %982 = vmatpush1.msra.mxu0 %v417
    %983 = vmatprep.subr.mxu0 %v421
    %984 = vmatpush1.msra.mxu0 %v420
    %985 = vmatprep.subr.mxu0 %v424
    %986 = vmatpush1.msra.mxu0 %v423
    %987 = vmatprep.subr.mxu0 %v427
    %988 = vmatpush1.msra.mxu0 %v426
    %989 = vmatprep.subr.mxu0 %v430
    %990 = vmatpush1.msra.mxu0 %v429
    %991 = vmatprep.subr.mxu0 %v433
    %992 = vmatpush1.msra.mxu0 %v432
    %993 = vmatprep.subr.mxu0 %v436
    %994 = vmatpush1.msra.mxu0 %v435
    %995 = vmatprep.subr.mxu0 %v439
    %996 = vmatpush1.msra.mxu0 %v438
    %997 = vmatprep.subr.mxu0 %v442
    %998 = vmatpush1.msra.mxu0 %v441
    %999 = vmatprep.subr.mxu0 %v445
    %1000 = vmatpush1.msra.mxu0 %v444
    %1001 = vmatprep.subr.mxu0 %v448
    %1002 = vmatpush1.msra.mxu0 %v447
    %1003 = vmatprep.subr.mxu0 %v451
    %1004 = vmatpush1.msra.mxu0 %v450
    %1005 = vmatprep.subr.mxu0 %v454
    %1006 = vmatpush1.msra.mxu0 %v453
    %1007 = vmatprep.subr.mxu0 %v457
    %1008 = vmatpush1.msra.mxu0 %v456
    %1009 = vmatprep.subr.mxu0 %v460
    %1010 = vmatpush1.msra.mxu0 %v459
    %1011 = vmatprep.subr.mxu0 0.0
    %1012 = vmatpush1.msra.mxu0 0.0
    %1013 = vmatprep.subr.mxu0 0.0
    %1014 = vmatpush1.msra.mxu0 0.0
    %1015 = vmatprep.subr.mxu0 0.0
    %1016 = vmatpush1.msra.mxu0 0.0
    %1017 = vmatprep.subr.mxu0 0.0
    %1018 = vmatpush1.msra.mxu0 0.0
    %1019 = vmatprep.subr.mxu0 0.0
    %1020 = vmatpush1.msra.mxu0 0.0
    %1021 = vmatprep.subr.mxu0 0.0
    %1022 = vmatpush1.msra.mxu0 0.0
    %1023 = vmatprep.subr.mxu0 0.0
    %1024 = vmatpush1.msra.mxu0 0.0
    %1025 = vmatprep.subr.mxu0 0.0
    %1026 = vmatpush1.msra.mxu0 0.0
    %1027 = vmatprep.subr.mxu0 0.0
    %1028 = vmatpush1.msra.mxu0 0.0
    %1029 = vmatprep.subr.mxu0 0.0
    %1030 = vmatpush1.msra.mxu0 0.0
    %1031 = vmatprep.subr.mxu0 0.0
    %1032 = vmatpush1.msra.mxu0 0.0
    %1033 = vmatprep.subr.mxu0 0.0
    %1034 = vmatpush1.msra.mxu0 0.0
    %1035 = vmatprep.subr.mxu0 0.0
    %1036 = vmatpush1.msra.mxu0 0.0
    %1037 = vmatprep.subr.mxu0 0.0
    %1038 = vmatpush1.msra.mxu0 0.0
    %1039 = vmatprep.subr.mxu0 0.0
    %1040 = vmatpush1.msra.mxu0 0.0
    %1041 = vmatprep.subr.mxu0 0.0
    %1042 = vmatpush1.msra.mxu0 0.0
    %1043 = vmatprep.mubr.f32.mxu0 0.0
    %1044 = vmatmul.mubr.f32.gmra.mrb[0].mxu0 %v976
    %v1045 = vpop.f32.mrb[0].mxu0
    %v1046 = vadd.f32 %v467, %v1045
    %v1047 = vpop.f32.mrb[0].mxu0
    %v1048 = vadd.f32 %v471, %v1047
    %1049 = vdwg.mxu0
    %1050 = vmatprep.subr.mxu0 0.0
    %1051 = vmatpush1.msra.mxu0 %v416
    %1052 = vmatprep.subr.mxu0 0.0
    %1053 = vmatpush1.msra.mxu0 %v419
    %1054 = vmatprep.subr.mxu0 0.0
    %1055 = vmatpush1.msra.mxu0 %v422
    %1056 = vmatprep.subr.mxu0 0.0
    %1057 = vmatpush1.msra.mxu0 %v425
    %1058 = vmatprep.subr.mxu0 0.0
    %1059 = vmatpush1.msra.mxu0 %v428
    %1060 = vmatprep.subr.mxu0 0.0
    %1061 = vmatpush1.msra.mxu0 %v431
    %1062 = vmatprep.subr.mxu0 0.0
    %1063 = vmatpush1.msra.mxu0 %v434
    %1064 = vmatprep.subr.mxu0 0.0
    %1065 = vmatpush1.msra.mxu0 %v437
    %1066 = vmatprep.subr.mxu0 0.0
    %1067 = vmatpush1.msra.mxu0 %v440
    %1068 = vmatprep.subr.mxu0 0.0
    %1069 = vmatpush1.msra.mxu0 %v443
    %1070 = vmatprep.subr.mxu0 0.0
    %1071 = vmatpush1.msra.mxu0 %v446
    %1072 = vmatprep.subr.mxu0 0.0
    %1073 = vmatpush1.msra.mxu0 %v449
    %1074 = vmatprep.subr.mxu0 0.0
    %1075 = vmatpush1.msra.mxu0 %v452
    %1076 = vmatprep.subr.mxu0 0.0
    %1077 = vmatpush1.msra.mxu0 %v455
    %1078 = vmatprep.subr.mxu0 0.0
    %1079 = vmatpush1.msra.mxu0 %v458
    %1080 = vmatprep.subr.mxu0 0.0
    %1081 = vmatpush1.msra.mxu0 %v461
    %1082 = vmatprep.subr.mxu0 0.0
    %1083 = vmatpush1.msra.mxu0 0.0
    %1084 = vmatprep.subr.mxu0 0.0
    %1085 = vmatpush1.msra.mxu0 0.0
    %1086 = vmatprep.subr.mxu0 0.0
    %1087 = vmatpush1.msra.mxu0 0.0
    %1088 = vmatprep.subr.mxu0 0.0
    %1089 = vmatpush1.msra.mxu0 0.0
    %1090 = vmatprep.subr.mxu0 0.0
    %1091 = vmatpush1.msra.mxu0 0.0
    %1092 = vmatprep.subr.mxu0 0.0
    %1093 = vmatpush1.msra.mxu0 0.0
    %1094 = vmatprep.subr.mxu0 0.0
    %1095 = vmatpush1.msra.mxu0 0.0
    %1096 = vmatprep.subr.mxu0 0.0
    %1097 = vmatpush1.msra.mxu0 0.0
    %1098 = vmatprep.subr.mxu0 0.0
    %1099 = vmatpush1.msra.mxu0 0.0
    %1100 = vmatprep.subr.mxu0 0.0
    %1101 = vmatpush1.msra.mxu0 0.0
    %1102 = vmatprep.subr.mxu0 0.0
    %1103 = vmatpush1.msra.mxu0 0.0
    %1104 = vmatprep.subr.mxu0 0.0
    %1105 = vmatpush1.msra.mxu0 0.0
    %1106 = vmatprep.subr.mxu0 0.0
    %1107 = vmatpush1.msra.mxu0 0.0
    %1108 = vmatprep.subr.mxu0 0.0
    %1109 = vmatpush1.msra.mxu0 0.0
    %1110 = vmatprep.subr.mxu0 0.0
    %1111 = vmatpush1.msra.mxu0 0.0
    %1112 = vmatprep.subr.mxu0 0.0
    %1113 = vmatpush1.msra.mxu0 0.0
    %1114 = vmatprep.mubr.f32.mxu0 0.0
    %1115 = vmatmul.mubr.f32.gmra.mrb[0].mxu0 %v976
    %v1116 = vpop.f32.mrb[0].mxu0
    %v1117 = vadd.f32 %v475, %v1116
    %v1118 = vpop.f32.mrb[0].mxu0
    %1119 = vdwg.mxu0
    %v1120 = vadd.f32 %v370, %v1046
    %v1121 = vxor.u32 %v1120, 2147483648
    %v1122 = vmul.f32 %v1121, 1.442695
    %v1123 = vpow.pop %v1122
    %v1124 = vadd.f32 %v1123, 1.0
    %v1125 = vrcp.pop %v1124
    %v1126 = vmul.f32 1.0, %v1125
    %v1127 = vrot.slane %v370, 2
    %v1129 = vadd.f32 %v1127, %v1048
    %v1130 = vxor.u32 %v1129, 2147483648
    %v1131 = vmul.f32 %v1130, 1.442695
    %v1132 = vpow.pop %v1131
    %v1133 = vadd.f32 %v1132, 1.0
    %v1134 = vrcp.pop %v1133
    %v1135 = vmul.f32 1.0, %v1134
    %v1136 = vmul.f32 %v1126, %v1117
    %v1137 = vrot.slane %v370, 4
    %v1139 = vadd.f32 %v1137, %v1136
    %v1140 = vtanh.pop %v1139
    %v1141 = vsub.f32 %v976, %v1140
    %v1142 = vmul.f32 %v1135, %v1141
    %v1143 = vadd.f32 %v1140, %v1142
    %s1144 = scalar_lea.vmem [#allocation2], 6
    %1145 = vst [vmem:[%s1144] sm:$0x3] %v1143
    %1146 = vmatprep.subr.mxu0 %v415
    %1147 = vmatpush1.msra.mxu0 %v414
    %1148 = vmatprep.subr.mxu0 %v418
    %1149 = vmatpush1.msra.mxu0 %v417
    %1150 = vmatprep.subr.mxu0 %v421
    %1151 = vmatpush1.msra.mxu0 %v420
    %1152 = vmatprep.subr.mxu0 %v424
    %1153 = vmatpush1.msra.mxu0 %v423
    %1154 = vmatprep.subr.mxu0 %v427
    %1155 = vmatpush1.msra.mxu0 %v426
    %1156 = vmatprep.subr.mxu0 %v430
    %1157 = vmatpush1.msra.mxu0 %v429
    %1158 = vmatprep.subr.mxu0 %v433
    %1159 = vmatpush1.msra.mxu0 %v432
    %1160 = vmatprep.subr.mxu0 %v436
    %1161 = vmatpush1.msra.mxu0 %v435
    %1162 = vmatprep.subr.mxu0 %v439
    %1163 = vmatpush1.msra.mxu0 %v438
    %1164 = vmatprep.subr.mxu0 %v442
    %1165 = vmatpush1.msra.mxu0 %v441
    %1166 = vmatprep.subr.mxu0 %v445
    %1167 = vmatpush1.msra.mxu0 %v444
    %1168 = vmatprep.subr.mxu0 %v448
    %1169 = vmatpush1.msra.mxu0 %v447
    %1170 = vmatprep.subr.mxu0 %v451
    %1171 = vmatpush1.msra.mxu0 %v450
    %1172 = vmatprep.subr.mxu0 %v454
    %1173 = vmatpush1.msra.mxu0 %v453
    %1174 = vmatprep.subr.mxu0 %v457
    %1175 = vmatpush1.msra.mxu0 %v456
    %1176 = vmatprep.subr.mxu0 %v460
    %1177 = vmatpush1.msra.mxu0 %v459
    %1178 = vmatprep.subr.mxu0 0.0
    %1179 = vmatpush1.msra.mxu0 0.0
    %1180 = vmatprep.subr.mxu0 0.0
    %1181 = vmatpush1.msra.mxu0 0.0
    %1182 = vmatprep.subr.mxu0 0.0
    %1183 = vmatpush1.msra.mxu0 0.0
    %1184 = vmatprep.subr.mxu0 0.0
    %1185 = vmatpush1.msra.mxu0 0.0
    %1186 = vmatprep.subr.mxu0 0.0
    %1187 = vmatpush1.msra.mxu0 0.0
    %1188 = vmatprep.subr.mxu0 0.0
    %1189 = vmatpush1.msra.mxu0 0.0
    %1190 = vmatprep.subr.mxu0 0.0
    %1191 = vmatpush1.msra.mxu0 0.0
    %1192 = vmatprep.subr.mxu0 0.0
    %1193 = vmatpush1.msra.mxu0 0.0
    %1194 = vmatprep.subr.mxu0 0.0
    %1195 = vmatpush1.msra.mxu0 0.0
    %1196 = vmatprep.subr.mxu0 0.0
    %1197 = vmatpush1.msra.mxu0 0.0
    %1198 = vmatprep.subr.mxu0 0.0
    %1199 = vmatpush1.msra.mxu0 0.0
    %1200 = vmatprep.subr.mxu0 0.0
    %1201 = vmatpush1.msra.mxu0 0.0
    %1202 = vmatprep.subr.mxu0 0.0
    %1203 = vmatpush1.msra.mxu0 0.0
    %1204 = vmatprep.subr.mxu0 0.0
    %1205 = vmatpush1.msra.mxu0 0.0
    %1206 = vmatprep.subr.mxu0 0.0
    %1207 = vmatpush1.msra.mxu0 0.0
    %1208 = vmatprep.subr.mxu0 0.0
    %1209 = vmatpush1.msra.mxu0 0.0
    %1210 = vmatprep.mubr.f32.mxu0 0.0
    %1211 = vmatmul.mubr.f32.gmra.mrb[0].mxu0 %v1143
    %v1212 = vpop.f32.mrb[0].mxu0
    %v1213 = vadd.f32 %v467, %v1212
    %v1214 = vpop.f32.mrb[0].mxu0
    %v1215 = vadd.f32 %v471, %v1214
    %1216 = vdwg.mxu0
    %1217 = vmatprep.subr.mxu0 0.0
    %1218 = vmatpush1.msra.mxu0 %v416
    %1219 = vmatprep.subr.mxu0 0.0
    %1220 = vmatpush1.msra.mxu0 %v419
    %1221 = vmatprep.subr.mxu0 0.0
    %1222 = vmatpush1.msra.mxu0 %v422
    %1223 = vmatprep.subr.mxu0 0.0
    %1224 = vmatpush1.msra.mxu0 %v425
    %1225 = vmatprep.subr.mxu0 0.0
    %1226 = vmatpush1.msra.mxu0 %v428
    %1227 = vmatprep.subr.mxu0 0.0
    %1228 = vmatpush1.msra.mxu0 %v431
    %1229 = vmatprep.subr.mxu0 0.0
    %1230 = vmatpush1.msra.mxu0 %v434
    %1231 = vmatprep.subr.mxu0 0.0
    %1232 = vmatpush1.msra.mxu0 %v437
    %1233 = vmatprep.subr.mxu0 0.0
    %1234 = vmatpush1.msra.mxu0 %v440
    %1235 = vmatprep.subr.mxu0 0.0
    %1236 = vmatpush1.msra.mxu0 %v443
    %1237 = vmatprep.subr.mxu0 0.0
    %1238 = vmatpush1.msra.mxu0 %v446
    %1239 = vmatprep.subr.mxu0 0.0
    %1240 = vmatpush1.msra.mxu0 %v449
    %1241 = vmatprep.subr.mxu0 0.0
    %1242 = vmatpush1.msra.mxu0 %v452
    %1243 = vmatprep.subr.mxu0 0.0
    %1244 = vmatpush1.msra.mxu0 %v455
    %1245 = vmatprep.subr.mxu0 0.0
    %1246 = vmatpush1.msra.mxu0 %v458
    %1247 = vmatprep.subr.mxu0 0.0
    %1248 = vmatpush1.msra.mxu0 %v461
    %1249 = vmatprep.subr.mxu0 0.0
    %1250 = vmatpush1.msra.mxu0 0.0
    %1251 = vmatprep.subr.mxu0 0.0
    %1252 = vmatpush1.msra.mxu0 0.0
    %1253 = vmatprep.subr.mxu0 0.0
    %1254 = vmatpush1.msra.mxu0 0.0
    %1255 = vmatprep.subr.mxu0 0.0
    %1256 = vmatpush1.msra.mxu0 0.0
    %1257 = vmatprep.subr.mxu0 0.0
    %1258 = vmatpush1.msra.mxu0 0.0
    %1259 = vmatprep.subr.mxu0 0.0
    %1260 = vmatpush1.msra.mxu0 0.0
    %1261 = vmatprep.subr.mxu0 0.0
    %1262 = vmatpush1.msra.mxu0 0.0
    %1263 = vmatprep.subr.mxu0 0.0
    %1264 = vmatpush1.msra.mxu0 0.0
    %1265 = vmatprep.subr.mxu0 0.0
    %1266 = vmatpush1.msra.mxu0 0.0
    %1267 = vmatprep.subr.mxu0 0.0
    %1268 = vmatpush1.msra.mxu0 0.0
    %1269 = vmatprep.subr.mxu0 0.0
    %1270 = vmatpush1.msra.mxu0 0.0
    %1271 = vmatprep.subr.mxu0 0.0
    %1272 = vmatpush1.msra.mxu0 0.0
    %1273 = vmatprep.subr.mxu0 0.0
    %1274 = vmatpush1.msra.mxu0 0.0
    %1275 = vmatprep.subr.mxu0 0.0
    %1276 = vmatpush1.msra.mxu0 0.0
    %1277 = vmatprep.subr.mxu0 0.0
    %1278 = vmatpush1.msra.mxu0 0.0
    %1279 = vmatprep.subr.mxu0 0.0
    %1280 = vmatpush1.msra.mxu0 0.0
    %1281 = vmatprep.mubr.f32.mxu0 0.0
    %1282 = vmatmul.mubr.f32.gmra.mrb[0].mxu0 %v1143
    %v1283 = vpop.f32.mrb[0].mxu0
    %v1284 = vadd.f32 %v475, %v1283
    %v1285 = vpop.f32.mrb[0].mxu0
    %1286 = vdwg.mxu0
    %v1287 = vadd.f32 %v402, %v1213
    %v1288 = vxor.u32 %v1287, 2147483648
    %v1289 = vmul.f32 %v1288, 1.442695
    %v1290 = vpow.pop %v1289
    %v1291 = vadd.f32 %v1290, 1.0
    %v1292 = vrcp.pop %v1291
    %v1293 = vmul.f32 1.0, %v1292
    %v1294 = vrot.slane %v402, 2
    %v1296 = vadd.f32 %v1294, %v1215
    %v1297 = vxor.u32 %v1296, 2147483648
    %v1298 = vmul.f32 %v1297, 1.442695
    %v1299 = vpow.pop %v1298
    %v1300 = vadd.f32 %v1299, 1.0
    %v1301 = vrcp.pop %v1300
    %v1302 = vmul.f32 1.0, %v1301
    %v1303 = vmul.f32 %v1293, %v1284
    %v1304 = vrot.slane %v402, 4
    %v1306 = vadd.f32 %v1304, %v1303
    %v1307 = vtanh.pop %v1306
    %v1308 = vsub.f32 %v1143, %v1307
    %v1309 = vmul.f32 %v1302, %v1308
    %v1310 = vadd.f32 %v1307, %v1309
    %s1311 = scalar_lea.vmem [#allocation2], 8
    %1312 = vst [vmem:[%s1311] sm:$0x3] %v1310
    %1313 = vmatprep.subr.mxu0 %v415
    %1314 = vmatpush1.msra.mxu0 %v414
    %1315 = vmatprep.subr.mxu0 %v418
    %1316 = vmatpush1.msra.mxu0 %v417
    %1317 = vmatprep.subr.mxu0 %v421
    %1318 = vmatpush1.msra.mxu0 %v420
    %1319 = vmatprep.subr.mxu0 %v424
    %1320 = vmatpush1.msra.mxu0 %v423
    %1321 = vmatprep.subr.mxu0 %v427
    %1322 = vmatpush1.msra.mxu0 %v426
    %1323 = vmatprep.subr.mxu0 %v430
    %1324 = vmatpush1.msra.mxu0 %v429
    %1325 = vmatprep.subr.mxu0 %v433
    %1326 = vmatpush1.msra.mxu0 %v432
    %1327 = vmatprep.subr.mxu0 %v436
    %1328 = vmatpush1.msra.mxu0 %v435
    %1329 = vmatprep.subr.mxu0 %v439
    %1330 = vmatpush1.msra.mxu0 %v438
    %1331 = vmatprep.subr.mxu0 %v442
    %1332 = vmatpush1.msra.mxu0 %v441
    %1333 = vmatprep.subr.mxu0 %v445
    %1334 = vmatpush1.msra.mxu0 %v444
    %1335 = vmatprep.subr.mxu0 %v448
    %1336 = vmatpush1.msra.mxu0 %v447
    %1337 = vmatprep.subr.mxu0 %v451
    %1338 = vmatpush1.msra.mxu0 %v450
    %1339 = vmatprep.subr.mxu0 %v454
    %1340 = vmatpush1.msra.mxu0 %v453
    %1341 = vmatprep.subr.mxu0 %v457
    %1342 = vmatpush1.msra.mxu0 %v456
    %1343 = vmatprep.subr.mxu0 %v460
    %1344 = vmatpush1.msra.mxu0 %v459
    %1345 = vmatprep.subr.mxu0 0.0
    %1346 = vmatpush1.msra.mxu0 0.0
    %1347 = vmatprep.subr.mxu0 0.0
    %1348 = vmatpush1.msra.mxu0 0.0
    %1349 = vmatprep.subr.mxu0 0.0
    %1350 = vmatpush1.msra.mxu0 0.0
    %1351 = vmatprep.subr.mxu0 0.0
    %1352 = vmatpush1.msra.mxu0 0.0
    %1353 = vmatprep.subr.mxu0 0.0
    %1354 = vmatpush1.msra.mxu0 0.0
    %1355 = vmatprep.subr.mxu0 0.0
    %1356 = vmatpush1.msra.mxu0 0.0
    %1357 = vmatprep.subr.mxu0 0.0
    %1358 = vmatpush1.msra.mxu0 0.0
    %1359 = vmatprep.subr.mxu0 0.0
    %1360 = vmatpush1.msra.mxu0 0.0
    %1361 = vmatprep.subr.mxu0 0.0
    %1362 = vmatpush1.msra.mxu0 0.0
    %1363 = vmatprep.subr.mxu0 0.0
    %1364 = vmatpush1.msra.mxu0 0.0
    %1365 = vmatprep.subr.mxu0 0.0
    %1366 = vmatpush1.msra.mxu0 0.0
    %1367 = vmatprep.subr.mxu0 0.0
    %1368 = vmatpush1.msra.mxu0 0.0
    %1369 = vmatprep.subr.mxu0 0.0
    %1370 = vmatpush1.msra.mxu0 0.0
    %1371 = vmatprep.subr.mxu0 0.0
    %1372 = vmatpush1.msra.mxu0 0.0
    %1373 = vmatprep.subr.mxu0 0.0
    %1374 = vmatpush1.msra.mxu0 0.0
    %1375 = vmatprep.subr.mxu0 0.0
    %1376 = vmatpush1.msra.mxu0 0.0
    %1377 = vmatprep.mubr.f32.mxu0 0.0
    %1378 = vmatmul.mubr.f32.gmra.mrb[0].mxu0 %v1310
    %v1379 = vpop.f32.mrb[0].mxu0
    %v1380 = vadd.f32 %v467, %v1379
    %v1381 = vpop.f32.mrb[0].mxu0
    %v1382 = vadd.f32 %v471, %v1381
    %1383 = vdwg.mxu0
    %1384 = vmatprep.subr.mxu0 0.0
    %1385 = vmatpush1.msra.mxu0 %v416
    %1386 = vmatprep.subr.mxu0 0.0
    %1387 = vmatpush1.msra.mxu0 %v419
    %1388 = vmatprep.subr.mxu0 0.0
    %1389 = vmatpush1.msra.mxu0 %v422
    %1390 = vmatprep.subr.mxu0 0.0
    %1391 = vmatpush1.msra.mxu0 %v425
    %1392 = vmatprep.subr.mxu0 0.0
    %1393 = vmatpush1.msra.mxu0 %v428
    %1394 = vmatprep.subr.mxu0 0.0
    %1395 = vmatpush1.msra.mxu0 %v431
    %1396 = vmatprep.subr.mxu0 0.0
    %1397 = vmatpush1.msra.mxu0 %v434
    %1398 = vmatprep.subr.mxu0 0.0
    %1399 = vmatpush1.msra.mxu0 %v437
    %1400 = vmatprep.subr.mxu0 0.0
    %1401 = vmatpush1.msra.mxu0 %v440
    %1402 = vmatprep.subr.mxu0 0.0
    %1403 = vmatpush1.msra.mxu0 %v443
    %1404 = vmatprep.subr.mxu0 0.0
    %1405 = vmatpush1.msra.mxu0 %v446
    %1406 = vmatprep.subr.mxu0 0.0
    %1407 = vmatpush1.msra.mxu0 %v449
    %1408 = vmatprep.subr.mxu0 0.0
    %1409 = vmatpush1.msra.mxu0 %v452
    %1410 = vmatprep.subr.mxu0 0.0
    %1411 = vmatpush1.msra.mxu0 %v455
    %1412 = vmatprep.subr.mxu0 0.0
    %1413 = vmatpush1.msra.mxu0 %v458
    %1414 = vmatprep.subr.mxu0 0.0
    %1415 = vmatpush1.msra.mxu0 %v461
    %1416 = vmatprep.subr.mxu0 0.0
    %1417 = vmatpush1.msra.mxu0 0.0
    %1418 = vmatprep.subr.mxu0 0.0
    %1419 = vmatpush1.msra.mxu0 0.0
    %1420 = vmatprep.subr.mxu0 0.0
    %1421 = vmatpush1.msra.mxu0 0.0
    %1422 = vmatprep.subr.mxu0 0.0
    %1423 = vmatpush1.msra.mxu0 0.0
    %1424 = vmatprep.subr.mxu0 0.0
    %1425 = vmatpush1.msra.mxu0 0.0
    %1426 = vmatprep.subr.mxu0 0.0
    %1427 = vmatpush1.msra.mxu0 0.0
    %1428 = vmatprep.subr.mxu0 0.0
    %1429 = vmatpush1.msra.mxu0 0.0
    %1430 = vmatprep.subr.mxu0 0.0
    %1431 = vmatpush1.msra.mxu0 0.0
    %1432 = vmatprep.subr.mxu0 0.0
    %1433 = vmatpush1.msra.mxu0 0.0
    %1434 = vmatprep.subr.mxu0 0.0
    %1435 = vmatpush1.msra.mxu0 0.0
    %1436 = vmatprep.subr.mxu0 0.0
    %1437 = vmatpush1.msra.mxu0 0.0
    %1438 = vmatprep.subr.mxu0 0.0
    %1439 = vmatpush1.msra.mxu0 0.0
    %1440 = vmatprep.subr.mxu0 0.0
    %1441 = vmatpush1.msra.mxu0 0.0
    %1442 = vmatprep.subr.mxu0 0.0
    %1443 = vmatpush1.msra.mxu0 0.0
    %1444 = vmatprep.subr.mxu0 0.0
    %1445 = vmatpush1.msra.mxu0 0.0
    %1446 = vmatprep.subr.mxu0 0.0
    %1447 = vmatpush1.msra.mxu0 0.0
    %1448 = vmatprep.mubr.f32.mxu0 0.0
    %1449 = vmatmul.mubr.f32.gmra.mrb[0].mxu0 %v1310
    %v1450 = vpop.f32.mrb[0].mxu0
    %v1451 = vadd.f32 %v475, %v1450
    %v1452 = vpop.f32.mrb[0].mxu0
    %1453 = vdwg.mxu0
    %v1454 = vadd.f32 %v403, %v1380
    %v1455 = vxor.u32 %v1454, 2147483648
    %v1456 = vmul.f32 %v1455, 1.442695
    %v1457 = vpow.pop %v1456
    %v1458 = vadd.f32 %v1457, 1.0
    %v1459 = vrcp.pop %v1458
    %v1460 = vmul.f32 1.0, %v1459
    %v1461 = vrot.slane %v403, 2
    %v1463 = vadd.f32 %v1461, %v1382
    %v1464 = vxor.u32 %v1463, 2147483648
    %v1465 = vmul.f32 %v1464, 1.442695
    %v1466 = vpow.pop %v1465
    %v1467 = vadd.f32 %v1466, 1.0
    %v1468 = vrcp.pop %v1467
    %v1469 = vmul.f32 1.0, %v1468
    %v1470 = vmul.f32 %v1460, %v1451
    %v1471 = vrot.slane %v403, 4
    %v1473 = vadd.f32 %v1471, %v1470
    %v1474 = vtanh.pop %v1473
    %v1475 = vsub.f32 %v1310, %v1474
    %v1476 = vmul.f32 %v1469, %v1475
    %v1477 = vadd.f32 %v1474, %v1476
    %s1478 = scalar_lea.vmem [#allocation2], 10
    %1479 = vst [vmem:[%s1478] sm:$0x3] %v1477
    %1480 = vmatprep.subr.mxu0 %v415
    %1481 = vmatpush1.msra.mxu0 %v414
    %1482 = vmatprep.subr.mxu0 %v418
    %1483 = vmatpush1.msra.mxu0 %v417
    %1484 = vmatprep.subr.mxu0 %v421
    %1485 = vmatpush1.msra.mxu0 %v420
    %1486 = vmatprep.subr.mxu0 %v424
    %1487 = vmatpush1.msra.mxu0 %v423
    %1488 = vmatprep.subr.mxu0 %v427
    %1489 = vmatpush1.msra.mxu0 %v426
    %1490 = vmatprep.subr.mxu0 %v430
    %1491 = vmatpush1.msra.mxu0 %v429
    %1492 = vmatprep.subr.mxu0 %v433
    %1493 = vmatpush1.msra.mxu0 %v432
    %1494 = vmatprep.subr.mxu0 %v436
    %1495 = vmatpush1.msra.mxu0 %v435
    %1496 = vmatprep.subr.mxu0 %v439
    %1497 = vmatpush1.msra.mxu0 %v438
    %1498 = vmatprep.subr.mxu0 %v442
    %1499 = vmatpush1.msra.mxu0 %v441
    %1500 = vmatprep.subr.mxu0 %v445
    %1501 = vmatpush1.msra.mxu0 %v444
    %1502 = vmatprep.subr.mxu0 %v448
    %1503 = vmatpush1.msra.mxu0 %v447
    %1504 = vmatprep.subr.mxu0 %v451
    %1505 = vmatpush1.msra.mxu0 %v450
    %1506 = vmatprep.subr.mxu0 %v454
    %1507 = vmatpush1.msra.mxu0 %v453
    %1508 = vmatprep.subr.mxu0 %v457
    %1509 = vmatpush1.msra.mxu0 %v456
    %1510 = vmatprep.subr.mxu0 %v460
    %1511 = vmatpush1.msra.mxu0 %v459
    %1512 = vmatprep.subr.mxu0 0.0
    %1513 = vmatpush1.msra.mxu0 0.0
    %1514 = vmatprep.subr.mxu0 0.0
    %1515 = vmatpush1.msra.mxu0 0.0
    %1516 = vmatprep.subr.mxu0 0.0
    %1517 = vmatpush1.msra.mxu0 0.0
    %1518 = vmatprep.subr.mxu0 0.0
    %1519 = vmatpush1.msra.mxu0 0.0
    %1520 = vmatprep.subr.mxu0 0.0
    %1521 = vmatpush1.msra.mxu0 0.0
    %1522 = vmatprep.subr.mxu0 0.0
    %1523 = vmatpush1.msra.mxu0 0.0
    %1524 = vmatprep.subr.mxu0 0.0
    %1525 = vmatpush1.msra.mxu0 0.0
    %1526 = vmatprep.subr.mxu0 0.0
    %1527 = vmatpush1.msra.mxu0 0.0
    %1528 = vmatprep.subr.mxu0 0.0
    %1529 = vmatpush1.msra.mxu0 0.0
    %1530 = vmatprep.subr.mxu0 0.0
    %1531 = vmatpush1.msra.mxu0 0.0
    %1532 = vmatprep.subr.mxu0 0.0
    %1533 = vmatpush1.msra.mxu0 0.0
    %1534 = vmatprep.subr.mxu0 0.0
    %1535 = vmatpush1.msra.mxu0 0.0
    %1536 = vmatprep.subr.mxu0 0.0
    %1537 = vmatpush1.msra.mxu0 0.0
    %1538 = vmatprep.subr.mxu0 0.0
    %1539 = vmatpush1.msra.mxu0 0.0
    %1540 = vmatprep.subr.mxu0 0.0
    %1541 = vmatpush1.msra.mxu0 0.0
    %1542 = vmatprep.subr.mxu0 0.0
    %1543 = vmatpush1.msra.mxu0 0.0
    %1544 = vmatprep.mubr.f32.mxu0 0.0
    %1545 = vmatmul.mubr.f32.gmra.mrb[0].mxu0 %v1477
    %v1546 = vpop.f32.mrb[0].mxu0
    %v1547 = vadd.f32 %v467, %v1546
    %v1548 = vpop.f32.mrb[0].mxu0
    %v1549 = vadd.f32 %v471, %v1548
    %1550 = vdwg.mxu0
    %1551 = vmatprep.subr.mxu0 0.0
    %1552 = vmatpush1.msra.mxu0 %v416
    %1553 = vmatprep.subr.mxu0 0.0
    %1554 = vmatpush1.msra.mxu0 %v419
    %1555 = vmatprep.subr.mxu0 0.0
    %1556 = vmatpush1.msra.mxu0 %v422
    %1557 = vmatprep.subr.mxu0 0.0
    %1558 = vmatpush1.msra.mxu0 %v425
    %1559 = vmatprep.subr.mxu0 0.0
    %1560 = vmatpush1.msra.mxu0 %v428
    %1561 = vmatprep.subr.mxu0 0.0
    %1562 = vmatpush1.msra.mxu0 %v431
    %1563 = vmatprep.subr.mxu0 0.0
    %1564 = vmatpush1.msra.mxu0 %v434
    %1565 = vmatprep.subr.mxu0 0.0
    %1566 = vmatpush1.msra.mxu0 %v437
    %1567 = vmatprep.subr.mxu0 0.0
    %1568 = vmatpush1.msra.mxu0 %v440
    %1569 = vmatprep.subr.mxu0 0.0
    %1570 = vmatpush1.msra.mxu0 %v443
    %1571 = vmatprep.subr.mxu0 0.0
    %1572 = vmatpush1.msra.mxu0 %v446
    %1573 = vmatprep.subr.mxu0 0.0
    %1574 = vmatpush1.msra.mxu0 %v449
    %1575 = vmatprep.subr.mxu0 0.0
    %1576 = vmatpush1.msra.mxu0 %v452
    %1577 = vmatprep.subr.mxu0 0.0
    %1578 = vmatpush1.msra.mxu0 %v455
    %1579 = vmatprep.subr.mxu0 0.0
    %1580 = vmatpush1.msra.mxu0 %v458
    %1581 = vmatprep.subr.mxu0 0.0
    %1582 = vmatpush1.msra.mxu0 %v461
    %1583 = vmatprep.subr.mxu0 0.0
    %1584 = vmatpush1.msra.mxu0 0.0
    %1585 = vmatprep.subr.mxu0 0.0
    %1586 = vmatpush1.msra.mxu0 0.0
    %1587 = vmatprep.subr.mxu0 0.0
    %1588 = vmatpush1.msra.mxu0 0.0
    %1589 = vmatprep.subr.mxu0 0.0
    %1590 = vmatpush1.msra.mxu0 0.0
    %1591 = vmatprep.subr.mxu0 0.0
    %1592 = vmatpush1.msra.mxu0 0.0
    %1593 = vmatprep.subr.mxu0 0.0
    %1594 = vmatpush1.msra.mxu0 0.0
    %1595 = vmatprep.subr.mxu0 0.0
    %1596 = vmatpush1.msra.mxu0 0.0
    %1597 = vmatprep.subr.mxu0 0.0
    %1598 = vmatpush1.msra.mxu0 0.0
    %1599 = vmatprep.subr.mxu0 0.0
    %1600 = vmatpush1.msra.mxu0 0.0
    %1601 = vmatprep.subr.mxu0 0.0
    %1602 = vmatpush1.msra.mxu0 0.0
    %1603 = vmatprep.subr.mxu0 0.0
    %1604 = vmatpush1.msra.mxu0 0.0
    %1605 = vmatprep.subr.mxu0 0.0
    %1606 = vmatpush1.msra.mxu0 0.0
    %1607 = vmatprep.subr.mxu0 0.0
    %1608 = vmatpush1.msra.mxu0 0.0
    %1609 = vmatprep.subr.mxu0 0.0
    %1610 = vmatpush1.msra.mxu0 0.0
    %1611 = vmatprep.subr.mxu0 0.0
    %1612 = vmatpush1.msra.mxu0 0.0
    %1613 = vmatprep.subr.mxu0 0.0
    %1614 = vmatpush1.msra.mxu0 0.0
    %1615 = vmatprep.mubr.f32.mxu0 0.0
    %1616 = vmatmul.mubr.f32.gmra.mrb[0].mxu0 %v1477
    %v1617 = vpop.f32.mrb[0].mxu0
    %v1618 = vadd.f32 %v475, %v1617
    %v1619 = vpop.f32.mrb[0].mxu0
    %1620 = vdwg.mxu0
    %v1621 = vadd.f32 %v404, %v1547
    %v1622 = vxor.u32 %v1621, 2147483648
    %v1623 = vmul.f32 %v1622, 1.442695
    %v1624 = vpow.pop %v1623
    %v1625 = vadd.f32 %v1624, 1.0
    %v1626 = vrcp.pop %v1625
    %v1627 = vmul.f32 1.0, %v1626
    %v1628 = vrot.slane %v404, 2
    %v1630 = vadd.f32 %v1628, %v1549
    %v1631 = vxor.u32 %v1630, 2147483648
    %v1632 = vmul.f32 %v1631, 1.442695
    %v1633 = vpow.pop %v1632
    %v1634 = vadd.f32 %v1633, 1.0
    %v1635 = vrcp.pop %v1634
    %v1636 = vmul.f32 1.0, %v1635
    %v1637 = vmul.f32 %v1627, %v1618
    %v1638 = vrot.slane %v404, 4
    %v1640 = vadd.f32 %v1638, %v1637
    %v1641 = vtanh.pop %v1640
    %v1642 = vsub.f32 %v1477, %v1641
    %v1643 = vmul.f32 %v1636, %v1642
    %v1644 = vadd.f32 %v1641, %v1643
    %s1645 = scalar_lea.vmem [#allocation2], 12
    %1646 = vst [vmem:[%s1645] sm:$0x3] %v1644
    %1647 = vmatprep.subr.mxu0 %v415
    %1648 = vmatpush1.msra.mxu0 %v414
    %1649 = vmatprep.subr.mxu0 %v418
    %1650 = vmatpush1.msra.mxu0 %v417
    %1651 = vmatprep.subr.mxu0 %v421
    %1652 = vmatpush1.msra.mxu0 %v420
    %1653 = vmatprep.subr.mxu0 %v424
    %1654 = vmatpush1.msra.mxu0 %v423
    %1655 = vmatprep.subr.mxu0 %v427
    %1656 = vmatpush1.msra.mxu0 %v426
    %1657 = vmatprep.subr.mxu0 %v430
    %1658 = vmatpush1.msra.mxu0 %v429
    %1659 = vmatprep.subr.mxu0 %v433
    %1660 = vmatpush1.msra.mxu0 %v432
    %1661 = vmatprep.subr.mxu0 %v436
    %1662 = vmatpush1.msra.mxu0 %v435
    %1663 = vmatprep.subr.mxu0 %v439
    %1664 = vmatpush1.msra.mxu0 %v438
    %1665 = vmatprep.subr.mxu0 %v442
    %1666 = vmatpush1.msra.mxu0 %v441
    %1667 = vmatprep.subr.mxu0 %v445
    %1668 = vmatpush1.msra.mxu0 %v444
    %1669 = vmatprep.subr.mxu0 %v448
    %1670 = vmatpush1.msra.mxu0 %v447
    %1671 = vmatprep.subr.mxu0 %v451
    %1672 = vmatpush1.msra.mxu0 %v450
    %1673 = vmatprep.subr.mxu0 %v454
    %1674 = vmatpush1.msra.mxu0 %v453
    %1675 = vmatprep.subr.mxu0 %v457
    %1676 = vmatpush1.msra.mxu0 %v456
    %1677 = vmatprep.subr.mxu0 %v460
    %1678 = vmatpush1.msra.mxu0 %v459
    %1679 = vmatprep.subr.mxu0 0.0
    %1680 = vmatpush1.msra.mxu0 0.0
    %1681 = vmatprep.subr.mxu0 0.0
    %1682 = vmatpush1.msra.mxu0 0.0
    %1683 = vmatprep.subr.mxu0 0.0
    %1684 = vmatpush1.msra.mxu0 0.0
    %1685 = vmatprep.subr.mxu0 0.0
    %1686 = vmatpush1.msra.mxu0 0.0
    %1687 = vmatprep.subr.mxu0 0.0
    %1688 = vmatpush1.msra.mxu0 0.0
    %1689 = vmatprep.subr.mxu0 0.0
    %1690 = vmatpush1.msra.mxu0 0.0
    %1691 = vmatprep.subr.mxu0 0.0
    %1692 = vmatpush1.msra.mxu0 0.0
    %1693 = vmatprep.subr.mxu0 0.0
    %1694 = vmatpush1.msra.mxu0 0.0
    %1695 = vmatprep.subr.mxu0 0.0
    %1696 = vmatpush1.msra.mxu0 0.0
    %1697 = vmatprep.subr.mxu0 0.0
    %1698 = vmatpush1.msra.mxu0 0.0
    %1699 = vmatprep.subr.mxu0 0.0
    %1700 = vmatpush1.msra.mxu0 0.0
    %1701 = vmatprep.subr.mxu0 0.0
    %1702 = vmatpush1.msra.mxu0 0.0
    %1703 = vmatprep.subr.mxu0 0.0
    %1704 = vmatpush1.msra.mxu0 0.0
    %1705 = vmatprep.subr.mxu0 0.0
    %1706 = vmatpush1.msra.mxu0 0.0
    %1707 = vmatprep.subr.mxu0 0.0
    %1708 = vmatpush1.msra.mxu0 0.0
    %1709 = vmatprep.subr.mxu0 0.0
    %1710 = vmatpush1.msra.mxu0 0.0
    %1711 = vmatprep.mubr.f32.mxu0 0.0
    %1712 = vmatmul.mubr.f32.gmra.mrb[0].mxu0 %v1644
    %v1713 = vpop.f32.mrb[0].mxu0
    %v1714 = vadd.f32 %v467, %v1713
    %v1715 = vpop.f32.mrb[0].mxu0
    %v1716 = vadd.f32 %v471, %v1715
    %1717 = vdwg.mxu0
    %1718 = vmatprep.subr.mxu0 0.0
    %1719 = vmatpush1.msra.mxu0 %v416
    %1720 = vmatprep.subr.mxu0 0.0
    %1721 = vmatpush1.msra.mxu0 %v419
    %1722 = vmatprep.subr.mxu0 0.0
    %1723 = vmatpush1.msra.mxu0 %v422
    %1724 = vmatprep.subr.mxu0 0.0
    %1725 = vmatpush1.msra.mxu0 %v425
    %1726 = vmatprep.subr.mxu0 0.0
    %1727 = vmatpush1.msra.mxu0 %v428
    %1728 = vmatprep.subr.mxu0 0.0
    %1729 = vmatpush1.msra.mxu0 %v431
    %1730 = vmatprep.subr.mxu0 0.0
    %1731 = vmatpush1.msra.mxu0 %v434
    %1732 = vmatprep.subr.mxu0 0.0
    %1733 = vmatpush1.msra.mxu0 %v437
    %1734 = vmatprep.subr.mxu0 0.0
    %1735 = vmatpush1.msra.mxu0 %v440
    %1736 = vmatprep.subr.mxu0 0.0
    %1737 = vmatpush1.msra.mxu0 %v443
    %1738 = vmatprep.subr.mxu0 0.0
    %1739 = vmatpush1.msra.mxu0 %v446
    %1740 = vmatprep.subr.mxu0 0.0
    %1741 = vmatpush1.msra.mxu0 %v449
    %1742 = vmatprep.subr.mxu0 0.0
    %1743 = vmatpush1.msra.mxu0 %v452
    %1744 = vmatprep.subr.mxu0 0.0
    %1745 = vmatpush1.msra.mxu0 %v455
    %1746 = vmatprep.subr.mxu0 0.0
    %1747 = vmatpush1.msra.mxu0 %v458
    %1748 = vmatprep.subr.mxu0 0.0
    %1749 = vmatpush1.msra.mxu0 %v461
    %1750 = vmatprep.subr.mxu0 0.0
    %1751 = vmatpush1.msra.mxu0 0.0
    %1752 = vmatprep.subr.mxu0 0.0
    %1753 = vmatpush1.msra.mxu0 0.0
    %1754 = vmatprep.subr.mxu0 0.0
    %1755 = vmatpush1.msra.mxu0 0.0
    %1756 = vmatprep.subr.mxu0 0.0
    %1757 = vmatpush1.msra.mxu0 0.0
    %1758 = vmatprep.subr.mxu0 0.0
    %1759 = vmatpush1.msra.mxu0 0.0
    %1760 = vmatprep.subr.mxu0 0.0
    %1761 = vmatpush1.msra.mxu0 0.0
    %1762 = vmatprep.subr.mxu0 0.0
    %1763 = vmatpush1.msra.mxu0 0.0
    %1764 = vmatprep.subr.mxu0 0.0
    %1765 = vmatpush1.msra.mxu0 0.0
    %1766 = vmatprep.subr.mxu0 0.0
    %1767 = vmatpush1.msra.mxu0 0.0
    %1768 = vmatprep.subr.mxu0 0.0
    %1769 = vmatpush1.msra.mxu0 0.0
    %1770 = vmatprep.subr.mxu0 0.0
    %1771 = vmatpush1.msra.mxu0 0.0
    %1772 = vmatprep.subr.mxu0 0.0
    %1773 = vmatpush1.msra.mxu0 0.0
    %1774 = vmatprep.subr.mxu0 0.0
    %1775 = vmatpush1.msra.mxu0 0.0
    %1776 = vmatprep.subr.mxu0 0.0
    %1777 = vmatpush1.msra.mxu0 0.0
    %1778 = vmatprep.subr.mxu0 0.0
    %1779 = vmatpush1.msra.mxu0 0.0
    %1780 = vmatprep.subr.mxu0 0.0
    %1781 = vmatpush1.msra.mxu0 0.0
    %1782 = vmatprep.mubr.f32.mxu0 0.0
    %1783 = vmatmul.mubr.f32.gmra.mrb[0].mxu0 %v1644
    %v1784 = vpop.f32.mrb[0].mxu0
    %v1785 = vadd.f32 %v475, %v1784
    %v1786 = vpop.f32.mrb[0].mxu0
    %1787 = vdwg.mxu0
    %v1788 = vadd.f32 %v405, %v1714
    %v1789 = vxor.u32 %v1788, 2147483648
    %v1790 = vmul.f32 %v1789, 1.442695
    %v1791 = vpow.pop %v1790
    %v1792 = vadd.f32 %v1791, 1.0
    %v1793 = vrcp.pop %v1792
    %v1794 = vmul.f32 1.0, %v1793
    %v1795 = vrot.slane %v405, 2
    %v1797 = vadd.f32 %v1795, %v1716
    %v1798 = vxor.u32 %v1797, 2147483648
    %v1799 = vmul.f32 %v1798, 1.442695
    %v1800 = vpow.pop %v1799
    %v1801 = vadd.f32 %v1800, 1.0
    %v1802 = vrcp.pop %v1801
    %v1803 = vmul.f32 1.0, %v1802
    %v1804 = vmul.f32 %v1794, %v1785
    %v1805 = vrot.slane %v405, 4
    %v1807 = vadd.f32 %v1805, %v1804
    %v1808 = vtanh.pop %v1807
    %v1809 = vsub.f32 %v1644, %v1808
    %v1810 = vmul.f32 %v1803, %v1809
    %v1811 = vadd.f32 %v1808, %v1810
    %s1812 = scalar_lea.vmem [#allocation2], 14
    %1813 = vst [vmem:[%s1812] sm:$0x3] %v1811
    %v1814 = vld [vmem:[#allocation2] sm:$0x3]
    %v1815 = vld [vmem:[#allocation2 + $0x2] sm:$0x3]
    %v1816 = vld [vmem:[#allocation2 + $0x4] sm:$0x3]
    %v1817 = vld [vmem:[#allocation2 + $0x6] sm:$0x3]
    %v1818 = vld [vmem:[#allocation2 + $0x8] sm:$0x3]
    %v1819 = vld [vmem:[#allocation2 + $0xa] sm:$0x3]
    %v1820 = vld [vmem:[#allocation2 + $0xc] sm:$0x3]
    %v1821 = vld [vmem:[#allocation2 + $0xe] sm:$0x3]
    %v1822 = vld [vmem:[#allocation6] sm:$0xff]
    %v1823 = vld [vmem:[#allocation6 + $0x8] sm:$0xff]
    %v1824 = vld [vmem:[#allocation6 + $0x10] sm:$0xff]
    %v1825 = vld [vmem:[#allocation6 + $0x18] sm:$0xff]
    %v1826 = vld [vmem:[#allocation6 + $0x20] sm:$0xff]
    %v1827 = vld [vmem:[#allocation6 + $0x28] sm:$0xff]
    %v1828 = vld [vmem:[#allocation6 + $0x30] sm:$0xff]
    %v1829 = vld [vmem:[#allocation6 + $0x38] sm:$0xff]
    %v1830 = vld [vmem:[#allocation6 + $0x40] sm:$0xff]
    %v1831 = vld [vmem:[#allocation6 + $0x48] sm:$0xff]
    %v1832 = vld [vmem:[#allocation6 + $0x50] sm:$0xff]
    %v1833 = vld [vmem:[#allocation6 + $0x58] sm:$0xff]
    %v1834 = vld [vmem:[#allocation6 + $0x60] sm:$0xff]
    %v1835 = vld [vmem:[#allocation6 + $0x68] sm:$0xff]
    %v1836 = vld [vmem:[#allocation6 + $0x70] sm:$0xff]
    %v1837 = vld [vmem:[#allocation6 + $0x78] sm:$0xff]
    %v1838 = vld [vmem:[#allocation6 + $0x80] sm:$0xff]
    %v1839 = vld [vmem:[#allocation6 + $0x88] sm:$0xff]
    %v1840 = vld [vmem:[#allocation6 + $0x90] sm:$0xff]
    %v1841 = vld [vmem:[#allocation6 + $0x98] sm:$0xff]
    %v1842 = vld [vmem:[#allocation6 + $0xa0] sm:$0xff]
    %v1843 = vld [vmem:[#allocation6 + $0xa8] sm:$0xff]
    %v1844 = vld [vmem:[#allocation6 + $0xb0] sm:$0xff]
    %v1845 = vld [vmem:[#allocation6 + $0xb8] sm:$0xff]
    %v1846 = vld [vmem:[#allocation6 + $0xc0] sm:$0xff]
    %v1847 = vld [vmem:[#allocation6 + $0xc8] sm:$0xff]
    %v1848 = vld [vmem:[#allocation6 + $0xd0] sm:$0xff]
    %v1849 = vld [vmem:[#allocation6 + $0xd8] sm:$0xff]
    %v1850 = vld [vmem:[#allocation6 + $0xe0] sm:$0xff]
    %v1851 = vld [vmem:[#allocation6 + $0xe8] sm:$0xff]
    %v1852 = vld [vmem:[#allocation6 + $0xf0] sm:$0xff]
    %v1853 = vld [vmem:[#allocation6 + $0xf8] sm:$0xff]
    %v1854 = vld [vmem:[#allocation6 + $0x100] sm:$0xff]
    %v1855 = vld [vmem:[#allocation6 + $0x108] sm:$0xff]
    %v1856 = vld [vmem:[#allocation6 + $0x110] sm:$0xff]
    %v1857 = vld [vmem:[#allocation6 + $0x118] sm:$0xff]
    %v1858 = vld [vmem:[#allocation6 + $0x120] sm:$0xff]
    %v1859 = vld [vmem:[#allocation6 + $0x128] sm:$0xff]
    %v1860 = vld [vmem:[#allocation6 + $0x130] sm:$0xff]
    %v1861 = vld [vmem:[#allocation6 + $0x138] sm:$0xff]
    %v1862 = vld [vmem:[#allocation6 + $0x140] sm:$0xff]
    %v1863 = vld [vmem:[#allocation6 + $0x148] sm:$0xff]
    %v1864 = vld [vmem:[#allocation6 + $0x150] sm:$0xff]
    %v1865 = vld [vmem:[#allocation6 + $0x158] sm:$0xff]
    %v1866 = vld [vmem:[#allocation6 + $0x160] sm:$0xff]
    %v1867 = vld [vmem:[#allocation6 + $0x168] sm:$0xff]
    %v1868 = vld [vmem:[#allocation6 + $0x170] sm:$0xff]
    %v1869 = vld [vmem:[#allocation6 + $0x178] sm:$0xff]
    %v1870 = vld [vmem:[%s7] sm:$0x7]
    %v1872 = vlaneseq
    %v1873 = vshrl.u32 %v1872, 7
    %v1874 = vsub.s32 0, %v1873
    %v1875 = vrot.slane %v1870, %v1874
    %v1876 = vlaneseq
    %v1877 = vshrl.u32 %v1876, 7
    %v1878 = vsub.s32 1, %v1877
    %v1879 = vrot.slane %v1870, %v1878
    %v1880 = vlaneseq
    %v1881 = vshrl.u32 %v1880, 7
    %v1882 = vsub.s32 2, %v1881
    %v1883 = vrot.slane %v1870, %v1882
    %v1895 = vcombine.low %v1814, %v1815
    %v1896 = vcombine.low %v1816, %v1817
    %v1898 = vunpack.c.l.s4 1983009808
    %v1899 = vunpack.c.0.s8 %v1898
    %v1900 = vlaneseq
    %v1901 = vshrl.u32 %v1900, 7
    %v1902 = vsub.s32 %v1899, %v1901
    %v1903 = vrot.slane %v1895, %v1902
    %v1905 = vunpack.c.l.s4 1983009808
    %v1906 = vunpack.c.0.s8 %v1905
    %v1907 = vlaneseq
    %v1908 = vshrl.u32 %v1907, 7
    %v1909 = vsub.s32 %v1906, %v1908
    %v1910 = vrot.slane %v1896, %v1909
    %v1911 = vcombine.low %v1903, %v1910
    %v1912 = vcombine.low %v1818, %v1819
    %v1913 = vcombine.low %v1820, %v1821
    %v1915 = vunpack.c.l.s4 1983009808
    %v1916 = vunpack.c.0.s8 %v1915
    %v1917 = vlaneseq
    %v1918 = vshrl.u32 %v1917, 7
    %v1919 = vsub.s32 %v1916, %v1918
    %v1920 = vrot.slane %v1912, %v1919
    %v1922 = vunpack.c.l.s4 1983009808
    %v1923 = vunpack.c.0.s8 %v1922
    %v1924 = vlaneseq
    %v1925 = vshrl.u32 %v1924, 7
    %v1926 = vsub.s32 %v1923, %v1925
    %v1927 = vrot.slane %v1913, %v1926
    %v1928 = vcombine.low %v1920, %v1927
    %1931 = vmatprep.subr.mxu0 %v1823
    %1932 = vmatpush1.msra.mxu0 %v1822
    %1933 = vmatprep.subr.mxu0 %v1826
    %1934 = vmatpush1.msra.mxu0 %v1825
    %1935 = vmatprep.subr.mxu0 %v1829
    %1936 = vmatpush1.msra.mxu0 %v1828
    %1937 = vmatprep.subr.mxu0 %v1832
    %1938 = vmatpush1.msra.mxu0 %v1831
    %1939 = vmatprep.subr.mxu0 %v1835
    %1940 = vmatpush1.msra.mxu0 %v1834
    %1941 = vmatprep.subr.mxu0 %v1838
    %1942 = vmatpush1.msra.mxu0 %v1837
    %1943 = vmatprep.subr.mxu0 %v1841
    %1944 = vmatpush1.msra.mxu0 %v1840
    %1945 = vmatprep.subr.mxu0 %v1844
    %1946 = vmatpush1.msra.mxu0 %v1843
    %1947 = vmatprep.subr.mxu0 %v1847
    %1948 = vmatpush1.msra.mxu0 %v1846
    %1949 = vmatprep.subr.mxu0 %v1850
    %1950 = vmatpush1.msra.mxu0 %v1849
    %1951 = vmatprep.subr.mxu0 %v1853
    %1952 = vmatpush1.msra.mxu0 %v1852
    %1953 = vmatprep.subr.mxu0 %v1856
    %1954 = vmatpush1.msra.mxu0 %v1855
    %1955 = vmatprep.subr.mxu0 %v1859
    %1956 = vmatpush1.msra.mxu0 %v1858
    %1957 = vmatprep.subr.mxu0 %v1862
    %1958 = vmatpush1.msra.mxu0 %v1861
    %1959 = vmatprep.subr.mxu0 %v1865
    %1960 = vmatpush1.msra.mxu0 %v1864
    %1961 = vmatprep.subr.mxu0 %v1868
    %1962 = vmatpush1.msra.mxu0 %v1867
    %1963 = vmatprep.subr.mxu0 0.0
    %1964 = vmatpush1.msra.mxu0 0.0
    %1965 = vmatprep.subr.mxu0 0.0
    %1966 = vmatpush1.msra.mxu0 0.0
    %1967 = vmatprep.subr.mxu0 0.0
    %1968 = vmatpush1.msra.mxu0 0.0
    %1969 = vmatprep.subr.mxu0 0.0
    %1970 = vmatpush1.msra.mxu0 0.0
    %1971 = vmatprep.subr.mxu0 0.0
    %1972 = vmatpush1.msra.mxu0 0.0
    %1973 = vmatprep.subr.mxu0 0.0
    %1974 = vmatpush1.msra.mxu0 0.0
    %1975 = vmatprep.subr.mxu0 0.0
    %1976 = vmatpush1.msra.mxu0 0.0
    %1977 = vmatprep.subr.mxu0 0.0
    %1978 = vmatpush1.msra.mxu0 0.0
    %1979 = vmatprep.subr.mxu0 0.0
    %1980 = vmatpush1.msra.mxu0 0.0
    %1981 = vmatprep.subr.mxu0 0.0
    %1982 = vmatpush1.msra.mxu0 0.0
    %1983 = vmatprep.subr.mxu0 0.0
    %1984 = vmatpush1.msra.mxu0 0.0
    %1985 = vmatprep.subr.mxu0 0.0
    %1986 = vmatpush1.msra.mxu0 0.0
    %1987 = vmatprep.subr.mxu0 0.0
    %1988 = vmatpush1.msra.mxu0 0.0
    %1989 = vmatprep.subr.mxu0 0.0
    %1990 = vmatpush1.msra.mxu0 0.0
    %1991 = vmatprep.subr.mxu0 0.0
    %1992 = vmatpush1.msra.mxu0 0.0
    %1993 = vmatprep.subr.mxu0 0.0
    %1994 = vmatpush1.msra.mxu0 0.0
    %1995 = vmatprep.mubr.f32.mxu0 0.0
    %1996 = vmatmul.mubr.f32.gmra.mrb[0].mxu0 %v1911
    %v1997 = vpop.f32.mrb[0].mxu0
    %v1998 = vadd.f32 %v1875, %v1997
    %v1999 = vpop.f32.mrb[0].mxu0
    %v2000 = vadd.f32 %v1879, %v1999
    %2001 = vmatprep.mubr.f32.mxu0 0.0
    %2002 = vmatmul.mubr.f32.gmra.mrb[0].mxu0 %v1928
    %v2003 = vpop.f32.mrb[0].mxu0
    %v2004 = vadd.f32 %v1875, %v2003
    %v2005 = vpop.f32.mrb[0].mxu0
    %v2006 = vadd.f32 %v1879, %v2005
    %2007 = vdwg.mxu0
    %2008 = vmatprep.subr.mxu0 0.0
    %2009 = vmatpush1.msra.mxu0 %v1824
    %2010 = vmatprep.subr.mxu0 0.0
    %2011 = vmatpush1.msra.mxu0 %v1827
    %2012 = vmatprep.subr.mxu0 0.0
    %2013 = vmatpush1.msra.mxu0 %v1830
    %2014 = vmatprep.subr.mxu0 0.0
    %2015 = vmatpush1.msra.mxu0 %v1833
    %2016 = vmatprep.subr.mxu0 0.0
    %2017 = vmatpush1.msra.mxu0 %v1836
    %2018 = vmatprep.subr.mxu0 0.0
    %2019 = vmatpush1.msra.mxu0 %v1839
    %2020 = vmatprep.subr.mxu0 0.0
    %2021 = vmatpush1.msra.mxu0 %v1842
    %2022 = vmatprep.subr.mxu0 0.0
    %2023 = vmatpush1.msra.mxu0 %v1845
    %2024 = vmatprep.subr.mxu0 0.0
    %2025 = vmatpush1.msra.mxu0 %v1848
    %2026 = vmatprep.subr.mxu0 0.0
    %2027 = vmatpush1.msra.mxu0 %v1851
    %2028 = vmatprep.subr.mxu0 0.0
    %2029 = vmatpush1.msra.mxu0 %v1854
    %2030 = vmatprep.subr.mxu0 0.0
    %2031 = vmatpush1.msra.mxu0 %v1857
    %2032 = vmatprep.subr.mxu0 0.0
    %2033 = vmatpush1.msra.mxu0 %v1860
    %2034 = vmatprep.subr.mxu0 0.0
    %2035 = vmatpush1.msra.mxu0 %v1863
    %2036 = vmatprep.subr.mxu0 0.0
    %2037 = vmatpush1.msra.mxu0 %v1866
    %2038 = vmatprep.subr.mxu0 0.0
    %2039 = vmatpush1.msra.mxu0 %v1869
    %2040 = vmatprep.subr.mxu0 0.0
    %2041 = vmatpush1.msra.mxu0 0.0
    %2042 = vmatprep.subr.mxu0 0.0
    %2043 = vmatpush1.msra.mxu0 0.0
    %2044 = vmatprep.subr.mxu0 0.0
    %2045 = vmatpush1.msra.mxu0 0.0
    %2046 = vmatprep.subr.mxu0 0.0
    %2047 = vmatpush1.msra.mxu0 0.0
    %2048 = vmatprep.subr.mxu0 0.0
    %2049 = vmatpush1.msra.mxu0 0.0
    %2050 = vmatprep.subr.mxu0 0.0
    %2051 = vmatpush1.msra.mxu0 0.0
    %2052 = vmatprep.subr.mxu0 0.0
    %2053 = vmatpush1.msra.mxu0 0.0
    %2054 = vmatprep.subr.mxu0 0.0
    %2055 = vmatpush1.msra.mxu0 0.0
    %2056 = vmatprep.subr.mxu0 0.0
    %2057 = vmatpush1.msra.mxu0 0.0
    %2058 = vmatprep.subr.mxu0 0.0
    %2059 = vmatpush1.msra.mxu0 0.0
    %2060 = vmatprep.subr.mxu0 0.0
    %2061 = vmatpush1.msra.mxu0 0.0
    %2062 = vmatprep.subr.mxu0 0.0
    %2063 = vmatpush1.msra.mxu0 0.0
    %2064 = vmatprep.subr.mxu0 0.0
    %2065 = vmatpush1.msra.mxu0 0.0
    %2066 = vmatprep.subr.mxu0 0.0
    %2067 = vmatpush1.msra.mxu0 0.0
    %2068 = vmatprep.subr.mxu0 0.0
    %2069 = vmatpush1.msra.mxu0 0.0
    %2070 = vmatprep.subr.mxu0 0.0
    %2071 = vmatpush1.msra.mxu0 0.0
    %2072 = vmatprep.mubr.f32.mxu0 0.0
    %2073 = vmatmul.mubr.f32.gmra.mrb[0].mxu0 %v1911
    %v2074 = vpop.f32.mrb[0].mxu0
    %v2075 = vadd.f32 %v1883, %v2074
    %v2076 = vpop.f32.mrb[0].mxu0
    %2077 = vmatprep.mubr.f32.mxu0 0.0
    %2078 = vmatmul.mubr.f32.gmra.mrb[0].mxu0 %v1928
    %v2079 = vpop.f32.mrb[0].mxu0
    %v2080 = vadd.f32 %v1883, %v2079
    %v2081 = vpop.f32.mrb[0].mxu0
    %2082 = vdwg.mxu0
    %v2089 = vcombine.low %v1998, %v2000
    %v2090 = vcombine.high %v1998, %v2000
    %v2091 = vcombine.high %v2075, %v2075
    %v2093 = vunpack.c.l.s4 1983009808
    %v2094 = vunpack.c.0.s8 %v2093
    %v2095 = vlaneseq
    %v2096 = vshrl.u32 %v2095, 7
    %v2097 = vsub.s32 %v2094, %v2096
    %v2098 = vrot.slane %v2089, %v2097
    %v2100 = vunpack.c.l.s4 1983009808
    %v2101 = vunpack.c.0.s8 %v2100
    %v2102 = vlaneseq
    %v2103 = vshrl.u32 %v2102, 7
    %v2104 = vsub.s32 %v2101, %v2103
    %v2105 = vrot.slane %v2090, %v2104
    %v2107 = vunpack.c.l.s4 1983009808
    %v2108 = vunpack.c.0.s8 %v2107
    %v2109 = vlaneseq
    %v2110 = vshrl.u32 %v2109, 7
    %v2111 = vsub.s32 %v2108, %v2110
    %v2112 = vrot.slane %v2075, %v2111
    %v2114 = vunpack.c.l.s4 1983009808
    %v2115 = vunpack.c.0.s8 %v2114
    %v2116 = vlaneseq
    %v2117 = vshrl.u32 %v2116, 7
    %v2118 = vsub.s32 %v2115, %v2117
    %v2119 = vrot.slane %v2091, %v2118
    %v2120 = vcombine.low %v2098, %v2112
    %v2121 = vcombine.high %v2098, %v2112
    %v2122 = vcombine.low %v2105, %v2119
    %v2123 = vcombine.high %v2105, %v2119
    %v2124 = vcombine.low %v2004, %v2006
    %v2125 = vcombine.high %v2004, %v2006
    %v2126 = vcombine.high %v2080, %v2080
    %v2128 = vunpack.c.l.s4 1983009808
    %v2129 = vunpack.c.0.s8 %v2128
    %v2130 = vlaneseq
    %v2131 = vshrl.u32 %v2130, 7
    %v2132 = vsub.s32 %v2129, %v2131
    %v2133 = vrot.slane %v2124, %v2132
    %v2135 = vunpack.c.l.s4 1983009808
    %v2136 = vunpack.c.0.s8 %v2135
    %v2137 = vlaneseq
    %v2138 = vshrl.u32 %v2137, 7
    %v2139 = vsub.s32 %v2136, %v2138
    %v2140 = vrot.slane %v2125, %v2139
    %v2142 = vunpack.c.l.s4 1983009808
    %v2143 = vunpack.c.0.s8 %v2142
    %v2144 = vlaneseq
    %v2145 = vshrl.u32 %v2144, 7
    %v2146 = vsub.s32 %v2143, %v2145
    %v2147 = vrot.slane %v2080, %v2146
    %v2149 = vunpack.c.l.s4 1983009808
    %v2150 = vunpack.c.0.s8 %v2149
    %v2151 = vlaneseq
    %v2152 = vshrl.u32 %v2151, 7
    %v2153 = vsub.s32 %v2150, %v2152
    %v2154 = vrot.slane %v2126, %v2153
    %v2155 = vcombine.low %v2133, %v2147
    %v2156 = vcombine.high %v2133, %v2147
    %v2157 = vcombine.low %v2140, %v2154
    %v2158 = vcombine.high %v2140, %v2154
    %v2167 = vld [vmem:[#allocation8] sm:$0xff]
    %v2168 = vld [vmem:[#allocation8 + $0x8] sm:$0xff]
    %v2169 = vld [vmem:[#allocation8 + $0x10] sm:$0xff]
    %v2170 = vld [vmem:[#allocation8 + $0x18] sm:$0xff]
    %v2171 = vld [vmem:[#allocation8 + $0x20] sm:$0xff]
    %v2172 = vld [vmem:[#allocation8 + $0x28] sm:$0xff]
    %v2173 = vld [vmem:[#allocation8 + $0x30] sm:$0xff]
    %v2174 = vld [vmem:[#allocation8 + $0x38] sm:$0xff]
    %v2175 = vld [vmem:[#allocation8 + $0x40] sm:$0xff]
    %v2176 = vld [vmem:[#allocation8 + $0x48] sm:$0xff]
    %v2177 = vld [vmem:[#allocation8 + $0x50] sm:$0xff]
    %v2178 = vld [vmem:[#allocation8 + $0x58] sm:$0xff]
    %v2179 = vld [vmem:[#allocation8 + $0x60] sm:$0xff]
    %v2180 = vld [vmem:[#allocation8 + $0x68] sm:$0xff]
    %v2181 = vld [vmem:[#allocation8 + $0x70] sm:$0xff]
    %v2182 = vld [vmem:[#allocation8 + $0x78] sm:$0xff]
    %v2183 = vld [vmem:[#allocation8 + $0x80] sm:$0xff]
    %v2184 = vld [vmem:[#allocation8 + $0x88] sm:$0xff]
    %v2185 = vld [vmem:[#allocation8 + $0x90] sm:$0xff]
    %v2186 = vld [vmem:[#allocation8 + $0x98] sm:$0xff]
    %v2187 = vld [vmem:[#allocation8 + $0xa0] sm:$0xff]
    %v2188 = vld [vmem:[#allocation8 + $0xa8] sm:$0xff]
    %v2189 = vld [vmem:[#allocation8 + $0xb0] sm:$0xff]
    %v2190 = vld [vmem:[#allocation8 + $0xb8] sm:$0xff]
    %v2191 = vld [vmem:[#allocation8 + $0xc0] sm:$0xff]
    %v2192 = vld [vmem:[#allocation8 + $0xc8] sm:$0xff]
    %v2193 = vld [vmem:[#allocation8 + $0xd0] sm:$0xff]
    %v2194 = vld [vmem:[#allocation8 + $0xd8] sm:$0xff]
    %v2195 = vld [vmem:[#allocation8 + $0xe0] sm:$0xff]
    %v2196 = vld [vmem:[#allocation8 + $0xe8] sm:$0xff]
    %v2197 = vld [vmem:[#allocation8 + $0xf0] sm:$0xff]
    %v2198 = vld [vmem:[#allocation8 + $0xf8] sm:$0xff]
    %v2199 = vld [vmem:[#allocation8 + $0x100] sm:$0xff]
    %v2200 = vld [vmem:[#allocation8 + $0x108] sm:$0xff]
    %v2201 = vld [vmem:[#allocation8 + $0x110] sm:$0xff]
    %v2202 = vld [vmem:[#allocation8 + $0x118] sm:$0xff]
    %v2203 = vld [vmem:[#allocation8 + $0x120] sm:$0xff]
    %v2204 = vld [vmem:[#allocation8 + $0x128] sm:$0xff]
    %v2205 = vld [vmem:[#allocation8 + $0x130] sm:$0xff]
    %v2206 = vld [vmem:[#allocation8 + $0x138] sm:$0xff]
    %v2207 = vld [vmem:[#allocation8 + $0x140] sm:$0xff]
    %v2208 = vld [vmem:[#allocation8 + $0x148] sm:$0xff]
    %v2209 = vld [vmem:[#allocation8 + $0x150] sm:$0xff]
    %v2210 = vld [vmem:[#allocation8 + $0x158] sm:$0xff]
    %v2211 = vld [vmem:[#allocation8 + $0x160] sm:$0xff]
    %v2212 = vld [vmem:[#allocation8 + $0x168] sm:$0xff]
    %v2213 = vld [vmem:[#allocation8 + $0x170] sm:$0xff]
    %v2214 = vld [vmem:[#allocation8 + $0x178] sm:$0xff]
    %v2215 = vld [vmem:[%s8] sm:$0x7]
    %v2217 = vlaneseq
    %v2218 = vshrl.u32 %v2217, 7
    %v2219 = vsub.s32 0, %v2218
    %v2220 = vrot.slane %v2215, %v2219
    %v2221 = vlaneseq
    %v2222 = vshrl.u32 %v2221, 7
    %v2223 = vsub.s32 1, %v2222
    %v2224 = vrot.slane %v2215, %v2223
    %v2225 = vlaneseq
    %v2226 = vshrl.u32 %v2225, 7
    %v2227 = vsub.s32 2, %v2226
    %v2228 = vrot.slane %v2215, %v2227
    %2232 = vmatprep.subr.mxu0 %v2168
    %2233 = vmatpush1.msra.mxu0 %v2167
    %2234 = vmatprep.subr.mxu0 %v2171
    %2235 = vmatpush1.msra.mxu0 %v2170
    %2236 = vmatprep.subr.mxu0 %v2174
    %2237 = vmatpush1.msra.mxu0 %v2173
    %2238 = vmatprep.subr.mxu0 %v2177
    %2239 = vmatpush1.msra.mxu0 %v2176
    %2240 = vmatprep.subr.mxu0 %v2180
    %2241 = vmatpush1.msra.mxu0 %v2179
    %2242 = vmatprep.subr.mxu0 %v2183
    %2243 = vmatpush1.msra.mxu0 %v2182
    %2244 = vmatprep.subr.mxu0 %v2186
    %2245 = vmatpush1.msra.mxu0 %v2185
    %2246 = vmatprep.subr.mxu0 %v2189
    %2247 = vmatpush1.msra.mxu0 %v2188
    %2248 = vmatprep.subr.mxu0 %v2192
    %2249 = vmatpush1.msra.mxu0 %v2191
    %2250 = vmatprep.subr.mxu0 %v2195
    %2251 = vmatpush1.msra.mxu0 %v2194
    %2252 = vmatprep.subr.mxu0 %v2198
    %2253 = vmatpush1.msra.mxu0 %v2197
    %2254 = vmatprep.subr.mxu0 %v2201
    %2255 = vmatpush1.msra.mxu0 %v2200
    %2256 = vmatprep.subr.mxu0 %v2204
    %2257 = vmatpush1.msra.mxu0 %v2203
    %2258 = vmatprep.subr.mxu0 %v2207
    %2259 = vmatpush1.msra.mxu0 %v2206
    %2260 = vmatprep.subr.mxu0 %v2210
    %2261 = vmatpush1.msra.mxu0 %v2209
    %2262 = vmatprep.subr.mxu0 %v2213
    %2263 = vmatpush1.msra.mxu0 %v2212
    %2264 = vmatprep.subr.mxu0 0.0
    %2265 = vmatpush1.msra.mxu0 0.0
    %2266 = vmatprep.subr.mxu0 0.0
    %2267 = vmatpush1.msra.mxu0 0.0
    %2268 = vmatprep.subr.mxu0 0.0
    %2269 = vmatpush1.msra.mxu0 0.0
    %2270 = vmatprep.subr.mxu0 0.0
    %2271 = vmatpush1.msra.mxu0 0.0
    %2272 = vmatprep.subr.mxu0 0.0
    %2273 = vmatpush1.msra.mxu0 0.0
    %2274 = vmatprep.subr.mxu0 0.0
    %2275 = vmatpush1.msra.mxu0 0.0
    %2276 = vmatprep.subr.mxu0 0.0
    %2277 = vmatpush1.msra.mxu0 0.0
    %2278 = vmatprep.subr.mxu0 0.0
    %2279 = vmatpush1.msra.mxu0 0.0
    %2280 = vmatprep.subr.mxu0 0.0
    %2281 = vmatpush1.msra.mxu0 0.0
    %2282 = vmatprep.subr.mxu0 0.0
    %2283 = vmatpush1.msra.mxu0 0.0
    %2284 = vmatprep.subr.mxu0 0.0
    %2285 = vmatpush1.msra.mxu0 0.0
    %2286 = vmatprep.subr.mxu0 0.0
    %2287 = vmatpush1.msra.mxu0 0.0
    %2288 = vmatprep.subr.mxu0 0.0
    %2289 = vmatpush1.msra.mxu0 0.0
    %2290 = vmatprep.subr.mxu0 0.0
    %2291 = vmatpush1.msra.mxu0 0.0
    %2292 = vmatprep.subr.mxu0 0.0
    %2293 = vmatpush1.msra.mxu0 0.0
    %2294 = vmatprep.subr.mxu0 0.0
    %2295 = vmatpush1.msra.mxu0 0.0
    %2296 = vmatprep.mubr.f32.mxu0 0.0
    %2297 = vmatmul.mubr.f32.gmra.mrb[0].mxu0 0.0
    %v2298 = vpop.f32.mrb[0].mxu0
    %v2299 = vadd.f32 %v2220, %v2298
    %v2300 = vpop.f32.mrb[0].mxu0
    %v2301 = vadd.f32 %v2224, %v2300
    %2302 = vdwg.mxu0
    %2303 = vmatprep.subr.mxu0 0.0
    %2304 = vmatpush1.msra.mxu0 %v2169
    %2305 = vmatprep.subr.mxu0 0.0
    %2306 = vmatpush1.msra.mxu0 %v2172
    %2307 = vmatprep.subr.mxu0 0.0
    %2308 = vmatpush1.msra.mxu0 %v2175
    %2309 = vmatprep.subr.mxu0 0.0
    %2310 = vmatpush1.msra.mxu0 %v2178
    %2311 = vmatprep.subr.mxu0 0.0
    %2312 = vmatpush1.msra.mxu0 %v2181
    %2313 = vmatprep.subr.mxu0 0.0
    %2314 = vmatpush1.msra.mxu0 %v2184
    %2315 = vmatprep.subr.mxu0 0.0
    %2316 = vmatpush1.msra.mxu0 %v2187
    %2317 = vmatprep.subr.mxu0 0.0
    %2318 = vmatpush1.msra.mxu0 %v2190
    %2319 = vmatprep.subr.mxu0 0.0
    %2320 = vmatpush1.msra.mxu0 %v2193
    %2321 = vmatprep.subr.mxu0 0.0
    %2322 = vmatpush1.msra.mxu0 %v2196
    %2323 = vmatprep.subr.mxu0 0.0
    %2324 = vmatpush1.msra.mxu0 %v2199
    %2325 = vmatprep.subr.mxu0 0.0
    %2326 = vmatpush1.msra.mxu0 %v2202
    %2327 = vmatprep.subr.mxu0 0.0
    %2328 = vmatpush1.msra.mxu0 %v2205
    %2329 = vmatprep.subr.mxu0 0.0
    %2330 = vmatpush1.msra.mxu0 %v2208
    %2331 = vmatprep.subr.mxu0 0.0
    %2332 = vmatpush1.msra.mxu0 %v2211
    %2333 = vmatprep.subr.mxu0 0.0
    %2334 = vmatpush1.msra.mxu0 %v2214
    %2335 = vmatprep.subr.mxu0 0.0
    %2336 = vmatpush1.msra.mxu0 0.0
    %2337 = vmatprep.subr.mxu0 0.0
    %2338 = vmatpush1.msra.mxu0 0.0
    %2339 = vmatprep.subr.mxu0 0.0
    %2340 = vmatpush1.msra.mxu0 0.0
    %2341 = vmatprep.subr.mxu0 0.0
    %2342 = vmatpush1.msra.mxu0 0.0
    %2343 = vmatprep.subr.mxu0 0.0
    %2344 = vmatpush1.msra.mxu0 0.0
    %2345 = vmatprep.subr.mxu0 0.0
    %2346 = vmatpush1.msra.mxu0 0.0
    %2347 = vmatprep.subr.mxu0 0.0
    %2348 = vmatpush1.msra.mxu0 0.0
    %2349 = vmatprep.subr.mxu0 0.0
    %2350 = vmatpush1.msra.mxu0 0.0
    %2351 = vmatprep.subr.mxu0 0.0
    %2352 = vmatpush1.msra.mxu0 0.0
    %2353 = vmatprep.subr.mxu0 0.0
    %2354 = vmatpush1.msra.mxu0 0.0
    %2355 = vmatprep.subr.mxu0 0.0
    %2356 = vmatpush1.msra.mxu0 0.0
    %2357 = vmatprep.subr.mxu0 0.0
    %2358 = vmatpush1.msra.mxu0 0.0
    %2359 = vmatprep.subr.mxu0 0.0
    %2360 = vmatpush1.msra.mxu0 0.0
    %2361 = vmatprep.subr.mxu0 0.0
    %2362 = vmatpush1.msra.mxu0 0.0
    %2363 = vmatprep.subr.mxu0 0.0
    %2364 = vmatpush1.msra.mxu0 0.0
    %2365 = vmatprep.subr.mxu0 0.0
    %2366 = vmatpush1.msra.mxu0 0.0
    %2367 = vmatprep.mubr.f32.mxu0 0.0
    %2368 = vmatmul.mubr.f32.gmra.mrb[0].mxu0 0.0
    %v2369 = vpop.f32.mrb[0].mxu0
    %v2370 = vadd.f32 %v2228, %v2369
    %v2371 = vpop.f32.mrb[0].mxu0
    %2372 = vdwg.mxu0
    %v2373 = vadd.f32 %v2120, %v2299
    %v2374 = vxor.u32 %v2373, 2147483648
    %v2375 = vmul.f32 %v2374, 1.442695
    %v2376 = vpow.pop %v2375
    %v2377 = vadd.f32 %v2376, 1.0
    %v2378 = vrcp.pop %v2377
    %v2379 = vmul.f32 1.0, %v2378
    %v2380 = vrot.slane %v2120, 2
    %v2382 = vadd.f32 %v2380, %v2301
    %v2383 = vxor.u32 %v2382, 2147483648
    %v2384 = vmul.f32 %v2383, 1.442695
    %v2385 = vpow.pop %v2384
    %v2386 = vadd.f32 %v2385, 1.0
    %v2387 = vrcp.pop %v2386
    %v2388 = vmul.f32 1.0, %v2387
    %v2389 = vmul.f32 %v2379, %v2370
    %v2390 = vrot.slane %v2120, 4
    %v2392 = vadd.f32 %v2390, %v2389
    %v2393 = vtanh.pop %v2392
    %v2394 = vsub.f32 0.0, %v2393
    %v2395 = vmul.f32 %v2388, %v2394
    %v2396 = vadd.f32 %v2393, %v2395
    %v2397 = vld [vmem:[#allocation9] sm:$0xff]
    %v2398 = vld [vmem:[#allocation9 + $0x8] sm:$0xff]
    %v2399 = vld [vmem:[#allocation9 + $0x10] sm:$0xff]
    %v2400 = vld [vmem:[#allocation9 + $0x18] sm:$0xff]
    %v2401 = vld [vmem:[#allocation9 + $0x20] sm:$0xff]
    %v2402 = vld [vmem:[#allocation9 + $0x28] sm:$0xff]
    %v2403 = vld [vmem:[#allocation9 + $0x30] sm:$0xff]
    %v2404 = vld [vmem:[#allocation9 + $0x38] sm:$0xff]
    %v2405 = vld [vmem:[#allocation9 + $0x40] sm:$0xff]
    %v2406 = vld [vmem:[#allocation9 + $0x48] sm:$0xff]
    %v2407 = vld [vmem:[#allocation9 + $0x50] sm:$0xff]
    %v2408 = vld [vmem:[#allocation9 + $0x58] sm:$0xff]
    %v2409 = vld [vmem:[#allocation9 + $0x60] sm:$0xff]
    %v2410 = vld [vmem:[#allocation9 + $0x68] sm:$0xff]
    %v2411 = vld [vmem:[#allocation9 + $0x70] sm:$0xff]
    %v2412 = vld [vmem:[#allocation9 + $0x78] sm:$0xff]
    %2413 = vmatprep.subr.mxu0 %v2168
    %2414 = vmatpush1.msra.mxu0 %v2167
    %2415 = vmatprep.subr.mxu0 %v2171
    %2416 = vmatpush1.msra.mxu0 %v2170
    %2417 = vmatprep.subr.mxu0 %v2174
    %2418 = vmatpush1.msra.mxu0 %v2173
    %2419 = vmatprep.subr.mxu0 %v2177
    %2420 = vmatpush1.msra.mxu0 %v2176
    %2421 = vmatprep.subr.mxu0 %v2180
    %2422 = vmatpush1.msra.mxu0 %v2179
    %2423 = vmatprep.subr.mxu0 %v2183
    %2424 = vmatpush1.msra.mxu0 %v2182
    %2425 = vmatprep.subr.mxu0 %v2186
    %2426 = vmatpush1.msra.mxu0 %v2185
    %2427 = vmatprep.subr.mxu0 %v2189
    %2428 = vmatpush1.msra.mxu0 %v2188
    %2429 = vmatprep.subr.mxu0 %v2192
    %2430 = vmatpush1.msra.mxu0 %v2191
    %2431 = vmatprep.subr.mxu0 %v2195
    %2432 = vmatpush1.msra.mxu0 %v2194
    %2433 = vmatprep.subr.mxu0 %v2198
    %2434 = vmatpush1.msra.mxu0 %v2197
    %2435 = vmatprep.subr.mxu0 %v2201
    %2436 = vmatpush1.msra.mxu0 %v2200
    %2437 = vmatprep.subr.mxu0 %v2204
    %2438 = vmatpush1.msra.mxu0 %v2203
    %2439 = vmatprep.subr.mxu0 %v2207
    %2440 = vmatpush1.msra.mxu0 %v2206
    %2441 = vmatprep.subr.mxu0 %v2210
    %2442 = vmatpush1.msra.mxu0 %v2209
    %2443 = vmatprep.subr.mxu0 %v2213
    %2444 = vmatpush1.msra.mxu0 %v2212
    %2445 = vmatprep.subr.mxu0 0.0
    %2446 = vmatpush1.msra.mxu0 0.0
    %2447 = vmatprep.subr.mxu0 0.0
    %2448 = vmatpush1.msra.mxu0 0.0
    %2449 = vmatprep.subr.mxu0 0.0
    %2450 = vmatpush1.msra.mxu0 0.0
    %2451 = vmatprep.subr.mxu0 0.0
    %2452 = vmatpush1.msra.mxu0 0.0
    %2453 = vmatprep.subr.mxu0 0.0
    %2454 = vmatpush1.msra.mxu0 0.0
    %2455 = vmatprep.subr.mxu0 0.0
    %2456 = vmatpush1.msra.mxu0 0.0
    %2457 = vmatprep.subr.mxu0 0.0
    %2458 = vmatpush1.msra.mxu0 0.0
    %2459 = vmatprep.subr.mxu0 0.0
    %2460 = vmatpush1.msra.mxu0 0.0
    %2461 = vmatprep.subr.mxu0 0.0
    %2462 = vmatpush1.msra.mxu0 0.0
    %2463 = vmatprep.subr.mxu0 0.0
    %2464 = vmatpush1.msra.mxu0 0.0
    %2465 = vmatprep.subr.mxu0 0.0
    %2466 = vmatpush1.msra.mxu0 0.0
    %2467 = vmatprep.subr.mxu0 0.0
    %2468 = vmatpush1.msra.mxu0 0.0
    %2469 = vmatprep.subr.mxu0 0.0
    %2470 = vmatpush1.msra.mxu0 0.0
    %2471 = vmatprep.subr.mxu0 0.0
    %2472 = vmatpush1.msra.mxu0 0.0
    %2473 = vmatprep.subr.mxu0 0.0
    %2474 = vmatpush1.msra.mxu0 0.0
    %2475 = vmatprep.subr.mxu0 0.0
    %2476 = vmatpush1.msra.mxu0 0.0
    %2477 = vmatprep.mubr.f32.mxu0 0.0
    %2478 = vmatmul.mubr.f32.gmra.mrb[0].mxu0 %v2396
    %v2479 = vpop.f32.mrb[0].mxu0
    %v2480 = vadd.f32 %v2220, %v2479
    %v2481 = vpop.f32.mrb[0].mxu0
    %v2482 = vadd.f32 %v2224, %v2481
    %2483 = vdwg.mxu0
    %2484 = vmatprep.subr.mxu0 0.0
    %2485 = vmatpush1.msra.mxu0 %v2169
    %2486 = vmatprep.subr.mxu0 0.0
    %2487 = vmatpush1.msra.mxu0 %v2172
    %2488 = vmatprep.subr.mxu0 0.0
    %2489 = vmatpush1.msra.mxu0 %v2175
    %2490 = vmatprep.subr.mxu0 0.0
    %2491 = vmatpush1.msra.mxu0 %v2178
    %2492 = vmatprep.subr.mxu0 0.0
    %2493 = vmatpush1.msra.mxu0 %v2181
    %2494 = vmatprep.subr.mxu0 0.0
    %2495 = vmatpush1.msra.mxu0 %v2184
    %2496 = vmatprep.subr.mxu0 0.0
    %2497 = vmatpush1.msra.mxu0 %v2187
    %2498 = vmatprep.subr.mxu0 0.0
    %2499 = vmatpush1.msra.mxu0 %v2190
    %2500 = vmatprep.subr.mxu0 0.0
    %2501 = vmatpush1.msra.mxu0 %v2193
    %2502 = vmatprep.subr.mxu0 0.0
    %2503 = vmatpush1.msra.mxu0 %v2196
    %2504 = vmatprep.subr.mxu0 0.0
    %2505 = vmatpush1.msra.mxu0 %v2199
    %2506 = vmatprep.subr.mxu0 0.0
    %2507 = vmatpush1.msra.mxu0 %v2202
    %2508 = vmatprep.subr.mxu0 0.0
    %2509 = vmatpush1.msra.mxu0 %v2205
    %2510 = vmatprep.subr.mxu0 0.0
    %2511 = vmatpush1.msra.mxu0 %v2208
    %2512 = vmatprep.subr.mxu0 0.0
    %2513 = vmatpush1.msra.mxu0 %v2211
    %2514 = vmatprep.subr.mxu0 0.0
    %2515 = vmatpush1.msra.mxu0 %v2214
    %2516 = vmatprep.subr.mxu0 0.0
    %2517 = vmatpush1.msra.mxu0 0.0
    %2518 = vmatprep.subr.mxu0 0.0
    %2519 = vmatpush1.msra.mxu0 0.0
    %2520 = vmatprep.subr.mxu0 0.0
    %2521 = vmatpush1.msra.mxu0 0.0
    %2522 = vmatprep.subr.mxu0 0.0
    %2523 = vmatpush1.msra.mxu0 0.0
    %2524 = vmatprep.subr.mxu0 0.0
    %2525 = vmatpush1.msra.mxu0 0.0
    %2526 = vmatprep.subr.mxu0 0.0
    %2527 = vmatpush1.msra.mxu0 0.0
    %2528 = vmatprep.subr.mxu0 0.0
    %2529 = vmatpush1.msra.mxu0 0.0
    %2530 = vmatprep.subr.mxu0 0.0
    %2531 = vmatpush1.msra.mxu0 0.0
    %2532 = vmatprep.subr.mxu0 0.0
    %2533 = vmatpush1.msra.mxu0 0.0
    %2534 = vmatprep.subr.mxu0 0.0
    %2535 = vmatpush1.msra.mxu0 0.0
    %2536 = vmatprep.subr.mxu0 0.0
    %2537 = vmatpush1.msra.mxu0 0.0
    %2538 = vmatprep.subr.mxu0 0.0
    %2539 = vmatpush1.msra.mxu0 0.0
    %2540 = vmatprep.subr.mxu0 0.0
    %2541 = vmatpush1.msra.mxu0 0.0
    %2542 = vmatprep.subr.mxu0 0.0
    %2543 = vmatpush1.msra.mxu0 0.0
    %2544 = vmatprep.subr.mxu0 0.0
    %2545 = vmatpush1.msra.mxu0 0.0
    %2546 = vmatprep.subr.mxu0 0.0
    %2547 = vmatpush1.msra.mxu0 0.0
    %2548 = vmatprep.mubr.f32.mxu0 0.0
    %2549 = vmatmul.mubr.f32.gmra.mrb[0].mxu0 %v2396
    %v2550 = vpop.f32.mrb[0].mxu0
    %v2551 = vadd.f32 %v2228, %v2550
    %v2552 = vpop.f32.mrb[0].mxu0
    %2553 = vdwg.mxu0
    %v2554 = vadd.f32 %v2121, %v2480
    %v2555 = vxor.u32 %v2554, 2147483648
    %v2556 = vmul.f32 %v2555, 1.442695
    %v2557 = vpow.pop %v2556
    %v2558 = vadd.f32 %v2557, 1.0
    %v2559 = vrcp.pop %v2558
    %v2560 = vmul.f32 1.0, %v2559
    %v2561 = vrot.slane %v2121, 2
    %v2563 = vadd.f32 %v2561, %v2482
    %v2564 = vxor.u32 %v2563, 2147483648
    %v2565 = vmul.f32 %v2564, 1.442695
    %v2566 = vpow.pop %v2565
    %v2567 = vadd.f32 %v2566, 1.0
    %v2568 = vrcp.pop %v2567
    %v2569 = vmul.f32 1.0, %v2568
    %v2570 = vmul.f32 %v2560, %v2551
    %v2571 = vrot.slane %v2121, 4
    %v2573 = vadd.f32 %v2571, %v2570
    %v2574 = vtanh.pop %v2573
    %v2575 = vsub.f32 %v2396, %v2574
    %v2576 = vmul.f32 %v2569, %v2575
    %v2577 = vadd.f32 %v2574, %v2576
    %s2578 = scalar_lea.vmem [#allocation9], 128
    %v2579 = vld [vmem:[%s2578] sm:$0xff]
    %v2580 = vld [vmem:[%s2578 + $0x8] sm:$0xff]
    %v2581 = vld [vmem:[%s2578 + $0x10] sm:$0xff]
    %v2582 = vld [vmem:[%s2578 + $0x18] sm:$0xff]
    %v2583 = vld [vmem:[%s2578 + $0x20] sm:$0xff]
    %v2584 = vld [vmem:[%s2578 + $0x28] sm:$0xff]
    %v2585 = vld [vmem:[%s2578 + $0x30] sm:$0xff]
    %v2586 = vld [vmem:[%s2578 + $0x38] sm:$0xff]
    %v2587 = vld [vmem:[%s2578 + $0x40] sm:$0xff]
    %v2588 = vld [vmem:[%s2578 + $0x48] sm:$0xff]
    %v2589 = vld [vmem:[%s2578 + $0x50] sm:$0xff]
    %v2590 = vld [vmem:[%s2578 + $0x58] sm:$0xff]
    %v2591 = vld [vmem:[%s2578 + $0x60] sm:$0xff]
    %v2592 = vld [vmem:[%s2578 + $0x68] sm:$0xff]
    %v2593 = vld [vmem:[%s2578 + $0x70] sm:$0xff]
    %v2594 = vld [vmem:[%s2578 + $0x78] sm:$0xff]
    %2595 = vmatprep.subr.mxu0 0.0
    %2596 = vmatpush1.msra.mxu0 %v2579
    %2597 = vmatprep.subr.mxu0 0.0
    %2598 = vmatpush1.msra.mxu0 %v2580
    %2599 = vmatprep.subr.mxu0 0.0
    %2600 = vmatpush1.msra.mxu0 %v2581
    %2601 = vmatprep.subr.mxu0 0.0
    %2602 = vmatpush1.msra.mxu0 %v2582
    %2603 = vmatprep.subr.mxu0 0.0
    %2604 = vmatpush1.msra.mxu0 %v2583
    %2605 = vmatprep.subr.mxu0 0.0
    %2606 = vmatpush1.msra.mxu0 %v2584
    %2607 = vmatprep.subr.mxu0 0.0
    %2608 = vmatpush1.msra.mxu0 %v2585
    %2609 = vmatprep.subr.mxu0 0.0
    %2610 = vmatpush1.msra.mxu0 %v2586
    %2611 = vmatprep.subr.mxu0 0.0
    %2612 = vmatpush1.msra.mxu0 %v2587
    %2613 = vmatprep.subr.mxu0 0.0
    %2614 = vmatpush1.msra.mxu0 %v2588
    %2615 = vmatprep.subr.mxu0 0.0
    %2616 = vmatpush1.msra.mxu0 %v2589
    %2617 = vmatprep.subr.mxu0 0.0
    %2618 = vmatpush1.msra.mxu0 %v2590
    %2619 = vmatprep.subr.mxu0 0.0
    %2620 = vmatpush1.msra.mxu0 %v2591
    %2621 = vmatprep.subr.mxu0 0.0
    %2622 = vmatpush1.msra.mxu0 %v2592
    %2623 = vmatprep.subr.mxu0 0.0
    %2624 = vmatpush1.msra.mxu0 %v2593
    %2625 = vmatprep.subr.mxu0 0.0
    %2626 = vmatpush1.msra.mxu0 %v2594
    %2627 = vmatprep.subr.mxu0 0.0
    %2628 = vmatpush1.msra.mxu0 0.0
    %2629 = vmatprep.subr.mxu0 0.0
    %2630 = vmatpush1.msra.mxu0 0.0
    %2631 = vmatprep.subr.mxu0 0.0
    %2632 = vmatpush1.msra.mxu0 0.0
    %2633 = vmatprep.subr.mxu0 0.0
    %2634 = vmatpush1.msra.mxu0 0.0
    %2635 = vmatprep.subr.mxu0 0.0
    %2636 = vmatpush1.msra.mxu0 0.0
    %2637 = vmatprep.subr.mxu0 0.0
    %2638 = vmatpush1.msra.mxu0 0.0
    %2639 = vmatprep.subr.mxu0 0.0
    %2640 = vmatpush1.msra.mxu0 0.0
    %2641 = vmatprep.subr.mxu0 0.0
    %2642 = vmatpush1.msra.mxu0 0.0
    %2643 = vmatprep.subr.mxu0 0.0
    %2644 = vmatpush1.msra.mxu0 0.0
    %2645 = vmatprep.subr.mxu0 0.0
    %2646 = vmatpush1.msra.mxu0 0.0
    %2647 = vmatprep.subr.mxu0 0.0
    %2648 = vmatpush1.msra.mxu0 0.0
    %2649 = vmatprep.subr.mxu0 0.0
    %2650 = vmatpush1.msra.mxu0 0.0
    %2651 = vmatprep.subr.mxu0 0.0
    %2652 = vmatpush1.msra.mxu0 0.0
    %2653 = vmatprep.subr.mxu0 0.0
    %2654 = vmatpush1.msra.mxu0 0.0
    %2655 = vmatprep.subr.mxu0 0.0
    %2656 = vmatpush1.msra.mxu0 0.0
    %2657 = vmatprep.subr.mxu0 0.0
    %2658 = vmatpush1.msra.mxu0 0.0
    %2659 = vmatprep.mubr.f32.mxu0 0.0
    %2660 = vmatmul.mubr.f32.gmra.mrb[0].mxu0 %v2577
    %v2661 = vpop.f32.mrb[0].mxu0
    %v2662 = vadd.f32 0.0, %v2661
    %v2663 = vpop.f32.mrb[0].mxu0
    %2664 = vdwg.mxu0
    %2665 = vmatprep.subr.mxu0 0.0
    %2666 = vmatpush1.msra.mxu0 %v2397
    %2667 = vmatprep.subr.mxu0 0.0
    %2668 = vmatpush1.msra.mxu0 %v2398
    %2669 = vmatprep.subr.mxu0 0.0
    %2670 = vmatpush1.msra.mxu0 %v2399
    %2671 = vmatprep.subr.mxu0 0.0
    %2672 = vmatpush1.msra.mxu0 %v2400
    %2673 = vmatprep.subr.mxu0 0.0
    %2674 = vmatpush1.msra.mxu0 %v2401
    %2675 = vmatprep.subr.mxu0 0.0
    %2676 = vmatpush1.msra.mxu0 %v2402
    %2677 = vmatprep.subr.mxu0 0.0
    %2678 = vmatpush1.msra.mxu0 %v2403
    %2679 = vmatprep.subr.mxu0 0.0
    %2680 = vmatpush1.msra.mxu0 %v2404
    %2681 = vmatprep.subr.mxu0 0.0
    %2682 = vmatpush1.msra.mxu0 %v2405
    %2683 = vmatprep.subr.mxu0 0.0
    %2684 = vmatpush1.msra.mxu0 %v2406
    %2685 = vmatprep.subr.mxu0 0.0
    %2686 = vmatpush1.msra.mxu0 %v2407
    %2687 = vmatprep.subr.mxu0 0.0
    %2688 = vmatpush1.msra.mxu0 %v2408
    %2689 = vmatprep.subr.mxu0 0.0
    %2690 = vmatpush1.msra.mxu0 %v2409
    %2691 = vmatprep.subr.mxu0 0.0
    %2692 = vmatpush1.msra.mxu0 %v2410
    %2693 = vmatprep.subr.mxu0 0.0
    %2694 = vmatpush1.msra.mxu0 %v2411
    %2695 = vmatprep.subr.mxu0 0.0
    %2696 = vmatpush1.msra.mxu0 %v2412
    %2697 = vmatprep.subr.mxu0 0.0
    %2698 = vmatpush1.msra.mxu0 0.0
    %2699 = vmatprep.subr.mxu0 0.0
    %2700 = vmatpush1.msra.mxu0 0.0
    %2701 = vmatprep.subr.mxu0 0.0
    %2702 = vmatpush1.msra.mxu0 0.0
    %2703 = vmatprep.subr.mxu0 0.0
    %2704 = vmatpush1.msra.mxu0 0.0
    %2705 = vmatprep.subr.mxu0 0.0
    %2706 = vmatpush1.msra.mxu0 0.0
    %2707 = vmatprep.subr.mxu0 0.0
    %2708 = vmatpush1.msra.mxu0 0.0
    %2709 = vmatprep.subr.mxu0 0.0
    %2710 = vmatpush1.msra.mxu0 0.0
    %2711 = vmatprep.subr.mxu0 0.0
    %2712 = vmatpush1.msra.mxu0 0.0
    %2713 = vmatprep.subr.mxu0 0.0
    %2714 = vmatpush1.msra.mxu0 0.0
    %2715 = vmatprep.subr.mxu0 0.0
    %2716 = vmatpush1.msra.mxu0 0.0
    %2717 = vmatprep.subr.mxu0 0.0
    %2718 = vmatpush1.msra.mxu0 0.0
    %2719 = vmatprep.subr.mxu0 0.0
    %2720 = vmatpush1.msra.mxu0 0.0
    %2721 = vmatprep.subr.mxu0 0.0
    %2722 = vmatpush1.msra.mxu0 0.0
    %2723 = vmatprep.subr.mxu0 0.0
    %2724 = vmatpush1.msra.mxu0 0.0
    %2725 = vmatprep.subr.mxu0 0.0
    %2726 = vmatpush1.msra.mxu0 0.0
    %2727 = vmatprep.subr.mxu0 0.0
    %2728 = vmatpush1.msra.mxu0 0.0
    %2729 = vmatprep.mubr.f32.mxu0 0.0
    %2730 = vmatmul.mubr.f32.gmra.mrb[0].mxu0 %v2396
    %v2731 = vpop.f32.mrb[0].mxu0
    %v2732 = vadd.f32 %v2662, %v2731
    %v2733 = vpop.f32.mrb[0].mxu0
    %2734 = vdwg.mxu0
    %2735 = vmatprep.subr.mxu0 %v2168
    %2736 = vmatpush1.msra.mxu0 %v2167
    %2737 = vmatprep.subr.mxu0 %v2171
    %2738 = vmatpush1.msra.mxu0 %v2170
    %2739 = vmatprep.subr.mxu0 %v2174
    %2740 = vmatpush1.msra.mxu0 %v2173
    %2741 = vmatprep.subr.mxu0 %v2177
    %2742 = vmatpush1.msra.mxu0 %v2176
    %2743 = vmatprep.subr.mxu0 %v2180
    %2744 = vmatpush1.msra.mxu0 %v2179
    %2745 = vmatprep.subr.mxu0 %v2183
    %2746 = vmatpush1.msra.mxu0 %v2182
    %2747 = vmatprep.subr.mxu0 %v2186
    %2748 = vmatpush1.msra.mxu0 %v2185
    %2749 = vmatprep.subr.mxu0 %v2189
    %2750 = vmatpush1.msra.mxu0 %v2188
    %2751 = vmatprep.subr.mxu0 %v2192
    %2752 = vmatpush1.msra.mxu0 %v2191
    %2753 = vmatprep.subr.mxu0 %v2195
    %2754 = vmatpush1.msra.mxu0 %v2194
    %2755 = vmatprep.subr.mxu0 %v2198
    %2756 = vmatpush1.msra.mxu0 %v2197
    %2757 = vmatprep.subr.mxu0 %v2201
    %2758 = vmatpush1.msra.mxu0 %v2200
    %2759 = vmatprep.subr.mxu0 %v2204
    %2760 = vmatpush1.msra.mxu0 %v2203
    %2761 = vmatprep.subr.mxu0 %v2207
    %2762 = vmatpush1.msra.mxu0 %v2206
    %2763 = vmatprep.subr.mxu0 %v2210
    %2764 = vmatpush1.msra.mxu0 %v2209
    %2765 = vmatprep.subr.mxu0 %v2213
    %2766 = vmatpush1.msra.mxu0 %v2212
    %2767 = vmatprep.subr.mxu0 0.0
    %2768 = vmatpush1.msra.mxu0 0.0
    %2769 = vmatprep.subr.mxu0 0.0
    %2770 = vmatpush1.msra.mxu0 0.0
    %2771 = vmatprep.subr.mxu0 0.0
    %2772 = vmatpush1.msra.mxu0 0.0
    %2773 = vmatprep.subr.mxu0 0.0
    %2774 = vmatpush1.msra.mxu0 0.0
    %2775 = vmatprep.subr.mxu0 0.0
    %2776 = vmatpush1.msra.mxu0 0.0
    %2777 = vmatprep.subr.mxu0 0.0
    %2778 = vmatpush1.msra.mxu0 0.0
    %2779 = vmatprep.subr.mxu0 0.0
    %2780 = vmatpush1.msra.mxu0 0.0
    %2781 = vmatprep.subr.mxu0 0.0
    %2782 = vmatpush1.msra.mxu0 0.0
    %2783 = vmatprep.subr.mxu0 0.0
    %2784 = vmatpush1.msra.mxu0 0.0
    %2785 = vmatprep.subr.mxu0 0.0
    %2786 = vmatpush1.msra.mxu0 0.0
    %2787 = vmatprep.subr.mxu0 0.0
    %2788 = vmatpush1.msra.mxu0 0.0
    %2789 = vmatprep.subr.mxu0 0.0
    %2790 = vmatpush1.msra.mxu0 0.0
    %2791 = vmatprep.subr.mxu0 0.0
    %2792 = vmatpush1.msra.mxu0 0.0
    %2793 = vmatprep.subr.mxu0 0.0
    %2794 = vmatpush1.msra.mxu0 0.0
    %2795 = vmatprep.subr.mxu0 0.0
    %2796 = vmatpush1.msra.mxu0 0.0
    %2797 = vmatprep.subr.mxu0 0.0
    %2798 = vmatpush1.msra.mxu0 0.0
    %2799 = vmatprep.mubr.f32.mxu0 0.0
    %2800 = vmatmul.mubr.f32.gmra.mrb[0].mxu0 %v2577
    %v2801 = vpop.f32.mrb[0].mxu0
    %v2802 = vadd.f32 %v2220, %v2801
    %v2803 = vpop.f32.mrb[0].mxu0
    %v2804 = vadd.f32 %v2224, %v2803
    %2805 = vdwg.mxu0
    %2806 = vmatprep.subr.mxu0 0.0
    %2807 = vmatpush1.msra.mxu0 %v2169
    %2808 = vmatprep.subr.mxu0 0.0
    %2809 = vmatpush1.msra.mxu0 %v2172
    %2810 = vmatprep.subr.mxu0 0.0
    %2811 = vmatpush1.msra.mxu0 %v2175
    %2812 = vmatprep.subr.mxu0 0.0
    %2813 = vmatpush1.msra.mxu0 %v2178
    %2814 = vmatprep.subr.mxu0 0.0
    %2815 = vmatpush1.msra.mxu0 %v2181
    %2816 = vmatprep.subr.mxu0 0.0
    %2817 = vmatpush1.msra.mxu0 %v2184
    %2818 = vmatprep.subr.mxu0 0.0
    %2819 = vmatpush1.msra.mxu0 %v2187
    %2820 = vmatprep.subr.mxu0 0.0
    %2821 = vmatpush1.msra.mxu0 %v2190
    %2822 = vmatprep.subr.mxu0 0.0
    %2823 = vmatpush1.msra.mxu0 %v2193
    %2824 = vmatprep.subr.mxu0 0.0
    %2825 = vmatpush1.msra.mxu0 %v2196
    %2826 = vmatprep.subr.mxu0 0.0
    %2827 = vmatpush1.msra.mxu0 %v2199
    %2828 = vmatprep.subr.mxu0 0.0
    %2829 = vmatpush1.msra.mxu0 %v2202
    %2830 = vmatprep.subr.mxu0 0.0
    %2831 = vmatpush1.msra.mxu0 %v2205
    %2832 = vmatprep.subr.mxu0 0.0
    %2833 = vmatpush1.msra.mxu0 %v2208
    %2834 = vmatprep.subr.mxu0 0.0
    %2835 = vmatpush1.msra.mxu0 %v2211
    %2836 = vmatprep.subr.mxu0 0.0
    %2837 = vmatpush1.msra.mxu0 %v2214
    %2838 = vmatprep.subr.mxu0 0.0
    %2839 = vmatpush1.msra.mxu0 0.0
    %2840 = vmatprep.subr.mxu0 0.0
    %2841 = vmatpush1.msra.mxu0 0.0
    %2842 = vmatprep.subr.mxu0 0.0
    %2843 = vmatpush1.msra.mxu0 0.0
    %2844 = vmatprep.subr.mxu0 0.0
    %2845 = vmatpush1.msra.mxu0 0.0
    %2846 = vmatprep.subr.mxu0 0.0
    %2847 = vmatpush1.msra.mxu0 0.0
    %2848 = vmatprep.subr.mxu0 0.0
    %2849 = vmatpush1.msra.mxu0 0.0
    %2850 = vmatprep.subr.mxu0 0.0
    %2851 = vmatpush1.msra.mxu0 0.0
    %2852 = vmatprep.subr.mxu0 0.0
    %2853 = vmatpush1.msra.mxu0 0.0
    %2854 = vmatprep.subr.mxu0 0.0
    %2855 = vmatpush1.msra.mxu0 0.0
    %2856 = vmatprep.subr.mxu0 0.0
    %2857 = vmatpush1.msra.mxu0 0.0
    %2858 = vmatprep.subr.mxu0 0.0
    %2859 = vmatpush1.msra.mxu0 0.0
    %2860 = vmatprep.subr.mxu0 0.0
    %2861 = vmatpush1.msra.mxu0 0.0
    %2862 = vmatprep.subr.mxu0 0.0
    %2863 = vmatpush1.msra.mxu0 0.0
    %2864 = vmatprep.subr.mxu0 0.0
    %2865 = vmatpush1.msra.mxu0 0.0
    %2866 = vmatprep.subr.mxu0 0.0
    %2867 = vmatpush1.msra.mxu0 0.0
    %2868 = vmatprep.subr.mxu0 0.0
    %2869 = vmatpush1.msra.mxu0 0.0
    %2870 = vmatprep.mubr.f32.mxu0 0.0
    %2871 = vmatmul.mubr.f32.gmra.mrb[0].mxu0 %v2577
    %v2872 = vpop.f32.mrb[0].mxu0
    %v2873 = vadd.f32 %v2228, %v2872
    %v2874 = vpop.f32.mrb[0].mxu0
    %2875 = vdwg.mxu0
    %v2876 = vadd.f32 %v2122, %v2802
    %v2877 = vxor.u32 %v2876, 2147483648
    %v2878 = vmul.f32 %v2877, 1.442695
    %v2879 = vpow.pop %v2878
    %v2880 = vadd.f32 %v2879, 1.0
    %v2881 = vrcp.pop %v2880
    %v2882 = vmul.f32 1.0, %v2881
    %v2883 = vrot.slane %v2122, 2
    %v2885 = vadd.f32 %v2883, %v2804
    %v2886 = vxor.u32 %v2885, 2147483648
    %v2887 = vmul.f32 %v2886, 1.442695
    %v2888 = vpow.pop %v2887
    %v2889 = vadd.f32 %v2888, 1.0
    %v2890 = vrcp.pop %v2889
    %v2891 = vmul.f32 1.0, %v2890
    %v2892 = vmul.f32 %v2882, %v2873
    %v2893 = vrot.slane %v2122, 4
    %v2895 = vadd.f32 %v2893, %v2892
    %v2896 = vtanh.pop %v2895
    %v2897 = vsub.f32 %v2577, %v2896
    %v2898 = vmul.f32 %v2891, %v2897
    %v2899 = vadd.f32 %v2896, %v2898
    %s2900 = scalar_lea.vmem [#allocation9], 256
    %v2901 = vld [vmem:[%s2900] sm:$0xff]
    %v2902 = vld [vmem:[%s2900 + $0x8] sm:$0xff]
    %v2903 = vld [vmem:[%s2900 + $0x10] sm:$0xff]
    %v2904 = vld [vmem:[%s2900 + $0x18] sm:$0xff]
    %v2905 = vld [vmem:[%s2900 + $0x20] sm:$0xff]
    %v2906 = vld [vmem:[%s2900 + $0x28] sm:$0xff]
    %v2907 = vld [vmem:[%s2900 + $0x30] sm:$0xff]
    %v2908 = vld [vmem:[%s2900 + $0x38] sm:$0xff]
    %v2909 = vld [vmem:[%s2900 + $0x40] sm:$0xff]
    %v2910 = vld [vmem:[%s2900 + $0x48] sm:$0xff]
    %v2911 = vld [vmem:[%s2900 + $0x50] sm:$0xff]
    %v2912 = vld [vmem:[%s2900 + $0x58] sm:$0xff]
    %v2913 = vld [vmem:[%s2900 + $0x60] sm:$0xff]
    %v2914 = vld [vmem:[%s2900 + $0x68] sm:$0xff]
    %v2915 = vld [vmem:[%s2900 + $0x70] sm:$0xff]
    %v2916 = vld [vmem:[%s2900 + $0x78] sm:$0xff]
    %2917 = vmatprep.subr.mxu0 0.0
    %2918 = vmatpush1.msra.mxu0 %v2901
    %2919 = vmatprep.subr.mxu0 0.0
    %2920 = vmatpush1.msra.mxu0 %v2902
    %2921 = vmatprep.subr.mxu0 0.0
    %2922 = vmatpush1.msra.mxu0 %v2903
    %2923 = vmatprep.subr.mxu0 0.0
    %2924 = vmatpush1.msra.mxu0 %v2904
    %2925 = vmatprep.subr.mxu0 0.0
    %2926 = vmatpush1.msra.mxu0 %v2905
    %2927 = vmatprep.subr.mxu0 0.0
    %2928 = vmatpush1.msra.mxu0 %v2906
    %2929 = vmatprep.subr.mxu0 0.0
    %2930 = vmatpush1.msra.mxu0 %v2907
    %2931 = vmatprep.subr.mxu0 0.0
    %2932 = vmatpush1.msra.mxu0 %v2908
    %2933 = vmatprep.subr.mxu0 0.0
    %2934 = vmatpush1.msra.mxu0 %v2909
    %2935 = vmatprep.subr.mxu0 0.0
    %2936 = vmatpush1.msra.mxu0 %v2910
    %2937 = vmatprep.subr.mxu0 0.0
    %2938 = vmatpush1.msra.mxu0 %v2911
    %2939 = vmatprep.subr.mxu0 0.0
    %2940 = vmatpush1.msra.mxu0 %v2912
    %2941 = vmatprep.subr.mxu0 0.0
    %2942 = vmatpush1.msra.mxu0 %v2913
    %2943 = vmatprep.subr.mxu0 0.0
    %2944 = vmatpush1.msra.mxu0 %v2914
    %2945 = vmatprep.subr.mxu0 0.0
    %2946 = vmatpush1.msra.mxu0 %v2915
    %2947 = vmatprep.subr.mxu0 0.0
    %2948 = vmatpush1.msra.mxu0 %v2916
    %2949 = vmatprep.subr.mxu0 0.0
    %2950 = vmatpush1.msra.mxu0 0.0
    %2951 = vmatprep.subr.mxu0 0.0
    %2952 = vmatpush1.msra.mxu0 0.0
    %2953 = vmatprep.subr.mxu0 0.0
    %2954 = vmatpush1.msra.mxu0 0.0
    %2955 = vmatprep.subr.mxu0 0.0
    %2956 = vmatpush1.msra.mxu0 0.0
    %2957 = vmatprep.subr.mxu0 0.0
    %2958 = vmatpush1.msra.mxu0 0.0
    %2959 = vmatprep.subr.mxu0 0.0
    %2960 = vmatpush1.msra.mxu0 0.0
    %2961 = vmatprep.subr.mxu0 0.0
    %2962 = vmatpush1.msra.mxu0 0.0
    %2963 = vmatprep.subr.mxu0 0.0
    %2964 = vmatpush1.msra.mxu0 0.0
    %2965 = vmatprep.subr.mxu0 0.0
    %2966 = vmatpush1.msra.mxu0 0.0
    %2967 = vmatprep.subr.mxu0 0.0
    %2968 = vmatpush1.msra.mxu0 0.0
    %2969 = vmatprep.subr.mxu0 0.0
    %2970 = vmatpush1.msra.mxu0 0.0
    %2971 = vmatprep.subr.mxu0 0.0
    %2972 = vmatpush1.msra.mxu0 0.0
    %2973 = vmatprep.subr.mxu0 0.0
    %2974 = vmatpush1.msra.mxu0 0.0
    %2975 = vmatprep.subr.mxu0 0.0
    %2976 = vmatpush1.msra.mxu0 0.0
    %2977 = vmatprep.subr.mxu0 0.0
    %2978 = vmatpush1.msra.mxu0 0.0
    %2979 = vmatprep.subr.mxu0 0.0
    %2980 = vmatpush1.msra.mxu0 0.0
    %2981 = vmatprep.mubr.f32.mxu0 0.0
    %2982 = vmatmul.mubr.f32.gmra.mrb[0].mxu0 %v2899
    %v2983 = vpop.f32.mrb[0].mxu0
    %v2984 = vadd.f32 0.0, %v2983
    %v2985 = vpop.f32.mrb[0].mxu0
    %2986 = vdwg.mxu0
    %v2987 = vadd.f32 %v2732, %v2984
    %2988 = vmatprep.subr.mxu0 %v2168
    %2989 = vmatpush1.msra.mxu0 %v2167
    %2990 = vmatprep.subr.mxu0 %v2171
    %2991 = vmatpush1.msra.mxu0 %v2170
    %2992 = vmatprep.subr.mxu0 %v2174
    %2993 = vmatpush1.msra.mxu0 %v2173
    %2994 = vmatprep.subr.mxu0 %v2177
    %2995 = vmatpush1.msra.mxu0 %v2176
    %2996 = vmatprep.subr.mxu0 %v2180
    %2997 = vmatpush1.msra.mxu0 %v2179
    %2998 = vmatprep.subr.mxu0 %v2183
    %2999 = vmatpush1.msra.mxu0 %v2182
    %3000 = vmatprep.subr.mxu0 %v2186
    %3001 = vmatpush1.msra.mxu0 %v2185
    %3002 = vmatprep.subr.mxu0 %v2189
    %3003 = vmatpush1.msra.mxu0 %v2188
    %3004 = vmatprep.subr.mxu0 %v2192
    %3005 = vmatpush1.msra.mxu0 %v2191
    %3006 = vmatprep.subr.mxu0 %v2195
    %3007 = vmatpush1.msra.mxu0 %v2194
    %3008 = vmatprep.subr.mxu0 %v2198
    %3009 = vmatpush1.msra.mxu0 %v2197
    %3010 = vmatprep.subr.mxu0 %v2201
    %3011 = vmatpush1.msra.mxu0 %v2200
    %3012 = vmatprep.subr.mxu0 %v2204
    %3013 = vmatpush1.msra.mxu0 %v2203
    %3014 = vmatprep.subr.mxu0 %v2207
    %3015 = vmatpush1.msra.mxu0 %v2206
    %3016 = vmatprep.subr.mxu0 %v2210
    %3017 = vmatpush1.msra.mxu0 %v2209
    %3018 = vmatprep.subr.mxu0 %v2213
    %3019 = vmatpush1.msra.mxu0 %v2212
    %3020 = vmatprep.subr.mxu0 0.0
    %3021 = vmatpush1.msra.mxu0 0.0
    %3022 = vmatprep.subr.mxu0 0.0
    %3023 = vmatpush1.msra.mxu0 0.0
    %3024 = vmatprep.subr.mxu0 0.0
    %3025 = vmatpush1.msra.mxu0 0.0
    %3026 = vmatprep.subr.mxu0 0.0
    %3027 = vmatpush1.msra.mxu0 0.0
    %3028 = vmatprep.subr.mxu0 0.0
    %3029 = vmatpush1.msra.mxu0 0.0
    %3030 = vmatprep.subr.mxu0 0.0
    %3031 = vmatpush1.msra.mxu0 0.0
    %3032 = vmatprep.subr.mxu0 0.0
    %3033 = vmatpush1.msra.mxu0 0.0
    %3034 = vmatprep.subr.mxu0 0.0
    %3035 = vmatpush1.msra.mxu0 0.0
    %3036 = vmatprep.subr.mxu0 0.0
    %3037 = vmatpush1.msra.mxu0 0.0
    %3038 = vmatprep.subr.mxu0 0.0
    %3039 = vmatpush1.msra.mxu0 0.0
    %3040 = vmatprep.subr.mxu0 0.0
    %3041 = vmatpush1.msra.mxu0 0.0
    %3042 = vmatprep.subr.mxu0 0.0
    %3043 = vmatpush1.msra.mxu0 0.0
    %3044 = vmatprep.subr.mxu0 0.0
    %3045 = vmatpush1.msra.mxu0 0.0
    %3046 = vmatprep.subr.mxu0 0.0
    %3047 = vmatpush1.msra.mxu0 0.0
    %3048 = vmatprep.subr.mxu0 0.0
    %3049 = vmatpush1.msra.mxu0 0.0
    %3050 = vmatprep.subr.mxu0 0.0
    %3051 = vmatpush1.msra.mxu0 0.0
    %3052 = vmatprep.mubr.f32.mxu0 0.0
    %3053 = vmatmul.mubr.f32.gmra.mrb[0].mxu0 %v2899
    %v3054 = vpop.f32.mrb[0].mxu0
    %v3055 = vadd.f32 %v2220, %v3054
    %v3056 = vpop.f32.mrb[0].mxu0
    %v3057 = vadd.f32 %v2224, %v3056
    %3058 = vdwg.mxu0
    %3059 = vmatprep.subr.mxu0 0.0
    %3060 = vmatpush1.msra.mxu0 %v2169
    %3061 = vmatprep.subr.mxu0 0.0
    %3062 = vmatpush1.msra.mxu0 %v2172
    %3063 = vmatprep.subr.mxu0 0.0
    %3064 = vmatpush1.msra.mxu0 %v2175
    %3065 = vmatprep.subr.mxu0 0.0
    %3066 = vmatpush1.msra.mxu0 %v2178
    %3067 = vmatprep.subr.mxu0 0.0
    %3068 = vmatpush1.msra.mxu0 %v2181
    %3069 = vmatprep.subr.mxu0 0.0
    %3070 = vmatpush1.msra.mxu0 %v2184
    %3071 = vmatprep.subr.mxu0 0.0
    %3072 = vmatpush1.msra.mxu0 %v2187
    %3073 = vmatprep.subr.mxu0 0.0
    %3074 = vmatpush1.msra.mxu0 %v2190
    %3075 = vmatprep.subr.mxu0 0.0
    %3076 = vmatpush1.msra.mxu0 %v2193
    %3077 = vmatprep.subr.mxu0 0.0
    %3078 = vmatpush1.msra.mxu0 %v2196
    %3079 = vmatprep.subr.mxu0 0.0
    %3080 = vmatpush1.msra.mxu0 %v2199
    %3081 = vmatprep.subr.mxu0 0.0
    %3082 = vmatpush1.msra.mxu0 %v2202
    %3083 = vmatprep.subr.mxu0 0.0
    %3084 = vmatpush1.msra.mxu0 %v2205
    %3085 = vmatprep.subr.mxu0 0.0
    %3086 = vmatpush1.msra.mxu0 %v2208
    %3087 = vmatprep.subr.mxu0 0.0
    %3088 = vmatpush1.msra.mxu0 %v2211
    %3089 = vmatprep.subr.mxu0 0.0
    %3090 = vmatpush1.msra.mxu0 %v2214
    %3091 = vmatprep.subr.mxu0 0.0
    %3092 = vmatpush1.msra.mxu0 0.0
    %3093 = vmatprep.subr.mxu0 0.0
    %3094 = vmatpush1.msra.mxu0 0.0
    %3095 = vmatprep.subr.mxu0 0.0
    %3096 = vmatpush1.msra.mxu0 0.0
    %3097 = vmatprep.subr.mxu0 0.0
    %3098 = vmatpush1.msra.mxu0 0.0
    %3099 = vmatprep.subr.mxu0 0.0
    %3100 = vmatpush1.msra.mxu0 0.0
    %3101 = vmatprep.subr.mxu0 0.0
    %3102 = vmatpush1.msra.mxu0 0.0
    %3103 = vmatprep.subr.mxu0 0.0
    %3104 = vmatpush1.msra.mxu0 0.0
    %3105 = vmatprep.subr.mxu0 0.0
    %3106 = vmatpush1.msra.mxu0 0.0
    %3107 = vmatprep.subr.mxu0 0.0
    %3108 = vmatpush1.msra.mxu0 0.0
    %3109 = vmatprep.subr.mxu0 0.0
    %3110 = vmatpush1.msra.mxu0 0.0
    %3111 = vmatprep.subr.mxu0 0.0
    %3112 = vmatpush1.msra.mxu0 0.0
    %3113 = vmatprep.subr.mxu0 0.0
    %3114 = vmatpush1.msra.mxu0 0.0
    %3115 = vmatprep.subr.mxu0 0.0
    %3116 = vmatpush1.msra.mxu0 0.0
    %3117 = vmatprep.subr.mxu0 0.0
    %3118 = vmatpush1.msra.mxu0 0.0
    %3119 = vmatprep.subr.mxu0 0.0
    %3120 = vmatpush1.msra.mxu0 0.0
    %3121 = vmatprep.subr.mxu0 0.0
    %3122 = vmatpush1.msra.mxu0 0.0
    %3123 = vmatprep.mubr.f32.mxu0 0.0
    %3124 = vmatmul.mubr.f32.gmra.mrb[0].mxu0 %v2899
    %v3125 = vpop.f32.mrb[0].mxu0
    %v3126 = vadd.f32 %v2228, %v3125
    %v3127 = vpop.f32.mrb[0].mxu0
    %3128 = vdwg.mxu0
    %v3129 = vadd.f32 %v2123, %v3055
    %v3130 = vxor.u32 %v3129, 2147483648
    %v3131 = vmul.f32 %v3130, 1.442695
    %v3132 = vpow.pop %v3131
    %v3133 = vadd.f32 %v3132, 1.0
    %v3134 = vrcp.pop %v3133
    %v3135 = vmul.f32 1.0, %v3134
    %v3136 = vrot.slane %v2123, 2
    %v3138 = vadd.f32 %v3136, %v3057
    %v3139 = vxor.u32 %v3138, 2147483648
    %v3140 = vmul.f32 %v3139, 1.442695
    %v3141 = vpow.pop %v3140
    %v3142 = vadd.f32 %v3141, 1.0
    %v3143 = vrcp.pop %v3142
    %v3144 = vmul.f32 1.0, %v3143
    %v3145 = vmul.f32 %v3135, %v3126
    %v3146 = vrot.slane %v2123, 4
    %v3148 = vadd.f32 %v3146, %v3145
    %v3149 = vtanh.pop %v3148
    %v3150 = vsub.f32 %v2899, %v3149
    %v3151 = vmul.f32 %v3144, %v3150
    %v3152 = vadd.f32 %v3149, %v3151
    %s3153 = scalar_lea.vmem [#allocation9], 384
    %v3154 = vld [vmem:[%s3153] sm:$0xff]
    %v3155 = vld [vmem:[%s3153 + $0x8] sm:$0xff]
    %v3156 = vld [vmem:[%s3153 + $0x10] sm:$0xff]
    %v3157 = vld [vmem:[%s3153 + $0x18] sm:$0xff]
    %v3158 = vld [vmem:[%s3153 + $0x20] sm:$0xff]
    %v3159 = vld [vmem:[%s3153 + $0x28] sm:$0xff]
    %v3160 = vld [vmem:[%s3153 + $0x30] sm:$0xff]
    %v3161 = vld [vmem:[%s3153 + $0x38] sm:$0xff]
    %v3162 = vld [vmem:[%s3153 + $0x40] sm:$0xff]
    %v3163 = vld [vmem:[%s3153 + $0x48] sm:$0xff]
    %v3164 = vld [vmem:[%s3153 + $0x50] sm:$0xff]
    %v3165 = vld [vmem:[%s3153 + $0x58] sm:$0xff]
    %v3166 = vld [vmem:[%s3153 + $0x60] sm:$0xff]
    %v3167 = vld [vmem:[%s3153 + $0x68] sm:$0xff]
    %v3168 = vld [vmem:[%s3153 + $0x70] sm:$0xff]
    %v3169 = vld [vmem:[%s3153 + $0x78] sm:$0xff]
    %3170 = vmatprep.subr.mxu0 0.0
    %3171 = vmatpush1.msra.mxu0 %v3154
    %3172 = vmatprep.subr.mxu0 0.0
    %3173 = vmatpush1.msra.mxu0 %v3155
    %3174 = vmatprep.subr.mxu0 0.0
    %3175 = vmatpush1.msra.mxu0 %v3156
    %3176 = vmatprep.subr.mxu0 0.0
    %3177 = vmatpush1.msra.mxu0 %v3157
    %3178 = vmatprep.subr.mxu0 0.0
    %3179 = vmatpush1.msra.mxu0 %v3158
    %3180 = vmatprep.subr.mxu0 0.0
    %3181 = vmatpush1.msra.mxu0 %v3159
    %3182 = vmatprep.subr.mxu0 0.0
    %3183 = vmatpush1.msra.mxu0 %v3160
    %3184 = vmatprep.subr.mxu0 0.0
    %3185 = vmatpush1.msra.mxu0 %v3161
    %3186 = vmatprep.subr.mxu0 0.0
    %3187 = vmatpush1.msra.mxu0 %v3162
    %3188 = vmatprep.subr.mxu0 0.0
    %3189 = vmatpush1.msra.mxu0 %v3163
    %3190 = vmatprep.subr.mxu0 0.0
    %3191 = vmatpush1.msra.mxu0 %v3164
    %3192 = vmatprep.subr.mxu0 0.0
    %3193 = vmatpush1.msra.mxu0 %v3165
    %3194 = vmatprep.subr.mxu0 0.0
    %3195 = vmatpush1.msra.mxu0 %v3166
    %3196 = vmatprep.subr.mxu0 0.0
    %3197 = vmatpush1.msra.mxu0 %v3167
    %3198 = vmatprep.subr.mxu0 0.0
    %3199 = vmatpush1.msra.mxu0 %v3168
    %3200 = vmatprep.subr.mxu0 0.0
    %3201 = vmatpush1.msra.mxu0 %v3169
    %3202 = vmatprep.subr.mxu0 0.0
    %3203 = vmatpush1.msra.mxu0 0.0
    %3204 = vmatprep.subr.mxu0 0.0
    %3205 = vmatpush1.msra.mxu0 0.0
    %3206 = vmatprep.subr.mxu0 0.0
    %3207 = vmatpush1.msra.mxu0 0.0
    %3208 = vmatprep.subr.mxu0 0.0
    %3209 = vmatpush1.msra.mxu0 0.0
    %3210 = vmatprep.subr.mxu0 0.0
    %3211 = vmatpush1.msra.mxu0 0.0
    %3212 = vmatprep.subr.mxu0 0.0
    %3213 = vmatpush1.msra.mxu0 0.0
    %3214 = vmatprep.subr.mxu0 0.0
    %3215 = vmatpush1.msra.mxu0 0.0
    %3216 = vmatprep.subr.mxu0 0.0
    %3217 = vmatpush1.msra.mxu0 0.0
    %3218 = vmatprep.subr.mxu0 0.0
    %3219 = vmatpush1.msra.mxu0 0.0
    %3220 = vmatprep.subr.mxu0 0.0
    %3221 = vmatpush1.msra.mxu0 0.0
    %3222 = vmatprep.subr.mxu0 0.0
    %3223 = vmatpush1.msra.mxu0 0.0
    %3224 = vmatprep.subr.mxu0 0.0
    %3225 = vmatpush1.msra.mxu0 0.0
    %3226 = vmatprep.subr.mxu0 0.0
    %3227 = vmatpush1.msra.mxu0 0.0
    %3228 = vmatprep.subr.mxu0 0.0
    %3229 = vmatpush1.msra.mxu0 0.0
    %3230 = vmatprep.subr.mxu0 0.0
    %3231 = vmatpush1.msra.mxu0 0.0
    %3232 = vmatprep.subr.mxu0 0.0
    %3233 = vmatpush1.msra.mxu0 0.0
    %3234 = vmatprep.mubr.f32.mxu0 0.0
    %3235 = vmatmul.mubr.f32.gmra.mrb[0].mxu0 %v3152
    %v3236 = vpop.f32.mrb[0].mxu0
    %v3237 = vadd.f32 0.0, %v3236
    %v3238 = vpop.f32.mrb[0].mxu0
    %3239 = vdwg.mxu0
    %v3240 = vadd.f32 %v2987, %v3237
    %3241 = vmatprep.subr.mxu0 %v2168
    %3242 = vmatpush1.msra.mxu0 %v2167
    %3243 = vmatprep.subr.mxu0 %v2171
    %3244 = vmatpush1.msra.mxu0 %v2170
    %3245 = vmatprep.subr.mxu0 %v2174
    %3246 = vmatpush1.msra.mxu0 %v2173
    %3247 = vmatprep.subr.mxu0 %v2177
    %3248 = vmatpush1.msra.mxu0 %v2176
    %3249 = vmatprep.subr.mxu0 %v2180
    %3250 = vmatpush1.msra.mxu0 %v2179
    %3251 = vmatprep.subr.mxu0 %v2183
    %3252 = vmatpush1.msra.mxu0 %v2182
    %3253 = vmatprep.subr.mxu0 %v2186
    %3254 = vmatpush1.msra.mxu0 %v2185
    %3255 = vmatprep.subr.mxu0 %v2189
    %3256 = vmatpush1.msra.mxu0 %v2188
    %3257 = vmatprep.subr.mxu0 %v2192
    %3258 = vmatpush1.msra.mxu0 %v2191
    %3259 = vmatprep.subr.mxu0 %v2195
    %3260 = vmatpush1.msra.mxu0 %v2194
    %3261 = vmatprep.subr.mxu0 %v2198
    %3262 = vmatpush1.msra.mxu0 %v2197
    %3263 = vmatprep.subr.mxu0 %v2201
    %3264 = vmatpush1.msra.mxu0 %v2200
    %3265 = vmatprep.subr.mxu0 %v2204
    %3266 = vmatpush1.msra.mxu0 %v2203
    %3267 = vmatprep.subr.mxu0 %v2207
    %3268 = vmatpush1.msra.mxu0 %v2206
    %3269 = vmatprep.subr.mxu0 %v2210
    %3270 = vmatpush1.msra.mxu0 %v2209
    %3271 = vmatprep.subr.mxu0 %v2213
    %3272 = vmatpush1.msra.mxu0 %v2212
    %3273 = vmatprep.subr.mxu0 0.0
    %3274 = vmatpush1.msra.mxu0 0.0
    %3275 = vmatprep.subr.mxu0 0.0
    %3276 = vmatpush1.msra.mxu0 0.0
    %3277 = vmatprep.subr.mxu0 0.0
    %3278 = vmatpush1.msra.mxu0 0.0
    %3279 = vmatprep.subr.mxu0 0.0
    %3280 = vmatpush1.msra.mxu0 0.0
    %3281 = vmatprep.subr.mxu0 0.0
    %3282 = vmatpush1.msra.mxu0 0.0
    %3283 = vmatprep.subr.mxu0 0.0
    %3284 = vmatpush1.msra.mxu0 0.0
    %3285 = vmatprep.subr.mxu0 0.0
    %3286 = vmatpush1.msra.mxu0 0.0
    %3287 = vmatprep.subr.mxu0 0.0
    %3288 = vmatpush1.msra.mxu0 0.0
    %3289 = vmatprep.subr.mxu0 0.0
    %3290 = vmatpush1.msra.mxu0 0.0
    %3291 = vmatprep.subr.mxu0 0.0
    %3292 = vmatpush1.msra.mxu0 0.0
    %3293 = vmatprep.subr.mxu0 0.0
    %3294 = vmatpush1.msra.mxu0 0.0
    %3295 = vmatprep.subr.mxu0 0.0
    %3296 = vmatpush1.msra.mxu0 0.0
    %3297 = vmatprep.subr.mxu0 0.0
    %3298 = vmatpush1.msra.mxu0 0.0
    %3299 = vmatprep.subr.mxu0 0.0
    %3300 = vmatpush1.msra.mxu0 0.0
    %3301 = vmatprep.subr.mxu0 0.0
    %3302 = vmatpush1.msra.mxu0 0.0
    %3303 = vmatprep.subr.mxu0 0.0
    %3304 = vmatpush1.msra.mxu0 0.0
    %3305 = vmatprep.mubr.f32.mxu0 0.0
    %3306 = vmatmul.mubr.f32.gmra.mrb[0].mxu0 %v3152
    %v3307 = vpop.f32.mrb[0].mxu0
    %v3308 = vadd.f32 %v2220, %v3307
    %v3309 = vpop.f32.mrb[0].mxu0
    %v3310 = vadd.f32 %v2224, %v3309
    %3311 = vdwg.mxu0
    %3312 = vmatprep.subr.mxu0 0.0
    %3313 = vmatpush1.msra.mxu0 %v2169
    %3314 = vmatprep.subr.mxu0 0.0
    %3315 = vmatpush1.msra.mxu0 %v2172
    %3316 = vmatprep.subr.mxu0 0.0
    %3317 = vmatpush1.msra.mxu0 %v2175
    %3318 = vmatprep.subr.mxu0 0.0
    %3319 = vmatpush1.msra.mxu0 %v2178
    %3320 = vmatprep.subr.mxu0 0.0
    %3321 = vmatpush1.msra.mxu0 %v2181
    %3322 = vmatprep.subr.mxu0 0.0
    %3323 = vmatpush1.msra.mxu0 %v2184
    %3324 = vmatprep.subr.mxu0 0.0
    %3325 = vmatpush1.msra.mxu0 %v2187
    %3326 = vmatprep.subr.mxu0 0.0
    %3327 = vmatpush1.msra.mxu0 %v2190
    %3328 = vmatprep.subr.mxu0 0.0
    %3329 = vmatpush1.msra.mxu0 %v2193
    %3330 = vmatprep.subr.mxu0 0.0
    %3331 = vmatpush1.msra.mxu0 %v2196
    %3332 = vmatprep.subr.mxu0 0.0
    %3333 = vmatpush1.msra.mxu0 %v2199
    %3334 = vmatprep.subr.mxu0 0.0
    %3335 = vmatpush1.msra.mxu0 %v2202
    %3336 = vmatprep.subr.mxu0 0.0
    %3337 = vmatpush1.msra.mxu0 %v2205
    %3338 = vmatprep.subr.mxu0 0.0
    %3339 = vmatpush1.msra.mxu0 %v2208
    %3340 = vmatprep.subr.mxu0 0.0
    %3341 = vmatpush1.msra.mxu0 %v2211
    %3342 = vmatprep.subr.mxu0 0.0
    %3343 = vmatpush1.msra.mxu0 %v2214
    %3344 = vmatprep.subr.mxu0 0.0
    %3345 = vmatpush1.msra.mxu0 0.0
    %3346 = vmatprep.subr.mxu0 0.0
    %3347 = vmatpush1.msra.mxu0 0.0
    %3348 = vmatprep.subr.mxu0 0.0
    %3349 = vmatpush1.msra.mxu0 0.0
    %3350 = vmatprep.subr.mxu0 0.0
    %3351 = vmatpush1.msra.mxu0 0.0
    %3352 = vmatprep.subr.mxu0 0.0
    %3353 = vmatpush1.msra.mxu0 0.0
    %3354 = vmatprep.subr.mxu0 0.0
    %3355 = vmatpush1.msra.mxu0 0.0
    %3356 = vmatprep.subr.mxu0 0.0
    %3357 = vmatpush1.msra.mxu0 0.0
    %3358 = vmatprep.subr.mxu0 0.0
    %3359 = vmatpush1.msra.mxu0 0.0
    %3360 = vmatprep.subr.mxu0 0.0
    %3361 = vmatpush1.msra.mxu0 0.0
    %3362 = vmatprep.subr.mxu0 0.0
    %3363 = vmatpush1.msra.mxu0 0.0
    %3364 = vmatprep.subr.mxu0 0.0
    %3365 = vmatpush1.msra.mxu0 0.0
    %3366 = vmatprep.subr.mxu0 0.0
    %3367 = vmatpush1.msra.mxu0 0.0
    %3368 = vmatprep.subr.mxu0 0.0
    %3369 = vmatpush1.msra.mxu0 0.0
    %3370 = vmatprep.subr.mxu0 0.0
    %3371 = vmatpush1.msra.mxu0 0.0
    %3372 = vmatprep.subr.mxu0 0.0
    %3373 = vmatpush1.msra.mxu0 0.0
    %3374 = vmatprep.subr.mxu0 0.0
    %3375 = vmatpush1.msra.mxu0 0.0
    %3376 = vmatprep.mubr.f32.mxu0 0.0
    %3377 = vmatmul.mubr.f32.gmra.mrb[0].mxu0 %v3152
    %v3378 = vpop.f32.mrb[0].mxu0
    %v3379 = vadd.f32 %v2228, %v3378
    %v3380 = vpop.f32.mrb[0].mxu0
    %3381 = vdwg.mxu0
    %v3382 = vadd.f32 %v2155, %v3308
    %v3383 = vxor.u32 %v3382, 2147483648
    %v3384 = vmul.f32 %v3383, 1.442695
    %v3385 = vpow.pop %v3384
    %v3386 = vadd.f32 %v3385, 1.0
    %v3387 = vrcp.pop %v3386
    %v3388 = vmul.f32 1.0, %v3387
    %v3389 = vrot.slane %v2155, 2
    %v3391 = vadd.f32 %v3389, %v3310
    %v3392 = vxor.u32 %v3391, 2147483648
    %v3393 = vmul.f32 %v3392, 1.442695
    %v3394 = vpow.pop %v3393
    %v3395 = vadd.f32 %v3394, 1.0
    %v3396 = vrcp.pop %v3395
    %v3397 = vmul.f32 1.0, %v3396
    %v3398 = vmul.f32 %v3388, %v3379
    %v3399 = vrot.slane %v2155, 4
    %v3401 = vadd.f32 %v3399, %v3398
    %v3402 = vtanh.pop %v3401
    %v3403 = vsub.f32 %v3152, %v3402
    %v3404 = vmul.f32 %v3397, %v3403
    %v3405 = vadd.f32 %v3402, %v3404
    %s3406 = scalar_lea.vmem [#allocation9], 512
    %v3407 = vld [vmem:[%s3406] sm:$0xff]
    %v3408 = vld [vmem:[%s3406 + $0x8] sm:$0xff]
    %v3409 = vld [vmem:[%s3406 + $0x10] sm:$0xff]
    %v3410 = vld [vmem:[%s3406 + $0x18] sm:$0xff]
    %v3411 = vld [vmem:[%s3406 + $0x20] sm:$0xff]
    %v3412 = vld [vmem:[%s3406 + $0x28] sm:$0xff]
    %v3413 = vld [vmem:[%s3406 + $0x30] sm:$0xff]
    %v3414 = vld [vmem:[%s3406 + $0x38] sm:$0xff]
    %v3415 = vld [vmem:[%s3406 + $0x40] sm:$0xff]
    %v3416 = vld [vmem:[%s3406 + $0x48] sm:$0xff]
    %v3417 = vld [vmem:[%s3406 + $0x50] sm:$0xff]
    %v3418 = vld [vmem:[%s3406 + $0x58] sm:$0xff]
    %v3419 = vld [vmem:[%s3406 + $0x60] sm:$0xff]
    %v3420 = vld [vmem:[%s3406 + $0x68] sm:$0xff]
    %v3421 = vld [vmem:[%s3406 + $0x70] sm:$0xff]
    %v3422 = vld [vmem:[%s3406 + $0x78] sm:$0xff]
    %3423 = vmatprep.subr.mxu0 0.0
    %3424 = vmatpush1.msra.mxu0 %v3407
    %3425 = vmatprep.subr.mxu0 0.0
    %3426 = vmatpush1.msra.mxu0 %v3408
    %3427 = vmatprep.subr.mxu0 0.0
    %3428 = vmatpush1.msra.mxu0 %v3409
    %3429 = vmatprep.subr.mxu0 0.0
    %3430 = vmatpush1.msra.mxu0 %v3410
    %3431 = vmatprep.subr.mxu0 0.0
    %3432 = vmatpush1.msra.mxu0 %v3411
    %3433 = vmatprep.subr.mxu0 0.0
    %3434 = vmatpush1.msra.mxu0 %v3412
    %3435 = vmatprep.subr.mxu0 0.0
    %3436 = vmatpush1.msra.mxu0 %v3413
    %3437 = vmatprep.subr.mxu0 0.0
    %3438 = vmatpush1.msra.mxu0 %v3414
    %3439 = vmatprep.subr.mxu0 0.0
    %3440 = vmatpush1.msra.mxu0 %v3415
    %3441 = vmatprep.subr.mxu0 0.0
    %3442 = vmatpush1.msra.mxu0 %v3416
    %3443 = vmatprep.subr.mxu0 0.0
    %3444 = vmatpush1.msra.mxu0 %v3417
    %3445 = vmatprep.subr.mxu0 0.0
    %3446 = vmatpush1.msra.mxu0 %v3418
    %3447 = vmatprep.subr.mxu0 0.0
    %3448 = vmatpush1.msra.mxu0 %v3419
    %3449 = vmatprep.subr.mxu0 0.0
    %3450 = vmatpush1.msra.mxu0 %v3420
    %3451 = vmatprep.subr.mxu0 0.0
    %3452 = vmatpush1.msra.mxu0 %v3421
    %3453 = vmatprep.subr.mxu0 0.0
    %3454 = vmatpush1.msra.mxu0 %v3422
    %3455 = vmatprep.subr.mxu0 0.0
    %3456 = vmatpush1.msra.mxu0 0.0
    %3457 = vmatprep.subr.mxu0 0.0
    %3458 = vmatpush1.msra.mxu0 0.0
    %3459 = vmatprep.subr.mxu0 0.0
    %3460 = vmatpush1.msra.mxu0 0.0
    %3461 = vmatprep.subr.mxu0 0.0
    %3462 = vmatpush1.msra.mxu0 0.0
    %3463 = vmatprep.subr.mxu0 0.0
    %3464 = vmatpush1.msra.mxu0 0.0
    %3465 = vmatprep.subr.mxu0 0.0
    %3466 = vmatpush1.msra.mxu0 0.0
    %3467 = vmatprep.subr.mxu0 0.0
    %3468 = vmatpush1.msra.mxu0 0.0
    %3469 = vmatprep.subr.mxu0 0.0
    %3470 = vmatpush1.msra.mxu0 0.0
    %3471 = vmatprep.subr.mxu0 0.0
    %3472 = vmatpush1.msra.mxu0 0.0
    %3473 = vmatprep.subr.mxu0 0.0
    %3474 = vmatpush1.msra.mxu0 0.0
    %3475 = vmatprep.subr.mxu0 0.0
    %3476 = vmatpush1.msra.mxu0 0.0
    %3477 = vmatprep.subr.mxu0 0.0
    %3478 = vmatpush1.msra.mxu0 0.0
    %3479 = vmatprep.subr.mxu0 0.0
    %3480 = vmatpush1.msra.mxu0 0.0
    %3481 = vmatprep.subr.mxu0 0.0
    %3482 = vmatpush1.msra.mxu0 0.0
    %3483 = vmatprep.subr.mxu0 0.0
    %3484 = vmatpush1.msra.mxu0 0.0
    %3485 = vmatprep.subr.mxu0 0.0
    %3486 = vmatpush1.msra.mxu0 0.0
    %3487 = vmatprep.mubr.f32.mxu0 0.0
    %3488 = vmatmul.mubr.f32.gmra.mrb[0].mxu0 %v3405
    %v3489 = vpop.f32.mrb[0].mxu0
    %v3490 = vadd.f32 0.0, %v3489
    %v3491 = vpop.f32.mrb[0].mxu0
    %3492 = vdwg.mxu0
    %v3493 = vadd.f32 %v3240, %v3490
    %3494 = vmatprep.subr.mxu0 %v2168
    %3495 = vmatpush1.msra.mxu0 %v2167
    %3496 = vmatprep.subr.mxu0 %v2171
    %3497 = vmatpush1.msra.mxu0 %v2170
    %3498 = vmatprep.subr.mxu0 %v2174
    %3499 = vmatpush1.msra.mxu0 %v2173
    %3500 = vmatprep.subr.mxu0 %v2177
    %3501 = vmatpush1.msra.mxu0 %v2176
    %3502 = vmatprep.subr.mxu0 %v2180
    %3503 = vmatpush1.msra.mxu0 %v2179
    %3504 = vmatprep.subr.mxu0 %v2183
    %3505 = vmatpush1.msra.mxu0 %v2182
    %3506 = vmatprep.subr.mxu0 %v2186
    %3507 = vmatpush1.msra.mxu0 %v2185
    %3508 = vmatprep.subr.mxu0 %v2189
    %3509 = vmatpush1.msra.mxu0 %v2188
    %3510 = vmatprep.subr.mxu0 %v2192
    %3511 = vmatpush1.msra.mxu0 %v2191
    %3512 = vmatprep.subr.mxu0 %v2195
    %3513 = vmatpush1.msra.mxu0 %v2194
    %3514 = vmatprep.subr.mxu0 %v2198
    %3515 = vmatpush1.msra.mxu0 %v2197
    %3516 = vmatprep.subr.mxu0 %v2201
    %3517 = vmatpush1.msra.mxu0 %v2200
    %3518 = vmatprep.subr.mxu0 %v2204
    %3519 = vmatpush1.msra.mxu0 %v2203
    %3520 = vmatprep.subr.mxu0 %v2207
    %3521 = vmatpush1.msra.mxu0 %v2206
    %3522 = vmatprep.subr.mxu0 %v2210
    %3523 = vmatpush1.msra.mxu0 %v2209
    %3524 = vmatprep.subr.mxu0 %v2213
    %3525 = vmatpush1.msra.mxu0 %v2212
    %3526 = vmatprep.subr.mxu0 0.0
    %3527 = vmatpush1.msra.mxu0 0.0
    %3528 = vmatprep.subr.mxu0 0.0
    %3529 = vmatpush1.msra.mxu0 0.0
    %3530 = vmatprep.subr.mxu0 0.0
    %3531 = vmatpush1.msra.mxu0 0.0
    %3532 = vmatprep.subr.mxu0 0.0
    %3533 = vmatpush1.msra.mxu0 0.0
    %3534 = vmatprep.subr.mxu0 0.0
    %3535 = vmatpush1.msra.mxu0 0.0
    %3536 = vmatprep.subr.mxu0 0.0
    %3537 = vmatpush1.msra.mxu0 0.0
    %3538 = vmatprep.subr.mxu0 0.0
    %3539 = vmatpush1.msra.mxu0 0.0
    %3540 = vmatprep.subr.mxu0 0.0
    %3541 = vmatpush1.msra.mxu0 0.0
    %3542 = vmatprep.subr.mxu0 0.0
    %3543 = vmatpush1.msra.mxu0 0.0
    %3544 = vmatprep.subr.mxu0 0.0
    %3545 = vmatpush1.msra.mxu0 0.0
    %3546 = vmatprep.subr.mxu0 0.0
    %3547 = vmatpush1.msra.mxu0 0.0
    %3548 = vmatprep.subr.mxu0 0.0
    %3549 = vmatpush1.msra.mxu0 0.0
    %3550 = vmatprep.subr.mxu0 0.0
    %3551 = vmatpush1.msra.mxu0 0.0
    %3552 = vmatprep.subr.mxu0 0.0
    %3553 = vmatpush1.msra.mxu0 0.0
    %3554 = vmatprep.subr.mxu0 0.0
    %3555 = vmatpush1.msra.mxu0 0.0
    %3556 = vmatprep.subr.mxu0 0.0
    %3557 = vmatpush1.msra.mxu0 0.0
    %3558 = vmatprep.mubr.f32.mxu0 0.0
    %3559 = vmatmul.mubr.f32.gmra.mrb[0].mxu0 %v3405
    %v3560 = vpop.f32.mrb[0].mxu0
    %v3561 = vadd.f32 %v2220, %v3560
    %v3562 = vpop.f32.mrb[0].mxu0
    %v3563 = vadd.f32 %v2224, %v3562
    %3564 = vdwg.mxu0
    %3565 = vmatprep.subr.mxu0 0.0
    %3566 = vmatpush1.msra.mxu0 %v2169
    %3567 = vmatprep.subr.mxu0 0.0
    %3568 = vmatpush1.msra.mxu0 %v2172
    %3569 = vmatprep.subr.mxu0 0.0
    %3570 = vmatpush1.msra.mxu0 %v2175
    %3571 = vmatprep.subr.mxu0 0.0
    %3572 = vmatpush1.msra.mxu0 %v2178
    %3573 = vmatprep.subr.mxu0 0.0
    %3574 = vmatpush1.msra.mxu0 %v2181
    %3575 = vmatprep.subr.mxu0 0.0
    %3576 = vmatpush1.msra.mxu0 %v2184
    %3577 = vmatprep.subr.mxu0 0.0
    %3578 = vmatpush1.msra.mxu0 %v2187
    %3579 = vmatprep.subr.mxu0 0.0
    %3580 = vmatpush1.msra.mxu0 %v2190
    %3581 = vmatprep.subr.mxu0 0.0
    %3582 = vmatpush1.msra.mxu0 %v2193
    %3583 = vmatprep.subr.mxu0 0.0
    %3584 = vmatpush1.msra.mxu0 %v2196
    %3585 = vmatprep.subr.mxu0 0.0
    %3586 = vmatpush1.msra.mxu0 %v2199
    %3587 = vmatprep.subr.mxu0 0.0
    %3588 = vmatpush1.msra.mxu0 %v2202
    %3589 = vmatprep.subr.mxu0 0.0
    %3590 = vmatpush1.msra.mxu0 %v2205
    %3591 = vmatprep.subr.mxu0 0.0
    %3592 = vmatpush1.msra.mxu0 %v2208
    %3593 = vmatprep.subr.mxu0 0.0
    %3594 = vmatpush1.msra.mxu0 %v2211
    %3595 = vmatprep.subr.mxu0 0.0
    %3596 = vmatpush1.msra.mxu0 %v2214
    %3597 = vmatprep.subr.mxu0 0.0
    %3598 = vmatpush1.msra.mxu0 0.0
    %3599 = vmatprep.subr.mxu0 0.0
    %3600 = vmatpush1.msra.mxu0 0.0
    %3601 = vmatprep.subr.mxu0 0.0
    %3602 = vmatpush1.msra.mxu0 0.0
    %3603 = vmatprep.subr.mxu0 0.0
    %3604 = vmatpush1.msra.mxu0 0.0
    %3605 = vmatprep.subr.mxu0 0.0
    %3606 = vmatpush1.msra.mxu0 0.0
    %3607 = vmatprep.subr.mxu0 0.0
    %3608 = vmatpush1.msra.mxu0 0.0
    %3609 = vmatprep.subr.mxu0 0.0
    %3610 = vmatpush1.msra.mxu0 0.0
    %3611 = vmatprep.subr.mxu0 0.0
    %3612 = vmatpush1.msra.mxu0 0.0
    %3613 = vmatprep.subr.mxu0 0.0
    %3614 = vmatpush1.msra.mxu0 0.0
    %3615 = vmatprep.subr.mxu0 0.0
    %3616 = vmatpush1.msra.mxu0 0.0
    %3617 = vmatprep.subr.mxu0 0.0
    %3618 = vmatpush1.msra.mxu0 0.0
    %3619 = vmatprep.subr.mxu0 0.0
    %3620 = vmatpush1.msra.mxu0 0.0
    %3621 = vmatprep.subr.mxu0 0.0
    %3622 = vmatpush1.msra.mxu0 0.0
    %3623 = vmatprep.subr.mxu0 0.0
    %3624 = vmatpush1.msra.mxu0 0.0
    %3625 = vmatprep.subr.mxu0 0.0
    %3626 = vmatpush1.msra.mxu0 0.0
    %3627 = vmatprep.subr.mxu0 0.0
    %3628 = vmatpush1.msra.mxu0 0.0
    %3629 = vmatprep.mubr.f32.mxu0 0.0
    %3630 = vmatmul.mubr.f32.gmra.mrb[0].mxu0 %v3405
    %v3631 = vpop.f32.mrb[0].mxu0
    %v3632 = vadd.f32 %v2228, %v3631
    %v3633 = vpop.f32.mrb[0].mxu0
    %3634 = vdwg.mxu0
    %v3635 = vadd.f32 %v2156, %v3561
    %v3636 = vxor.u32 %v3635, 2147483648
    %v3637 = vmul.f32 %v3636, 1.442695
    %v3638 = vpow.pop %v3637
    %v3639 = vadd.f32 %v3638, 1.0
    %v3640 = vrcp.pop %v3639
    %v3641 = vmul.f32 1.0, %v3640
    %v3642 = vrot.slane %v2156, 2
    %v3644 = vadd.f32 %v3642, %v3563
    %v3645 = vxor.u32 %v3644, 2147483648
    %v3646 = vmul.f32 %v3645, 1.442695
    %v3647 = vpow.pop %v3646
    %v3648 = vadd.f32 %v3647, 1.0
    %v3649 = vrcp.pop %v3648
    %v3650 = vmul.f32 1.0, %v3649
    %v3651 = vmul.f32 %v3641, %v3632
    %v3652 = vrot.slane %v2156, 4
    %v3654 = vadd.f32 %v3652, %v3651
    %v3655 = vtanh.pop %v3654
    %v3656 = vsub.f32 %v3405, %v3655
    %v3657 = vmul.f32 %v3650, %v3656
    %v3658 = vadd.f32 %v3655, %v3657
    %s3659 = scalar_lea.vmem [#allocation9], 640
    %v3660 = vld [vmem:[%s3659] sm:$0xff]
    %v3661 = vld [vmem:[%s3659 + $0x8] sm:$0xff]
    %v3662 = vld [vmem:[%s3659 + $0x10] sm:$0xff]
    %v3663 = vld [vmem:[%s3659 + $0x18] sm:$0xff]
    %v3664 = vld [vmem:[%s3659 + $0x20] sm:$0xff]
    %v3665 = vld [vmem:[%s3659 + $0x28] sm:$0xff]
    %v3666 = vld [vmem:[%s3659 + $0x30] sm:$0xff]
    %v3667 = vld [vmem:[%s3659 + $0x38] sm:$0xff]
    %v3668 = vld [vmem:[%s3659 + $0x40] sm:$0xff]
    %v3669 = vld [vmem:[%s3659 + $0x48] sm:$0xff]
    %v3670 = vld [vmem:[%s3659 + $0x50] sm:$0xff]
    %v3671 = vld [vmem:[%s3659 + $0x58] sm:$0xff]
    %v3672 = vld [vmem:[%s3659 + $0x60] sm:$0xff]
    %v3673 = vld [vmem:[%s3659 + $0x68] sm:$0xff]
    %v3674 = vld [vmem:[%s3659 + $0x70] sm:$0xff]
    %v3675 = vld [vmem:[%s3659 + $0x78] sm:$0xff]
    %3676 = vmatprep.subr.mxu0 0.0
    %3677 = vmatpush1.msra.mxu0 %v3660
    %3678 = vmatprep.subr.mxu0 0.0
    %3679 = vmatpush1.msra.mxu0 %v3661
    %3680 = vmatprep.subr.mxu0 0.0
    %3681 = vmatpush1.msra.mxu0 %v3662
    %3682 = vmatprep.subr.mxu0 0.0
    %3683 = vmatpush1.msra.mxu0 %v3663
    %3684 = vmatprep.subr.mxu0 0.0
    %3685 = vmatpush1.msra.mxu0 %v3664
    %3686 = vmatprep.subr.mxu0 0.0
    %3687 = vmatpush1.msra.mxu0 %v3665
    %3688 = vmatprep.subr.mxu0 0.0
    %3689 = vmatpush1.msra.mxu0 %v3666
    %3690 = vmatprep.subr.mxu0 0.0
    %3691 = vmatpush1.msra.mxu0 %v3667
    %3692 = vmatprep.subr.mxu0 0.0
    %3693 = vmatpush1.msra.mxu0 %v3668
    %3694 = vmatprep.subr.mxu0 0.0
    %3695 = vmatpush1.msra.mxu0 %v3669
    %3696 = vmatprep.subr.mxu0 0.0
    %3697 = vmatpush1.msra.mxu0 %v3670
    %3698 = vmatprep.subr.mxu0 0.0
    %3699 = vmatpush1.msra.mxu0 %v3671
    %3700 = vmatprep.subr.mxu0 0.0
    %3701 = vmatpush1.msra.mxu0 %v3672
    %3702 = vmatprep.subr.mxu0 0.0
    %3703 = vmatpush1.msra.mxu0 %v3673
    %3704 = vmatprep.subr.mxu0 0.0
    %3705 = vmatpush1.msra.mxu0 %v3674
    %3706 = vmatprep.subr.mxu0 0.0
    %3707 = vmatpush1.msra.mxu0 %v3675
    %3708 = vmatprep.subr.mxu0 0.0
    %3709 = vmatpush1.msra.mxu0 0.0
    %3710 = vmatprep.subr.mxu0 0.0
    %3711 = vmatpush1.msra.mxu0 0.0
    %3712 = vmatprep.subr.mxu0 0.0
    %3713 = vmatpush1.msra.mxu0 0.0
    %3714 = vmatprep.subr.mxu0 0.0
    %3715 = vmatpush1.msra.mxu0 0.0
    %3716 = vmatprep.subr.mxu0 0.0
    %3717 = vmatpush1.msra.mxu0 0.0
    %3718 = vmatprep.subr.mxu0 0.0
    %3719 = vmatpush1.msra.mxu0 0.0
    %3720 = vmatprep.subr.mxu0 0.0
    %3721 = vmatpush1.msra.mxu0 0.0
    %3722 = vmatprep.subr.mxu0 0.0
    %3723 = vmatpush1.msra.mxu0 0.0
    %3724 = vmatprep.subr.mxu0 0.0
    %3725 = vmatpush1.msra.mxu0 0.0
    %3726 = vmatprep.subr.mxu0 0.0
    %3727 = vmatpush1.msra.mxu0 0.0
    %3728 = vmatprep.subr.mxu0 0.0
    %3729 = vmatpush1.msra.mxu0 0.0
    %3730 = vmatprep.subr.mxu0 0.0
    %3731 = vmatpush1.msra.mxu0 0.0
    %3732 = vmatprep.subr.mxu0 0.0
    %3733 = vmatpush1.msra.mxu0 0.0
    %3734 = vmatprep.subr.mxu0 0.0
    %3735 = vmatpush1.msra.mxu0 0.0
    %3736 = vmatprep.subr.mxu0 0.0
    %3737 = vmatpush1.msra.mxu0 0.0
    %3738 = vmatprep.subr.mxu0 0.0
    %3739 = vmatpush1.msra.mxu0 0.0
    %3740 = vmatprep.mubr.f32.mxu0 0.0
    %3741 = vmatmul.mubr.f32.gmra.mrb[0].mxu0 %v3658
    %v3742 = vpop.f32.mrb[0].mxu0
    %v3743 = vadd.f32 0.0, %v3742
    %v3744 = vpop.f32.mrb[0].mxu0
    %3745 = vdwg.mxu0
    %v3746 = vadd.f32 %v3493, %v3743
    %3747 = vmatprep.subr.mxu0 %v2168
    %3748 = vmatpush1.msra.mxu0 %v2167
    %3749 = vmatprep.subr.mxu0 %v2171
    %3750 = vmatpush1.msra.mxu0 %v2170
    %3751 = vmatprep.subr.mxu0 %v2174
    %3752 = vmatpush1.msra.mxu0 %v2173
    %3753 = vmatprep.subr.mxu0 %v2177
    %3754 = vmatpush1.msra.mxu0 %v2176
    %3755 = vmatprep.subr.mxu0 %v2180
    %3756 = vmatpush1.msra.mxu0 %v2179
    %3757 = vmatprep.subr.mxu0 %v2183
    %3758 = vmatpush1.msra.mxu0 %v2182
    %3759 = vmatprep.subr.mxu0 %v2186
    %3760 = vmatpush1.msra.mxu0 %v2185
    %3761 = vmatprep.subr.mxu0 %v2189
    %3762 = vmatpush1.msra.mxu0 %v2188
    %3763 = vmatprep.subr.mxu0 %v2192
    %3764 = vmatpush1.msra.mxu0 %v2191
    %3765 = vmatprep.subr.mxu0 %v2195
    %3766 = vmatpush1.msra.mxu0 %v2194
    %3767 = vmatprep.subr.mxu0 %v2198
    %3768 = vmatpush1.msra.mxu0 %v2197
    %3769 = vmatprep.subr.mxu0 %v2201
    %3770 = vmatpush1.msra.mxu0 %v2200
    %3771 = vmatprep.subr.mxu0 %v2204
    %3772 = vmatpush1.msra.mxu0 %v2203
    %3773 = vmatprep.subr.mxu0 %v2207
    %3774 = vmatpush1.msra.mxu0 %v2206
    %3775 = vmatprep.subr.mxu0 %v2210
    %3776 = vmatpush1.msra.mxu0 %v2209
    %3777 = vmatprep.subr.mxu0 %v2213
    %3778 = vmatpush1.msra.mxu0 %v2212
    %3779 = vmatprep.subr.mxu0 0.0
    %3780 = vmatpush1.msra.mxu0 0.0
    %3781 = vmatprep.subr.mxu0 0.0
    %3782 = vmatpush1.msra.mxu0 0.0
    %3783 = vmatprep.subr.mxu0 0.0
    %3784 = vmatpush1.msra.mxu0 0.0
    %3785 = vmatprep.subr.mxu0 0.0
    %3786 = vmatpush1.msra.mxu0 0.0
    %3787 = vmatprep.subr.mxu0 0.0
    %3788 = vmatpush1.msra.mxu0 0.0
    %3789 = vmatprep.subr.mxu0 0.0
    %3790 = vmatpush1.msra.mxu0 0.0
    %3791 = vmatprep.subr.mxu0 0.0
    %3792 = vmatpush1.msra.mxu0 0.0
    %3793 = vmatprep.subr.mxu0 0.0
    %3794 = vmatpush1.msra.mxu0 0.0
    %3795 = vmatprep.subr.mxu0 0.0
    %3796 = vmatpush1.msra.mxu0 0.0
    %3797 = vmatprep.subr.mxu0 0.0
    %3798 = vmatpush1.msra.mxu0 0.0
    %3799 = vmatprep.subr.mxu0 0.0
    %3800 = vmatpush1.msra.mxu0 0.0
    %3801 = vmatprep.subr.mxu0 0.0
    %3802 = vmatpush1.msra.mxu0 0.0
    %3803 = vmatprep.subr.mxu0 0.0
    %3804 = vmatpush1.msra.mxu0 0.0
    %3805 = vmatprep.subr.mxu0 0.0
    %3806 = vmatpush1.msra.mxu0 0.0
    %3807 = vmatprep.subr.mxu0 0.0
    %3808 = vmatpush1.msra.mxu0 0.0
    %3809 = vmatprep.subr.mxu0 0.0
    %3810 = vmatpush1.msra.mxu0 0.0
    %3811 = vmatprep.mubr.f32.mxu0 0.0
    %3812 = vmatmul.mubr.f32.gmra.mrb[0].mxu0 %v3658
    %v3813 = vpop.f32.mrb[0].mxu0
    %v3814 = vadd.f32 %v2220, %v3813
    %v3815 = vpop.f32.mrb[0].mxu0
    %v3816 = vadd.f32 %v2224, %v3815
    %3817 = vdwg.mxu0
    %3818 = vmatprep.subr.mxu0 0.0
    %3819 = vmatpush1.msra.mxu0 %v2169
    %3820 = vmatprep.subr.mxu0 0.0
    %3821 = vmatpush1.msra.mxu0 %v2172
    %3822 = vmatprep.subr.mxu0 0.0
    %3823 = vmatpush1.msra.mxu0 %v2175
    %3824 = vmatprep.subr.mxu0 0.0
    %3825 = vmatpush1.msra.mxu0 %v2178
    %3826 = vmatprep.subr.mxu0 0.0
    %3827 = vmatpush1.msra.mxu0 %v2181
    %3828 = vmatprep.subr.mxu0 0.0
    %3829 = vmatpush1.msra.mxu0 %v2184
    %3830 = vmatprep.subr.mxu0 0.0
    %3831 = vmatpush1.msra.mxu0 %v2187
    %3832 = vmatprep.subr.mxu0 0.0
    %3833 = vmatpush1.msra.mxu0 %v2190
    %3834 = vmatprep.subr.mxu0 0.0
    %3835 = vmatpush1.msra.mxu0 %v2193
    %3836 = vmatprep.subr.mxu0 0.0
    %3837 = vmatpush1.msra.mxu0 %v2196
    %3838 = vmatprep.subr.mxu0 0.0
    %3839 = vmatpush1.msra.mxu0 %v2199
    %3840 = vmatprep.subr.mxu0 0.0
    %3841 = vmatpush1.msra.mxu0 %v2202
    %3842 = vmatprep.subr.mxu0 0.0
    %3843 = vmatpush1.msra.mxu0 %v2205
    %3844 = vmatprep.subr.mxu0 0.0
    %3845 = vmatpush1.msra.mxu0 %v2208
    %3846 = vmatprep.subr.mxu0 0.0
    %3847 = vmatpush1.msra.mxu0 %v2211
    %3848 = vmatprep.subr.mxu0 0.0
    %3849 = vmatpush1.msra.mxu0 %v2214
    %3850 = vmatprep.subr.mxu0 0.0
    %3851 = vmatpush1.msra.mxu0 0.0
    %3852 = vmatprep.subr.mxu0 0.0
    %3853 = vmatpush1.msra.mxu0 0.0
    %3854 = vmatprep.subr.mxu0 0.0
    %3855 = vmatpush1.msra.mxu0 0.0
    %3856 = vmatprep.subr.mxu0 0.0
    %3857 = vmatpush1.msra.mxu0 0.0
    %3858 = vmatprep.subr.mxu0 0.0
    %3859 = vmatpush1.msra.mxu0 0.0
    %3860 = vmatprep.subr.mxu0 0.0
    %3861 = vmatpush1.msra.mxu0 0.0
    %3862 = vmatprep.subr.mxu0 0.0
    %3863 = vmatpush1.msra.mxu0 0.0
    %3864 = vmatprep.subr.mxu0 0.0
    %3865 = vmatpush1.msra.mxu0 0.0
    %3866 = vmatprep.subr.mxu0 0.0
    %3867 = vmatpush1.msra.mxu0 0.0
    %3868 = vmatprep.subr.mxu0 0.0
    %3869 = vmatpush1.msra.mxu0 0.0
    %3870 = vmatprep.subr.mxu0 0.0
    %3871 = vmatpush1.msra.mxu0 0.0
    %3872 = vmatprep.subr.mxu0 0.0
    %3873 = vmatpush1.msra.mxu0 0.0
    %3874 = vmatprep.subr.mxu0 0.0
    %3875 = vmatpush1.msra.mxu0 0.0
    %3876 = vmatprep.subr.mxu0 0.0
    %3877 = vmatpush1.msra.mxu0 0.0
    %3878 = vmatprep.subr.mxu0 0.0
    %3879 = vmatpush1.msra.mxu0 0.0
    %3880 = vmatprep.subr.mxu0 0.0
    %3881 = vmatpush1.msra.mxu0 0.0
    %3882 = vmatprep.mubr.f32.mxu0 0.0
    %3883 = vmatmul.mubr.f32.gmra.mrb[0].mxu0 %v3658
    %v3884 = vpop.f32.mrb[0].mxu0
    %v3885 = vadd.f32 %v2228, %v3884
    %v3886 = vpop.f32.mrb[0].mxu0
    %3887 = vdwg.mxu0
    %v3888 = vadd.f32 %v2157, %v3814
    %v3889 = vxor.u32 %v3888, 2147483648
    %v3890 = vmul.f32 %v3889, 1.442695
    %v3891 = vpow.pop %v3890
    %v3892 = vadd.f32 %v3891, 1.0
    %v3893 = vrcp.pop %v3892
    %v3894 = vmul.f32 1.0, %v3893
    %v3895 = vrot.slane %v2157, 2
    %v3897 = vadd.f32 %v3895, %v3816
    %v3898 = vxor.u32 %v3897, 2147483648
    %v3899 = vmul.f32 %v3898, 1.442695
    %v3900 = vpow.pop %v3899
    %v3901 = vadd.f32 %v3900, 1.0
    %v3902 = vrcp.pop %v3901
    %v3903 = vmul.f32 1.0, %v3902
    %v3904 = vmul.f32 %v3894, %v3885
    %v3905 = vrot.slane %v2157, 4
    %v3907 = vadd.f32 %v3905, %v3904
    %v3908 = vtanh.pop %v3907
    %v3909 = vsub.f32 %v3658, %v3908
    %v3910 = vmul.f32 %v3903, %v3909
    %v3911 = vadd.f32 %v3908, %v3910
    %s3912 = scalar_lea.vmem [#allocation9], 768
    %v3913 = vld [vmem:[%s3912] sm:$0xff]
    %v3914 = vld [vmem:[%s3912 + $0x8] sm:$0xff]
    %v3915 = vld [vmem:[%s3912 + $0x10] sm:$0xff]
    %v3916 = vld [vmem:[%s3912 + $0x18] sm:$0xff]
    %v3917 = vld [vmem:[%s3912 + $0x20] sm:$0xff]
    %v3918 = vld [vmem:[%s3912 + $0x28] sm:$0xff]
    %v3919 = vld [vmem:[%s3912 + $0x30] sm:$0xff]
    %v3920 = vld [vmem:[%s3912 + $0x38] sm:$0xff]
    %v3921 = vld [vmem:[%s3912 + $0x40] sm:$0xff]
    %v3922 = vld [vmem:[%s3912 + $0x48] sm:$0xff]
    %v3923 = vld [vmem:[%s3912 + $0x50] sm:$0xff]
    %v3924 = vld [vmem:[%s3912 + $0x58] sm:$0xff]
    %v3925 = vld [vmem:[%s3912 + $0x60] sm:$0xff]
    %v3926 = vld [vmem:[%s3912 + $0x68] sm:$0xff]
    %v3927 = vld [vmem:[%s3912 + $0x70] sm:$0xff]
    %v3928 = vld [vmem:[%s3912 + $0x78] sm:$0xff]
    %3929 = vmatprep.subr.mxu0 0.0
    %3930 = vmatpush1.msra.mxu0 %v3913
    %3931 = vmatprep.subr.mxu0 0.0
    %3932 = vmatpush1.msra.mxu0 %v3914
    %3933 = vmatprep.subr.mxu0 0.0
    %3934 = vmatpush1.msra.mxu0 %v3915
    %3935 = vmatprep.subr.mxu0 0.0
    %3936 = vmatpush1.msra.mxu0 %v3916
    %3937 = vmatprep.subr.mxu0 0.0
    %3938 = vmatpush1.msra.mxu0 %v3917
    %3939 = vmatprep.subr.mxu0 0.0
    %3940 = vmatpush1.msra.mxu0 %v3918
    %3941 = vmatprep.subr.mxu0 0.0
    %3942 = vmatpush1.msra.mxu0 %v3919
    %3943 = vmatprep.subr.mxu0 0.0
    %3944 = vmatpush1.msra.mxu0 %v3920
    %3945 = vmatprep.subr.mxu0 0.0
    %3946 = vmatpush1.msra.mxu0 %v3921
    %3947 = vmatprep.subr.mxu0 0.0
    %3948 = vmatpush1.msra.mxu0 %v3922
    %3949 = vmatprep.subr.mxu0 0.0
    %3950 = vmatpush1.msra.mxu0 %v3923
    %3951 = vmatprep.subr.mxu0 0.0
    %3952 = vmatpush1.msra.mxu0 %v3924
    %3953 = vmatprep.subr.mxu0 0.0
    %3954 = vmatpush1.msra.mxu0 %v3925
    %3955 = vmatprep.subr.mxu0 0.0
    %3956 = vmatpush1.msra.mxu0 %v3926
    %3957 = vmatprep.subr.mxu0 0.0
    %3958 = vmatpush1.msra.mxu0 %v3927
    %3959 = vmatprep.subr.mxu0 0.0
    %3960 = vmatpush1.msra.mxu0 %v3928
    %3961 = vmatprep.subr.mxu0 0.0
    %3962 = vmatpush1.msra.mxu0 0.0
    %3963 = vmatprep.subr.mxu0 0.0
    %3964 = vmatpush1.msra.mxu0 0.0
    %3965 = vmatprep.subr.mxu0 0.0
    %3966 = vmatpush1.msra.mxu0 0.0
    %3967 = vmatprep.subr.mxu0 0.0
    %3968 = vmatpush1.msra.mxu0 0.0
    %3969 = vmatprep.subr.mxu0 0.0
    %3970 = vmatpush1.msra.mxu0 0.0
    %3971 = vmatprep.subr.mxu0 0.0
    %3972 = vmatpush1.msra.mxu0 0.0
    %3973 = vmatprep.subr.mxu0 0.0
    %3974 = vmatpush1.msra.mxu0 0.0
    %3975 = vmatprep.subr.mxu0 0.0
    %3976 = vmatpush1.msra.mxu0 0.0
    %3977 = vmatprep.subr.mxu0 0.0
    %3978 = vmatpush1.msra.mxu0 0.0
    %3979 = vmatprep.subr.mxu0 0.0
    %3980 = vmatpush1.msra.mxu0 0.0
    %3981 = vmatprep.subr.mxu0 0.0
    %3982 = vmatpush1.msra.mxu0 0.0
    %3983 = vmatprep.subr.mxu0 0.0
    %3984 = vmatpush1.msra.mxu0 0.0
    %3985 = vmatprep.subr.mxu0 0.0
    %3986 = vmatpush1.msra.mxu0 0.0
    %3987 = vmatprep.subr.mxu0 0.0
    %3988 = vmatpush1.msra.mxu0 0.0
    %3989 = vmatprep.subr.mxu0 0.0
    %3990 = vmatpush1.msra.mxu0 0.0
    %3991 = vmatprep.subr.mxu0 0.0
    %3992 = vmatpush1.msra.mxu0 0.0
    %3993 = vmatprep.mubr.f32.mxu0 0.0
    %3994 = vmatmul.mubr.f32.gmra.mrb[0].mxu0 %v3911
    %v3995 = vpop.f32.mrb[0].mxu0
    %v3996 = vadd.f32 0.0, %v3995
    %v3997 = vpop.f32.mrb[0].mxu0
    %3998 = vdwg.mxu0
    %v3999 = vadd.f32 %v3746, %v3996
    %4000 = vmatprep.subr.mxu0 %v2168
    %4001 = vmatpush1.msra.mxu0 %v2167
    %4002 = vmatprep.subr.mxu0 %v2171
    %4003 = vmatpush1.msra.mxu0 %v2170
    %4004 = vmatprep.subr.mxu0 %v2174
    %4005 = vmatpush1.msra.mxu0 %v2173
    %4006 = vmatprep.subr.mxu0 %v2177
    %4007 = vmatpush1.msra.mxu0 %v2176
    %4008 = vmatprep.subr.mxu0 %v2180
    %4009 = vmatpush1.msra.mxu0 %v2179
    %4010 = vmatprep.subr.mxu0 %v2183
    %4011 = vmatpush1.msra.mxu0 %v2182
    %4012 = vmatprep.subr.mxu0 %v2186
    %4013 = vmatpush1.msra.mxu0 %v2185
    %4014 = vmatprep.subr.mxu0 %v2189
    %4015 = vmatpush1.msra.mxu0 %v2188
    %4016 = vmatprep.subr.mxu0 %v2192
    %4017 = vmatpush1.msra.mxu0 %v2191
    %4018 = vmatprep.subr.mxu0 %v2195
    %4019 = vmatpush1.msra.mxu0 %v2194
    %4020 = vmatprep.subr.mxu0 %v2198
    %4021 = vmatpush1.msra.mxu0 %v2197
    %4022 = vmatprep.subr.mxu0 %v2201
    %4023 = vmatpush1.msra.mxu0 %v2200
    %4024 = vmatprep.subr.mxu0 %v2204
    %4025 = vmatpush1.msra.mxu0 %v2203
    %4026 = vmatprep.subr.mxu0 %v2207
    %4027 = vmatpush1.msra.mxu0 %v2206
    %4028 = vmatprep.subr.mxu0 %v2210
    %4029 = vmatpush1.msra.mxu0 %v2209
    %4030 = vmatprep.subr.mxu0 %v2213
    %4031 = vmatpush1.msra.mxu0 %v2212
    %4032 = vmatprep.subr.mxu0 0.0
    %4033 = vmatpush1.msra.mxu0 0.0
    %4034 = vmatprep.subr.mxu0 0.0
    %4035 = vmatpush1.msra.mxu0 0.0
    %4036 = vmatprep.subr.mxu0 0.0
    %4037 = vmatpush1.msra.mxu0 0.0
    %4038 = vmatprep.subr.mxu0 0.0
    %4039 = vmatpush1.msra.mxu0 0.0
    %4040 = vmatprep.subr.mxu0 0.0
    %4041 = vmatpush1.msra.mxu0 0.0
    %4042 = vmatprep.subr.mxu0 0.0
    %4043 = vmatpush1.msra.mxu0 0.0
    %4044 = vmatprep.subr.mxu0 0.0
    %4045 = vmatpush1.msra.mxu0 0.0
    %4046 = vmatprep.subr.mxu0 0.0
    %4047 = vmatpush1.msra.mxu0 0.0
    %4048 = vmatprep.subr.mxu0 0.0
    %4049 = vmatpush1.msra.mxu0 0.0
    %4050 = vmatprep.subr.mxu0 0.0
    %4051 = vmatpush1.msra.mxu0 0.0
    %4052 = vmatprep.subr.mxu0 0.0
    %4053 = vmatpush1.msra.mxu0 0.0
    %4054 = vmatprep.subr.mxu0 0.0
    %4055 = vmatpush1.msra.mxu0 0.0
    %4056 = vmatprep.subr.mxu0 0.0
    %4057 = vmatpush1.msra.mxu0 0.0
    %4058 = vmatprep.subr.mxu0 0.0
    %4059 = vmatpush1.msra.mxu0 0.0
    %4060 = vmatprep.subr.mxu0 0.0
    %4061 = vmatpush1.msra.mxu0 0.0
    %4062 = vmatprep.subr.mxu0 0.0
    %4063 = vmatpush1.msra.mxu0 0.0
    %4064 = vmatprep.mubr.f32.mxu0 0.0
    %4065 = vmatmul.mubr.f32.gmra.mrb[0].mxu0 %v3911
    %v4066 = vpop.f32.mrb[0].mxu0
    %v4067 = vadd.f32 %v2220, %v4066
    %v4068 = vpop.f32.mrb[0].mxu0
    %v4069 = vadd.f32 %v2224, %v4068
    %4070 = vdwg.mxu0
    %4071 = vmatprep.subr.mxu0 0.0
    %4072 = vmatpush1.msra.mxu0 %v2169
    %4073 = vmatprep.subr.mxu0 0.0
    %4074 = vmatpush1.msra.mxu0 %v2172
    %4075 = vmatprep.subr.mxu0 0.0
    %4076 = vmatpush1.msra.mxu0 %v2175
    %4077 = vmatprep.subr.mxu0 0.0
    %4078 = vmatpush1.msra.mxu0 %v2178
    %4079 = vmatprep.subr.mxu0 0.0
    %4080 = vmatpush1.msra.mxu0 %v2181
    %4081 = vmatprep.subr.mxu0 0.0
    %4082 = vmatpush1.msra.mxu0 %v2184
    %4083 = vmatprep.subr.mxu0 0.0
    %4084 = vmatpush1.msra.mxu0 %v2187
    %4085 = vmatprep.subr.mxu0 0.0
    %4086 = vmatpush1.msra.mxu0 %v2190
    %4087 = vmatprep.subr.mxu0 0.0
    %4088 = vmatpush1.msra.mxu0 %v2193
    %4089 = vmatprep.subr.mxu0 0.0
    %4090 = vmatpush1.msra.mxu0 %v2196
    %4091 = vmatprep.subr.mxu0 0.0
    %4092 = vmatpush1.msra.mxu0 %v2199
    %4093 = vmatprep.subr.mxu0 0.0
    %4094 = vmatpush1.msra.mxu0 %v2202
    %4095 = vmatprep.subr.mxu0 0.0
    %4096 = vmatpush1.msra.mxu0 %v2205
    %4097 = vmatprep.subr.mxu0 0.0
    %4098 = vmatpush1.msra.mxu0 %v2208
    %4099 = vmatprep.subr.mxu0 0.0
    %4100 = vmatpush1.msra.mxu0 %v2211
    %4101 = vmatprep.subr.mxu0 0.0
    %4102 = vmatpush1.msra.mxu0 %v2214
    %4103 = vmatprep.subr.mxu0 0.0
    %4104 = vmatpush1.msra.mxu0 0.0
    %4105 = vmatprep.subr.mxu0 0.0
    %4106 = vmatpush1.msra.mxu0 0.0
    %4107 = vmatprep.subr.mxu0 0.0
    %4108 = vmatpush1.msra.mxu0 0.0
    %4109 = vmatprep.subr.mxu0 0.0
    %4110 = vmatpush1.msra.mxu0 0.0
    %4111 = vmatprep.subr.mxu0 0.0
    %4112 = vmatpush1.msra.mxu0 0.0
    %4113 = vmatprep.subr.mxu0 0.0
    %4114 = vmatpush1.msra.mxu0 0.0
    %4115 = vmatprep.subr.mxu0 0.0
    %4116 = vmatpush1.msra.mxu0 0.0
    %4117 = vmatprep.subr.mxu0 0.0
    %4118 = vmatpush1.msra.mxu0 0.0
    %4119 = vmatprep.subr.mxu0 0.0
    %4120 = vmatpush1.msra.mxu0 0.0
    %4121 = vmatprep.subr.mxu0 0.0
    %4122 = vmatpush1.msra.mxu0 0.0
    %4123 = vmatprep.subr.mxu0 0.0
    %4124 = vmatpush1.msra.mxu0 0.0
    %4125 = vmatprep.subr.mxu0 0.0
    %4126 = vmatpush1.msra.mxu0 0.0
    %4127 = vmatprep.subr.mxu0 0.0
    %4128 = vmatpush1.msra.mxu0 0.0
    %4129 = vmatprep.subr.mxu0 0.0
    %4130 = vmatpush1.msra.mxu0 0.0
    %4131 = vmatprep.subr.mxu0 0.0
    %4132 = vmatpush1.msra.mxu0 0.0
    %4133 = vmatprep.subr.mxu0 0.0
    %4134 = vmatpush1.msra.mxu0 0.0
    %4135 = vmatprep.mubr.f32.mxu0 0.0
    %4136 = vmatmul.mubr.f32.gmra.mrb[0].mxu0 %v3911
    %v4137 = vpop.f32.mrb[0].mxu0
    %v4138 = vadd.f32 %v2228, %v4137
    %v4139 = vpop.f32.mrb[0].mxu0
    %4140 = vdwg.mxu0
    %v4141 = vadd.f32 %v2158, %v4067
    %v4142 = vxor.u32 %v4141, 2147483648
    %v4143 = vmul.f32 %v4142, 1.442695
    %v4144 = vpow.pop %v4143
    %v4145 = vadd.f32 %v4144, 1.0
    %v4146 = vrcp.pop %v4145
    %v4147 = vmul.f32 1.0, %v4146
    %v4148 = vrot.slane %v2158, 2
    %v4150 = vadd.f32 %v4148, %v4069
    %v4151 = vxor.u32 %v4150, 2147483648
    %v4152 = vmul.f32 %v4151, 1.442695
    %v4153 = vpow.pop %v4152
    %v4154 = vadd.f32 %v4153, 1.0
    %v4155 = vrcp.pop %v4154
    %v4156 = vmul.f32 1.0, %v4155
    %v4157 = vmul.f32 %v4147, %v4138
    %v4158 = vrot.slane %v2158, 4
    %v4160 = vadd.f32 %v4158, %v4157
    %v4161 = vtanh.pop %v4160
    %v4162 = vsub.f32 %v3911, %v4161
    %v4163 = vmul.f32 %v4156, %v4162
    %v4164 = vadd.f32 %v4161, %v4163
    %s4165 = scalar_lea.vmem [#allocation9], 896
    %v4166 = vld [vmem:[%s4165] sm:$0xff]
    %v4167 = vld [vmem:[%s4165 + $0x8] sm:$0xff]
    %v4168 = vld [vmem:[%s4165 + $0x10] sm:$0xff]
    %v4169 = vld [vmem:[%s4165 + $0x18] sm:$0xff]
    %v4170 = vld [vmem:[%s4165 + $0x20] sm:$0xff]
    %v4171 = vld [vmem:[%s4165 + $0x28] sm:$0xff]
    %v4172 = vld [vmem:[%s4165 + $0x30] sm:$0xff]
    %v4173 = vld [vmem:[%s4165 + $0x38] sm:$0xff]
    %v4174 = vld [vmem:[%s4165 + $0x40] sm:$0xff]
    %v4175 = vld [vmem:[%s4165 + $0x48] sm:$0xff]
    %v4176 = vld [vmem:[%s4165 + $0x50] sm:$0xff]
    %v4177 = vld [vmem:[%s4165 + $0x58] sm:$0xff]
    %v4178 = vld [vmem:[%s4165 + $0x60] sm:$0xff]
    %v4179 = vld [vmem:[%s4165 + $0x68] sm:$0xff]
    %v4180 = vld [vmem:[%s4165 + $0x70] sm:$0xff]
    %v4181 = vld [vmem:[%s4165 + $0x78] sm:$0xff]
    %4182 = vmatprep.subr.mxu0 0.0
    %4183 = vmatpush1.msra.mxu0 %v4166
    %4184 = vmatprep.subr.mxu0 0.0
    %4185 = vmatpush1.msra.mxu0 %v4167
    %4186 = vmatprep.subr.mxu0 0.0
    %4187 = vmatpush1.msra.mxu0 %v4168
    %4188 = vmatprep.subr.mxu0 0.0
    %4189 = vmatpush1.msra.mxu0 %v4169
    %4190 = vmatprep.subr.mxu0 0.0
    %4191 = vmatpush1.msra.mxu0 %v4170
    %4192 = vmatprep.subr.mxu0 0.0
    %4193 = vmatpush1.msra.mxu0 %v4171
    %4194 = vmatprep.subr.mxu0 0.0
    %4195 = vmatpush1.msra.mxu0 %v4172
    %4196 = vmatprep.subr.mxu0 0.0
    %4197 = vmatpush1.msra.mxu0 %v4173
    %4198 = vmatprep.subr.mxu0 0.0
    %4199 = vmatpush1.msra.mxu0 %v4174
    %4200 = vmatprep.subr.mxu0 0.0
    %4201 = vmatpush1.msra.mxu0 %v4175
    %4202 = vmatprep.subr.mxu0 0.0
    %4203 = vmatpush1.msra.mxu0 %v4176
    %4204 = vmatprep.subr.mxu0 0.0
    %4205 = vmatpush1.msra.mxu0 %v4177
    %4206 = vmatprep.subr.mxu0 0.0
    %4207 = vmatpush1.msra.mxu0 %v4178
    %4208 = vmatprep.subr.mxu0 0.0
    %4209 = vmatpush1.msra.mxu0 %v4179
    %4210 = vmatprep.subr.mxu0 0.0
    %4211 = vmatpush1.msra.mxu0 %v4180
    %4212 = vmatprep.subr.mxu0 0.0
    %4213 = vmatpush1.msra.mxu0 %v4181
    %4214 = vmatprep.subr.mxu0 0.0
    %4215 = vmatpush1.msra.mxu0 0.0
    %4216 = vmatprep.subr.mxu0 0.0
    %4217 = vmatpush1.msra.mxu0 0.0
    %4218 = vmatprep.subr.mxu0 0.0
    %4219 = vmatpush1.msra.mxu0 0.0
    %4220 = vmatprep.subr.mxu0 0.0
    %4221 = vmatpush1.msra.mxu0 0.0
    %4222 = vmatprep.subr.mxu0 0.0
    %4223 = vmatpush1.msra.mxu0 0.0
    %4224 = vmatprep.subr.mxu0 0.0
    %4225 = vmatpush1.msra.mxu0 0.0
    %4226 = vmatprep.subr.mxu0 0.0
    %4227 = vmatpush1.msra.mxu0 0.0
    %4228 = vmatprep.subr.mxu0 0.0
    %4229 = vmatpush1.msra.mxu0 0.0
    %4230 = vmatprep.subr.mxu0 0.0
    %4231 = vmatpush1.msra.mxu0 0.0
    %4232 = vmatprep.subr.mxu0 0.0
    %4233 = vmatpush1.msra.mxu0 0.0
    %4234 = vmatprep.subr.mxu0 0.0
    %4235 = vmatpush1.msra.mxu0 0.0
    %4236 = vmatprep.subr.mxu0 0.0
    %4237 = vmatpush1.msra.mxu0 0.0
    %4238 = vmatprep.subr.mxu0 0.0
    %4239 = vmatpush1.msra.mxu0 0.0
    %4240 = vmatprep.subr.mxu0 0.0
    %4241 = vmatpush1.msra.mxu0 0.0
    %4242 = vmatprep.subr.mxu0 0.0
    %4243 = vmatpush1.msra.mxu0 0.0
    %4244 = vmatprep.subr.mxu0 0.0
    %4245 = vmatpush1.msra.mxu0 0.0
    %4246 = vmatprep.mubr.f32.mxu0 0.0
    %4247 = vmatmul.mubr.f32.gmra.mrb[0].mxu0 %v4164
    %v4248 = vpop.f32.mrb[0].mxu0
    %v4249 = vadd.f32 0.0, %v4248
    %v4250 = vpop.f32.mrb[0].mxu0
    %4251 = vdwg.mxu0
    %v4252 = vadd.f32 %v3999, %v4249
    %v4253 = vld [vmem:[%s10] sm:$0x1]
    %v4255 = vlaneseq
    %v4256 = vshrl.u32 %v4255, 7
    %v4257 = vsub.s32 0, %v4256
    %v4258 = vrot.slane %v4253, %v4257
    %v4260 = vadd.f32 %v4252, %v4258
    %4261 = vst [vmem:[#allocation11] sm:$0x3] %v4260
    // Predicated region
    $region62: #{tpu_custom_call.1} parent=1 // pred_check
      _
    $region63: #{tpu_custom_call.1} parent=1 // pred_check_branch
      %4263 = sbr.rel (0) target = $region65
    $region64: #{tpu_custom_call.1} parent=1 // pred_region
      %s4265 = ssub.s32 32, 32
      %4266 = vsyncadd [#allocation5], %s4265
      %s4268 = sshll.u32 [#allocation11], 4
      %s4269 = int_to_ptr.vmem [resolvable:$true] %s4268
      %4271 = dma.vmem_to_hbm [thread:$0]  %s4269, 32, %s11, [#allocation5]
    $region65: #{tpu_custom_call.1} parent=1 // pred_fallthru
      _
    // Predicated region
    $region66: #{tpu_custom_call.1} parent=1 // pred_check
      _
    $region67: #{tpu_custom_call.1} parent=1 // pred_check_branch
      %4273 = sbr.rel (0) target = $region69
    $region68: #{tpu_custom_call.1} parent=1 // pred_region
      %4274 = dma.done [#allocation5], 32
    $region69: #{tpu_custom_call.1} parent=1 // pred_fallthru
      _
    %4275 = vsyncpa [#allocation4], 1
    %4276 = vsyncpa [#allocation7], 1
    %4277 = vsyncpa [#allocation10], 1
    %4278 = vsyncpa [#allocation5], 1

</llo_original>
